<compile_context>
chip_gen: v7x
topology: tpu7x:2x2x1
jax: 0.10.0
libtpu: 0.0.40
codegen_flags: <defaults>
</compile_context>

<pallas_src>
import functools
import math

import jax
import jax.numpy as jnp
from jax import lax
from jax.experimental import pallas as pl
from jax.experimental.pallas import tpu as pltpu

NEG = -1e30  # large finite negative: keeps fully-masked rows NaN-free


# ----------------------------------------------------------------------------- helpers
def _round_up(x, m):
    return (x + m - 1) // m * m


def _vocab_tiling(vocab_size):
    """Pad vocab to a 128-lane multiple; cap the head output tile at 512."""
    tv = 512 if vocab_size >= 512 else _round_up(vocab_size, 128)
    return _round_up(vocab_size, tv), tv


def _pick_q_tile(s):
    """Largest query tile <= 128 that divides the (padded) sequence length."""
    for cand in (128, 64, 32, 16, 8):
        if s % cand == 0:
            return cand
    return s


def _pick_batch_tile(b, s, d):
    """Batch tile so activation buffers stay within a modest VMEM budget."""
    per_elem = s * d * 4 * 4          # acc + double-buffered x + out (rough)
    budget = 8 * 1024 * 1024
    bt = max(1, min(b, budget // max(per_elem, 1)))
    while b % bt:                     # keep tiles uniform
        bt -= 1
    return bt


def _layer_norm(x, gamma, beta, eps=1e-5):
    mean = jnp.mean(x, axis=-1, keepdims=True)
    var = jnp.mean((x - mean) ** 2, axis=-1, keepdims=True)
    return (x - mean) * lax.rsqrt(var + eps) * gamma + beta


# ----------------------------------------------------------------------------- kernels
def encoder_stack_kernel(pad_ref, x_ref, gf_ref, bfin_ref,
                         wq_ref, bq_ref, wk_ref, bk_ref, wv_ref, bv_ref,
                         wo_ref, bo_ref, g1_ref, b1_ref,
                         w1_ref, c1_ref, w2_ref, c2_ref, g2_ref, b2_ref,
                         out_ref, acc_ref, causal_ref, ctx_ref,
                         *, num_heads, q_tile):
    """Fused N-layer post-LN transformer encoder stack + final LayerNorm.

    grid = (batch_tile, layer); activations live in `acc_ref` (VMEM) across the
    layer axis, per-layer weights are streamed once per (batch_tile, layer).
    """
    l = pl.program_id(1)
    n_layers = pl.num_programs(1)
    B_t, S, D = acc_ref.shape
    hd = D // num_heads
    scale = 1.0 / math.sqrt(hd)
    n_qt = S // q_tile

    @pl.when(l == 0)
    def _():                                      # (re)load activations per batch tile
        acc_ref[...] = x_ref[...]

    @pl.when(jnp.logical_and(l == 0, pl.program_id(0) == 0))
    def _():                                      # causal bias built exactly once
        rows = lax.broadcasted_iota(jnp.int32, (S, S), 0)
        cols = lax.broadcasted_iota(jnp.int32, (S, S), 1)
        causal_ref[...] = jnp.where(rows >= cols, 0.0, NEG).astype(jnp.float32)

    wq, wk, wv, wo = wq_ref[0], wk_ref[0], wv_ref[0], wo_ref[0]
    bq, bk, bv, bo = bq_ref[0], bk_ref[0], bv_ref[0], bo_ref[0]
    g1, b1, g2, b2 = g1_ref[0], b1_ref[0], g2_ref[0], b2_ref[0]
    w1, c1, w2, c2 = w1_ref[0], c1_ref[0], w2_ref[0], c2_ref[0]
    is_last = l == n_layers - 1

    for b in range(B_t):                          # static, small batch tile
        xb = acc_ref[b]                           # (S, D) f32, VMEM-resident
        pad_row = pad_ref[b]                      # (1, S) f32 key-padding bias

        # --- self attention: bf16 MXU matmuls, f32 accumulation -------------
        x_bf = xb.astype(jnp.bfloat16)
        q = (jnp.dot(x_bf, wq, preferred_element_type=jnp.float32) + bq) * scale
        k = jnp.dot(x_bf, wk, preferred_element_type=jnp.float32) + bk
        v = jnp.dot(x_bf, wv, preferred_element_type=jnp.float32) + bv

        qh = q.reshape(S, num_heads, hd).transpose(1, 0, 2).astype(jnp.bfloat16)
        kh = k.reshape(S, num_heads, hd).transpose(1, 0, 2).astype(jnp.bfloat16)
        vh = v.reshape(S, num_heads, hd).transpose(1, 0, 2).astype(jnp.bfloat16)

        # query-tiled attention: never materialize a full (H, S, S) tensor
        for t in range(n_qt):
            lo = t * q_tile
            q_blk = qh[:, lo:lo + q_tile, :]                   # (H, tq, hd)
            c_blk = causal_ref[lo:lo + q_tile, :]              # (tq, S)
            s = jnp.einsum('hqd,hkd->hqk', q_blk, kh,
                           preferred_element_type=jnp.float32)
            s = s + c_blk[None, :, :] + pad_row[None, :, :]    # causal + pad
            m = jnp.max(s, axis=-1, keepdims=True)
            e = jnp.exp(s - m)                                  # f32 softmax
            p = e * pl.reciprocal(jnp.sum(e, axis=-1, keepdims=True), approx=True)
            ctx_t = jnp.einsum('hqk,hkd->hqd', p.astype(jnp.bfloat16), vh,
                               preferred_element_type=jnp.float32)
            ctx_ref[lo:lo + q_tile, :] = ctx_t.transpose(1, 0, 2).reshape(q_tile, D)

        attn = jnp.dot(ctx_ref[...].astype(jnp.bfloat16), wo,
                       preferred_element_type=jnp.float32) + bo
        x1 = _layer_norm(xb + attn, g1, b1)

        # --- feed-forward (ReLU) ---------------------------------------------
        h1 = jnp.maximum(
            jnp.dot(x1.astype(jnp.bfloat16), w1,
                    preferred_element_type=jnp.float32) + c1, 0.0)
        ff = jnp.dot(h1.astype(jnp.bfloat16), w2,
                     preferred_element_type=jnp.float32) + c2
        x2 = _layer_norm(x1 + ff, g2, b2)

        @pl.when(jnp.logical_not(is_last))
        def _():
            acc_ref[b] = x2                       # carry to next layer only

        @pl.when(is_last)
        def _():                                  # fold final encoder LayerNorm here
            out_ref[b] = _layer_norm(x2, gf_ref[...], bfin_ref[...]).astype(out_ref.dtype)


def head_kernel(x_ref, w_ref, b_ref, out_ref):
    """Vocab projection only (final LayerNorm already applied in the stack)."""
    out_ref[0] = (jnp.dot(x_ref[0], w_ref[...],
                          preferred_element_type=jnp.float32) + b_ref[...])


# ----------------------------------------------------------------------------- wrappers
_LAYER_KEYS = ['wq', 'bq', 'wk', 'bk', 'wv', 'bv', 'wo', 'bo',
               'g1', 'b1', 'w1', 'c1', 'w2', 'c2', 'g2', 'b2']


def run_encoder_stack(x, key_bias, params, num_heads):
    B, S, D = x.shape
    L = params['wq'].shape[0]
    weights = [params[k] for k in _LAYER_KEYS]    # stacked (L, ...) arrays
    bt = _pick_batch_tile(B, S, D)
    nbt = B // bt
    q_tile = _pick_q_tile(S)

    def layer_spec(w):
        nd = w.ndim
        return pl.BlockSpec((1,) + w.shape[1:],
                            lambda i, l, _nd=nd: (l,) + (0,) * (_nd - 1))

    in_specs = ([pl.BlockSpec((bt, 1, S), lambda i, l: (i, 0, 0)),   # key-pad row
                 pl.BlockSpec((bt, S, D), lambda i, l: (i, 0, 0)),   # activations
                 pl.BlockSpec((1, D), lambda i, l: (0, 0)),          # final LN gamma
                 pl.BlockSpec((1, D), lambda i, l: (0, 0))]          # final LN beta
                + [layer_spec(w) for w in weights])

    return pl.pallas_call(
        functools.partial(encoder_stack_kernel, num_heads=num_heads, q_tile=q_tile),
        out_shape=jax.ShapeDtypeStruct((B, S, D), jnp.bfloat16),     # bf16 handoff
        grid_spec=pltpu.PrefetchScalarGridSpec(
            num_scalar_prefetch=0,
            grid=(nbt, L),                       # layer axis innermost (sequential)
            in_specs=in_specs,
            out_specs=pl.BlockSpec((bt, S, D), lambda i, l: (i, 0, 0)),
            scratch_shapes=[pltpu.VMEM((bt, S, D), jnp.float32),     # resident acts
                            pltpu.VMEM((S, S), jnp.float32),         # causal bias
                            pltpu.VMEM((S, D), jnp.float32)],        # attn context
        ),
        compiler_params=pltpu.CompilerParams(
            dimension_semantics=("parallel", "arbitrary"),
            vmem_limit_bytes=32 * 1024 * 1024),
    )(key_bias, x, params['final_gamma'], params['final_beta'], *weights)


def run_head(x, wout, bout, tile_v):
    B, S, D = x.shape
    v_pad = wout.shape[1]
    nv = v_pad // tile_v
    return pl.pallas_call(
        head_kernel,
        out_shape=jax.ShapeDtypeStruct((B, S, v_pad), jnp.float32),
        grid_spec=pltpu.PrefetchScalarGridSpec(
            num_scalar_prefetch=0,
            grid=(B, nv),
            in_specs=[pl.BlockSpec((1, S, D), lambda b, j: (b, 0, 0)),
                      pl.BlockSpec((D, tile_v), lambda b, j: (0, j)),
                      pl.BlockSpec((1, tile_v), lambda b, j: (0, j))],
            out_specs=pl.BlockSpec((1, S, tile_v), lambda b, j: (b, 0, j)),
        ),
        compiler_params=pltpu.CompilerParams(
            dimension_semantics=("parallel", "parallel"),
            vmem_limit_bytes=32 * 1024 * 1024),
    )(x, wout, bout)


# ----------------------------------------------------------------------------- model glue
def make_positional_encoding(max_len, d_model):
    position = jnp.arange(0, max_len, dtype=jnp.float32)[:, None]
    div_term = jnp.exp(jnp.arange(0, d_model, 2, dtype=jnp.float32)
                       * (-math.log(10000.0) / d_model))
    pe = jnp.zeros((max_len, d_model), jnp.float32)
    pe = pe.at[:, 0::2].set(jnp.sin(position * div_term))
    pe = pe.at[:, 1::2].set(jnp.cos(position * div_term))
    return pe  # (max_len, d_model)


def init_params(key, vocab_size, d_model, d_ff, n_layers):
    v_pad, tile_v = _vocab_tiling(vocab_size)
    keys = jax.random.split(key, 2 + 6 * n_layers)
    ki = iter(keys)
    scale = 0.02

    def mat(k, shape, dtype=jnp.bfloat16):
        return (scale * jax.random.normal(k, shape, jnp.float32)).astype(dtype)

    params = {
        'vocab_size': vocab_size,
        'tile_v': tile_v,
        'embedding': mat(next(ki), (vocab_size, d_model), jnp.float32),
        'wout': jnp.zeros((d_model, v_pad), jnp.bfloat16)
                   .at[:, :vocab_size].set(mat(next(ki), (d_model, vocab_size))),
        'bout': jnp.zeros((1, v_pad), jnp.float32),
        'final_gamma': jnp.ones((1, d_model), jnp.float32),
        'final_beta': jnp.zeros((1, d_model), jnp.float32),
    }

    def stack_mats(shape):
        return jnp.stack([mat(next(ki), shape) for _ in range(n_layers)])

    zeros_d = jnp.zeros((n_layers, 1, d_model), jnp.float32)
    ones_d = jnp.ones((n_layers, 1, d_model), jnp.float32)
    params.update(
        wq=stack_mats((d_model, d_model)), bq=zeros_d,
        wk=stack_mats((d_model, d_model)), bk=zeros_d,
        wv=stack_mats((d_model, d_model)), bv=zeros_d,
        wo=stack_mats((d_model, d_model)), bo=zeros_d,
        g1=ones_d, b1=zeros_d,
        w1=stack_mats((d_model, d_ff)), c1=jnp.zeros((n_layers, 1, d_ff), jnp.float32),
        w2=stack_mats((d_ff, d_model)), c2=zeros_d,
        g2=ones_d, b2=zeros_d,
    )
    return params


def music_transformer_forward(params, input_ids, attention_mask, pe, num_heads):
    """Returns raw logits (B, S, vocab_size) — matches MusicTransformer.forward.

    Note: the reference applies NO sqrt(d_model) embedding scale (matches code).
    """
    B, S = input_ids.shape
    V = params['vocab_size']

    # sequence padded to a sublane multiple; padded positions masked as keys
    S_pad = _round_up(S, 8)
    if S_pad != S:
        input_ids = jnp.pad(input_ids, ((0, 0), (0, S_pad - S)))
        attention_mask = jnp.pad(attention_mask, ((0, 0), (0, S_pad - S)),
                                 constant_values=True)

    # embedding + positional encoding (glue: gather + broadcast add)
    x = jnp.take(params['embedding'], input_ids, axis=0)          # (B, S_pad, D)
    x = x + pe[:S_pad][None, :, :]

    # tiny additive key-padding row; causal part is built inside the kernel
    key_bias = jnp.where(attention_mask, NEG, 0.0).astype(jnp.float32)
    key_bias = key_bias.reshape(B, 1, S_pad)

    # fused transformer encoder stack + final LayerNorm (one Pallas call)
    y = run_encoder_stack(x, key_bias, params, num_heads)         # (B, S_pad, D) bf16

    # vocab projection (Pallas kernel, lane-dense / tiled vocab)
    logits = run_head(y, params['wout'], params['bout'], params['tile_v'])
    return logits[:, :S, :V]


# ----------------------------------------------------------------------------- main
if __name__ == "__main__":
    # small shapes consistent with the module's forward
    B, S = 2, 8
    D_MODEL, N_HEADS, D_FF, N_LAYERS = 32, 4, 64, 2
    VOCAB = 128
    MAX_LEN = 32

    key = jax.random.PRNGKey(0)
    k_param, k_tok = jax.random.split(key)

    params = init_params(k_param, VOCAB, D_MODEL, D_FF, N_LAYERS)
    pe = make_positional_encoding(MAX_LEN, D_MODEL)

    input_ids = jax.random.randint(k_tok, (B, S), 0, VOCAB, dtype=jnp.int32)
    # padding mask: True = padded/ignored key; pad last position of batch 1
    attention_mask = jnp.zeros((B, S), bool).at[1, S - 1].set(True)

    logits = music_transformer_forward(params, input_ids, attention_mask, pe, N_HEADS)
    logits = jax.block_until_ready(logits)

    assert logits.shape == (B, S, VOCAB), logits.shape
    assert bool(jnp.all(jnp.isfinite(logits)))
    # TODO(synk): evaluate()/sampling()/generate() are host-side sampling loops
    # (sorting, multinomial, python while) and are not part of the kernel path.
    # TODO(synk): on v7x with very long sequences, switch the q-tiled attention
    # to per-tile causal masks + online softmax instead of the (S,S) VMEM scratch.
    print("KERNEL_OK")
</pallas_src>

<mosaic_0001>
module attributes {stable_mosaic.version = 11 : i64} {
  func.func @encoder_stack_kernel(%arg0: i32, %arg1: i32, %arg2: memref<2x1x8xf32, #tpu.memory_space<vmem>>, %arg3: memref<2x8x32xf32, #tpu.memory_space<vmem>>, %arg4: memref<1x32xf32, #tpu.memory_space<vmem>>, %arg5: memref<1x32xf32, #tpu.memory_space<vmem>>, %arg6: memref<1x32x32xbf16, #tpu.memory_space<vmem>>, %arg7: memref<1x1x32xf32, #tpu.memory_space<vmem>>, %arg8: memref<1x32x32xbf16, #tpu.memory_space<vmem>>, %arg9: memref<1x1x32xf32, #tpu.memory_space<vmem>>, %arg10: memref<1x32x32xbf16, #tpu.memory_space<vmem>>, %arg11: memref<1x1x32xf32, #tpu.memory_space<vmem>>, %arg12: memref<1x32x32xbf16, #tpu.memory_space<vmem>>, %arg13: memref<1x1x32xf32, #tpu.memory_space<vmem>>, %arg14: memref<1x1x32xf32, #tpu.memory_space<vmem>>, %arg15: memref<1x1x32xf32, #tpu.memory_space<vmem>>, %arg16: memref<1x32x64xbf16, #tpu.memory_space<vmem>>, %arg17: memref<1x1x64xf32, #tpu.memory_space<vmem>>, %arg18: memref<1x64x32xbf16, #tpu.memory_space<vmem>>, %arg19: memref<1x1x32xf32, #tpu.memory_space<vmem>>, %arg20: memref<1x1x32xf32, #tpu.memory_space<vmem>>, %arg21: memref<1x1x32xf32, #tpu.memory_space<vmem>>, %arg22: memref<2x8x32xbf16, #tpu.memory_space<vmem>>, %arg23: memref<2x8x32xf32, #tpu.memory_space<vmem>>, %arg24: memref<8x8xf32, #tpu.memory_space<vmem>>, %arg25: memref<8x32xf32, #tpu.memory_space<vmem>>) attributes {dimension_semantics = [#tpu.dimension_semantics<parallel>, #tpu.dimension_semantics<arbitrary>], iteration_bounds = array<i64: 1, 2>, scalar_prefetch = 0 : i64, scratch_operands = 3 : i64, tpu.core_type = #tpu.core_type<tc>, window_params = [{transform_indices = @transform_0, window_bounds = array<i64: 2, 1, 8>}, {transform_indices = @transform_1, window_bounds = array<i64: 2, 8, 32>}, {pipeline_mode = #tpu.pipeline_mode<synchronous>, transform_indices = @transform_2, window_bounds = array<i64: 1, 32>}, {pipeline_mode = #tpu.pipeline_mode<synchronous>, transform_indices = @transform_3, window_bounds = array<i64: 1, 32>}, {transform_indices = @transform_4, window_bounds = array<i64: 1, 32, 32>}, {transform_indices = @transform_5, window_bounds = array<i64: 1, 1, 32>}, {transform_indices = @transform_6, window_bounds = array<i64: 1, 32, 32>}, {transform_indices = @transform_7, window_bounds = array<i64: 1, 1, 32>}, {transform_indices = @transform_8, window_bounds = array<i64: 1, 32, 32>}, {transform_indices = @transform_9, window_bounds = array<i64: 1, 1, 32>}, {transform_indices = @transform_10, window_bounds = array<i64: 1, 32, 32>}, {transform_indices = @transform_11, window_bounds = array<i64: 1, 1, 32>}, {transform_indices = @transform_12, window_bounds = array<i64: 1, 1, 32>}, {transform_indices = @transform_13, window_bounds = array<i64: 1, 1, 32>}, {transform_indices = @transform_14, window_bounds = array<i64: 1, 32, 64>}, {transform_indices = @transform_15, window_bounds = array<i64: 1, 1, 64>}, {transform_indices = @transform_16, window_bounds = array<i64: 1, 64, 32>}, {transform_indices = @transform_17, window_bounds = array<i64: 1, 1, 32>}, {transform_indices = @transform_18, window_bounds = array<i64: 1, 1, 32>}, {transform_indices = @transform_19, window_bounds = array<i64: 1, 1, 32>}, {transform_indices = @transform_20, window_bounds = array<i64: 2, 8, 32>}]} {
    %c0_i32 = arith.constant 0 : i32
    %0 = arith.cmpi eq, %arg1, %c0_i32 : i32
    %1 = arith.extui %0 : i1 to i32
    %c0_i32_0 = arith.constant 0 : i32
    %2 = arith.cmpi ne, %1, %c0_i32_0 : i32
    scf.if %2 {
      %c0_122 = arith.constant 0 : index
      %c0_123 = arith.constant 0 : index
      %c0_124 = arith.constant 0 : index
      %269 = vector.load %arg3[%c0_122, %c0_123, %c0_124] : memref<2x8x32xf32, #tpu.memory_space<vmem>>, vector<2x8x32xf32>
      %c0_125 = arith.constant 0 : index
      %c0_126 = arith.constant 0 : index
      %c0_127 = arith.constant 0 : index
      %270 = vector.load %arg23[%c0_125, %c0_126, %c0_127] : memref<2x8x32xf32, #tpu.memory_space<vmem>>, vector<2x8x32xf32>
      tpu.vector_store %arg23[%c0_125, %c0_126, %c0_127], %269 {strides = array<i32>} : memref<2x8x32xf32, #tpu.memory_space<vmem>>, vector<2x8x32xf32>,
    } else {
    }
    %c0_i32_1 = arith.constant 0 : i32
    %3 = arith.cmpi eq, %arg1, %c0_i32_1 : i32
    %c0_i32_2 = arith.constant 0 : i32
    %4 = arith.cmpi eq, %arg0, %c0_i32_2 : i32
    %5 = arith.andi %3, %4 : i1
    %6 = arith.extui %5 : i1 to i32
    %c0_i32_3 = arith.constant 0 : i32
    %7 = arith.cmpi ne, %6, %c0_i32_3 : i32
    scf.if %7 {
      %269 = tpu.iota {dimensions = array<i32: 0>} : vector<8x8xi32>
      %270 = tpu.iota {dimensions = array<i32: 1>} : vector<8x8xi32>
      %271 = arith.cmpi sge, %269, %270 : vector<8x8xi32>
      %cst_122 = arith.constant 0.000000e+00 : f32
      %cst_123 = arith.constant -1.000000e+30 : f32
      %272 = vector.broadcast %cst_122 : f32 to vector<8x8xf32>
      %273 = vector.broadcast %cst_123 : f32 to vector<8x8xf32>
      %274 = arith.select %271, %272, %273 : vector<8x8xi1>, vector<8x8xf32>
      %c0_124 = arith.constant 0 : index
      %c0_125 = arith.constant 0 : index
      %275 = vector.load %arg24[%c0_124, %c0_125] : memref<8x8xf32, #tpu.memory_space<vmem>>, vector<8x8xf32>
      tpu.vector_store %arg24[%c0_124, %c0_125], %274 {strides = array<i32>} : memref<8x8xf32, #tpu.memory_space<vmem>>, vector<8x8xf32>,
    } else {
    }
    %c0 = arith.constant 0 : index
    %c0_4 = arith.constant 0 : index
    %c0_5 = arith.constant 0 : index
    %8 = vector.load %arg6[%c0, %c0_4, %c0_5] : memref<1x32x32xbf16, #tpu.memory_space<vmem>>, vector<1x32x32xbf16>
    %9 = vector.shape_cast %8 : vector<1x32x32xbf16> to vector<32x32xbf16>
    %c0_6 = arith.constant 0 : index
    %c0_7 = arith.constant 0 : index
    %c0_8 = arith.constant 0 : index
    %10 = vector.load %arg8[%c0_6, %c0_7, %c0_8] : memref<1x32x32xbf16, #tpu.memory_space<vmem>>, vector<1x32x32xbf16>
    %11 = vector.shape_cast %10 : vector<1x32x32xbf16> to vector<32x32xbf16>
    %c0_9 = arith.constant 0 : index
    %c0_10 = arith.constant 0 : index
    %c0_11 = arith.constant 0 : index
    %12 = vector.load %arg10[%c0_9, %c0_10, %c0_11] : memref<1x32x32xbf16, #tpu.memory_space<vmem>>, vector<1x32x32xbf16>
    %13 = vector.shape_cast %12 : vector<1x32x32xbf16> to vector<32x32xbf16>
    %c0_12 = arith.constant 0 : index
    %c0_13 = arith.constant 0 : index
    %c0_14 = arith.constant 0 : index
    %14 = vector.load %arg12[%c0_12, %c0_13, %c0_14] : memref<1x32x32xbf16, #tpu.memory_space<vmem>>, vector<1x32x32xbf16>
    %15 = vector.shape_cast %14 : vector<1x32x32xbf16> to vector<32x32xbf16>
    %c0_15 = arith.constant 0 : index
    %c0_16 = arith.constant 0 : index
    %c0_17 = arith.constant 0 : index
    %16 = vector.load %arg7[%c0_15, %c0_16, %c0_17] : memref<1x1x32xf32, #tpu.memory_space<vmem>>, vector<1x1x32xf32>
    %17 = vector.shape_cast %16 : vector<1x1x32xf32> to vector<1x32xf32>
    %c0_18 = arith.constant 0 : index
    %c0_19 = arith.constant 0 : index
    %c0_20 = arith.constant 0 : index
    %18 = vector.load %arg9[%c0_18, %c0_19, %c0_20] : memref<1x1x32xf32, #tpu.memory_space<vmem>>, vector<1x1x32xf32>
    %19 = vector.shape_cast %18 : vector<1x1x32xf32> to vector<1x32xf32>
    %c0_21 = arith.constant 0 : index
    %c0_22 = arith.constant 0 : index
    %c0_23 = arith.constant 0 : index
    %20 = vector.load %arg11[%c0_21, %c0_22, %c0_23] : memref<1x1x32xf32, #tpu.memory_space<vmem>>, vector<1x1x32xf32>
    %21 = vector.shape_cast %20 : vector<1x1x32xf32> to vector<1x32xf32>
    %c0_24 = arith.constant 0 : index
    %c0_25 = arith.constant 0 : index
    %c0_26 = arith.constant 0 : index
    %22 = vector.load %arg13[%c0_24, %c0_25, %c0_26] : memref<1x1x32xf32, #tpu.memory_space<vmem>>, vector<1x1x32xf32>
    %23 = vector.shape_cast %22 : vector<1x1x32xf32> to vector<1x32xf32>
    %c0_27 = arith.constant 0 : index
    %c0_28 = arith.constant 0 : index
    %c0_29 = arith.constant 0 : index
    %24 = vector.load %arg14[%c0_27, %c0_28, %c0_29] : memref<1x1x32xf32, #tpu.memory_space<vmem>>, vector<1x1x32xf32>
    %25 = vector.shape_cast %24 : vector<1x1x32xf32> to vector<1x32xf32>
    %c0_30 = arith.constant 0 : index
    %c0_31 = arith.constant 0 : index
    %c0_32 = arith.constant 0 : index
    %26 = vector.load %arg15[%c0_30, %c0_31, %c0_32] : memref<1x1x32xf32, #tpu.memory_space<vmem>>, vector<1x1x32xf32>
    %27 = vector.shape_cast %26 : vector<1x1x32xf32> to vector<1x32xf32>
    %c0_33 = arith.constant 0 : index
    %c0_34 = arith.constant 0 : index
    %c0_35 = arith.constant 0 : index
    %28 = vector.load %arg20[%c0_33, %c0_34, %c0_35] : memref<1x1x32xf32, #tpu.memory_space<vmem>>, vector<1x1x32xf32>
    %29 = vector.shape_cast %28 : vector<1x1x32xf32> to vector<1x32xf32>
    %c0_36 = arith.constant 0 : index
    %c0_37 = arith.constant 0 : index
    %c0_38 = arith.constant 0 : index
    %30 = vector.load %arg21[%c0_36, %c0_37, %c0_38] : memref<1x1x32xf32, #tpu.memory_space<vmem>>, vector<1x1x32xf32>
    %31 = vector.shape_cast %30 : vector<1x1x32xf32> to vector<1x32xf32>
    %c0_39 = arith.constant 0 : index
    %c0_40 = arith.constant 0 : index
    %c0_41 = arith.constant 0 : index
    %32 = vector.load %arg16[%c0_39, %c0_40, %c0_41] : memref<1x32x64xbf16, #tpu.memory_space<vmem>>, vector<1x32x64xbf16>
    %33 = vector.shape_cast %32 : vector<1x32x64xbf16> to vector<32x64xbf16>
    %c0_42 = arith.constant 0 : index
    %c0_43 = arith.constant 0 : index
    %c0_44 = arith.constant 0 : index
    %34 = vector.load %arg17[%c0_42, %c0_43, %c0_44] : memref<1x1x64xf32, #tpu.memory_space<vmem>>, vector<1x1x64xf32>
    %35 = vector.shape_cast %34 : vector<1x1x64xf32> to vector<1x64xf32>
    %c0_45 = arith.constant 0 : index
    %c0_46 = arith.constant 0 : index
    %c0_47 = arith.constant 0 : index
    %36 = vector.load %arg18[%c0_45, %c0_46, %c0_47] : memref<1x64x32xbf16, #tpu.memory_space<vmem>>, vector<1x64x32xbf16>
    %37 = vector.shape_cast %36 : vector<1x64x32xbf16> to vector<64x32xbf16>
    %c0_48 = arith.constant 0 : index
    %c0_49 = arith.constant 0 : index
    %c0_50 = arith.constant 0 : index
    %38 = vector.load %arg19[%c0_48, %c0_49, %c0_50] : memref<1x1x32xf32, #tpu.memory_space<vmem>>, vector<1x1x32xf32>
    %39 = vector.shape_cast %38 : vector<1x1x32xf32> to vector<1x32xf32>
    %c1_i32 = arith.constant 1 : i32
    %40 = arith.cmpi eq, %arg1, %c1_i32 : i32
    %c0_51 = arith.constant 0 : index
    %c0_52 = arith.constant 0 : index
    %c0_53 = arith.constant 0 : index
    %41 = vector.load %arg23[%c0_51, %c0_52, %c0_53] : memref<2x8x32xf32, #tpu.memory_space<vmem>>, vector<1x8x32xf32>
    %42 = vector.shape_cast %41 : vector<1x8x32xf32> to vector<8x32xf32>
    %c0_54 = arith.constant 0 : index
    %c0_55 = arith.constant 0 : index
    %c0_56 = arith.constant 0 : index
    %43 = vector.load %arg2[%c0_54, %c0_55, %c0_56] : memref<2x1x8xf32, #tpu.memory_space<vmem>>, vector<1x1x8xf32>
    %44 = vector.shape_cast %43 : vector<1x1x8xf32> to vector<1x8xf32>
    %45 = arith.truncf %42 : vector<8x32xf32> to vector<8x32xbf16>
    %cst = arith.constant dense<0.000000e+00> : vector<8x32xf32>
    %46 = tpu.matmul %45, %9, %cst {dimension_numbers = #tpu.dot_dimension_numbers<[1], [0], [0], [1], [0, 0, 1, 1], [], []>} : vector<8x32xbf16>, vector<32x32xbf16>, vector<8x32xf32> -> vector<8x32xf32>
    %47 = vector.broadcast %17 : vector<1x32xf32> to vector<8x32xf32>
    %48 = arith.addf %46, %47 : vector<8x32xf32>
    %cst_57 = arith.constant 0.353553385 : f32
    %49 = vector.broadcast %cst_57 : f32 to vector<8x32xf32>
    %50 = arith.mulf %48, %49 : vector<8x32xf32>
    %cst_58 = arith.constant dense<0.000000e+00> : vector<8x32xf32>
    %51 = tpu.matmul %45, %11, %cst_58 {dimension_numbers = #tpu.dot_dimension_numbers<[1], [0], [0], [1], [0, 0, 1, 1], [], []>} : vector<8x32xbf16>, vector<32x32xbf16>, vector<8x32xf32> -> vector<8x32xf32>
    %52 = vector.broadcast %19 : vector<1x32xf32> to vector<8x32xf32>
    %53 = arith.addf %51, %52 : vector<8x32xf32>
    %cst_59 = arith.constant dense<0.000000e+00> : vector<8x32xf32>
    %54 = tpu.matmul %45, %13, %cst_59 {dimension_numbers = #tpu.dot_dimension_numbers<[1], [0], [0], [1], [0, 0, 1, 1], [], []>} : vector<8x32xbf16>, vector<32x32xbf16>, vector<8x32xf32> -> vector<8x32xf32>
    %55 = vector.broadcast %21 : vector<1x32xf32> to vector<8x32xf32>
    %56 = arith.addf %54, %55 : vector<8x32xf32>
    %57 = vector.shape_cast %50 : vector<8x32xf32> to vector<8x4x8xf32>
    %58 = tpu.transpose %57, [1, 0, 2] : vector<8x4x8xf32> -> vector<4x8x8xf32>
    %59 = arith.truncf %58 : vector<4x8x8xf32> to vector<4x8x8xbf16>
    %60 = vector.shape_cast %53 : vector<8x32xf32> to vector<8x4x8xf32>
    %61 = tpu.transpose %60, [1, 0, 2] : vector<8x4x8xf32> -> vector<4x8x8xf32>
    %62 = arith.truncf %61 : vector<4x8x8xf32> to vector<4x8x8xbf16>
    %63 = vector.shape_cast %56 : vector<8x32xf32> to vector<8x4x8xf32>
    %64 = tpu.transpose %63, [1, 0, 2] : vector<8x4x8xf32> -> vector<4x8x8xf32>
    %65 = arith.truncf %64 : vector<4x8x8xf32> to vector<4x8x8xbf16>
    %c0_60 = arith.constant 0 : index
    %c0_61 = arith.constant 0 : index
    %66 = vector.load %arg24[%c0_60, %c0_61] : memref<8x8xf32, #tpu.memory_space<vmem>>, vector<8x8xf32>
    "tpu.trace_start"() <{level = 10 : i32, message = "hqd,hkd->hqk"}> : () -> ()
    %cst_62 = arith.constant dense<0.000000e+00> : vector<4x8x8xf32>
    %67 = tpu.matmul %59, %62, %cst_62 {dimension_numbers = #tpu.dot_dimension_numbers<[2], [2], [1], [1], [0, 0, 0, 1, 1, 1], [0], [0]>} : vector<4x8x8xbf16>, vector<4x8x8xbf16>, vector<4x8x8xf32> -> vector<4x8x8xf32>
    "tpu.trace_stop"() : () -> ()
    %68 = vector.shape_cast %66 : vector<8x8xf32> to vector<1x8x8xf32>
    %69 = vector.broadcast %68 : vector<1x8x8xf32> to vector<4x8x8xf32>
    %70 = arith.addf %67, %69 : vector<4x8x8xf32>
    %71 = vector.shape_cast %44 : vector<1x8xf32> to vector<1x1x8xf32>
    %72 = vector.broadcast %71 : vector<1x1x8xf32> to vector<4x8x8xf32>
    %73 = arith.addf %70, %72 : vector<4x8x8xf32>
    %cst_63 = arith.constant dense<0xFF800000> : vector<4x8xf32>
    %74 = vector.multi_reduction <maximumf>, %73, %cst_63 [2] : vector<4x8x8xf32> to vector<4x8xf32>
    %75 = vector.shape_cast %74 : vector<4x8xf32> to vector<4x8x1xf32>
    %76 = vector.broadcast %75 : vector<4x8x1xf32> to vector<4x8x8xf32>
    %77 = arith.subf %73, %76 : vector<4x8x8xf32>
    %78 = math.exp %77 : vector<4x8x8xf32>
    %cst_64 = arith.constant dense<0.000000e+00> : vector<4x8xf32>
    %79 = vector.multi_reduction <add>, %78, %cst_64 [2] : vector<4x8x8xf32> to vector<4x8xf32>
    %80 = vector.shape_cast %79 : vector<4x8xf32> to vector<4x8x1xf32>
    %81 = tpu.reciprocal %80 {approx = true} : vector<4x8x1xf32> -> vector<4x8x1xf32>
    %82 = vector.broadcast %81 : vector<4x8x1xf32> to vector<4x8x8xf32>
    %83 = arith.mulf %78, %82 : vector<4x8x8xf32>
    %84 = arith.truncf %83 : vector<4x8x8xf32> to vector<4x8x8xbf16>
    "tpu.trace_start"() <{level = 10 : i32, message = "hqk,hkd->hqd"}> : () -> ()
    %cst_65 = arith.constant dense<0.000000e+00> : vector<4x8x8xf32>
    %85 = tpu.matmul %84, %65, %cst_65 {dimension_numbers = #tpu.dot_dimension_numbers<[2], [1], [1], [2], [0, 0, 0, 1, 1, 2], [0], [0]>} : vector<4x8x8xbf16>, vector<4x8x8xbf16>, vector<4x8x8xf32> -> vector<4x8x8xf32>
    "tpu.trace_stop"() : () -> ()
    %86 = tpu.transpose %85, [1, 0, 2] : vector<4x8x8xf32> -> vector<8x4x8xf32>
    %87 = vector.shape_cast %86 : vector<8x4x8xf32> to vector<8x32xf32>
    %c0_66 = arith.constant 0 : index
    %c0_67 = arith.constant 0 : index
    %88 = vector.load %arg25[%c0_66, %c0_67] : memref<8x32xf32, #tpu.memory_space<vmem>>, vector<8x32xf32>
    tpu.vector_store %arg25[%c0_66, %c0_67], %87 {strides = array<i32>} : memref<8x32xf32, #tpu.memory_space<vmem>>, vector<8x32xf32>,
    %c0_68 = arith.constant 0 : index
    %c0_69 = arith.constant 0 : index
    %89 = vector.load %arg25[%c0_68, %c0_69] : memref<8x32xf32, #tpu.memory_space<vmem>>, vector<8x32xf32>
    %90 = arith.truncf %89 : vector<8x32xf32> to vector<8x32xbf16>
    %cst_70 = arith.constant dense<0.000000e+00> : vector<8x32xf32>
    %91 = tpu.matmul %90, %15, %cst_70 {dimension_numbers = #tpu.dot_dimension_numbers<[1], [0], [0], [1], [0, 0, 1, 1], [], []>} : vector<8x32xbf16>, vector<32x32xbf16>, vector<8x32xf32> -> vector<8x32xf32>
    %92 = vector.broadcast %23 : vector<1x32xf32> to vector<8x32xf32>
    %93 = arith.addf %91, %92 : vector<8x32xf32>
    %94 = arith.addf %42, %93 : vector<8x32xf32>
    %cst_71 = arith.constant dense<0.000000e+00> : vector<8xf32>
    %95 = vector.multi_reduction <add>, %94, %cst_71 [1] : vector<8x32xf32> to vector<8xf32>
    %96 = vector.shape_cast %95 : vector<8xf32> to vector<8x1xf32>
    %cst_72 = arith.constant 3.200000e+01 : f32
    %97 = vector.broadcast %cst_72 : f32 to vector<8x1xf32>
    %98 = arith.divf %96, %97 : vector<8x1xf32>
    %99 = vector.broadcast %98 : vector<8x1xf32> to vector<8x32xf32>
    %100 = arith.subf %94, %99 : vector<8x32xf32>
    %101 = arith.mulf %100, %100 : vector<8x32xf32>
    %cst_73 = arith.constant dense<0.000000e+00> : vector<8xf32>
    %102 = vector.multi_reduction <add>, %101, %cst_73 [1] : vector<8x32xf32> to vector<8xf32>
    %103 = vector.shape_cast %102 : vector<8xf32> to vector<8x1xf32>
    %cst_74 = arith.constant 3.200000e+01 : f32
    %104 = vector.broadcast %cst_74 : f32 to vector<8x1xf32>
    %105 = arith.divf %103, %104 : vector<8x1xf32>
    %106 = vector.broadcast %98 : vector<8x1xf32> to vector<8x32xf32>
    %107 = arith.subf %94, %106 : vector<8x32xf32>
    %cst_75 = arith.constant 9.99999974E-6 : f32
    %108 = vector.broadcast %cst_75 : f32 to vector<8x1xf32>
    %109 = arith.addf %105, %108 : vector<8x1xf32>
    %110 = math.rsqrt %109 : vector<8x1xf32>
    %111 = vector.broadcast %110 : vector<8x1xf32> to vector<8x32xf32>
    %112 = arith.mulf %107, %111 : vector<8x32xf32>
    %113 = vector.broadcast %25 : vector<1x32xf32> to vector<8x32xf32>
    %114 = arith.mulf %112, %113 : vector<8x32xf32>
    %115 = vector.broadcast %27 : vector<1x32xf32> to vector<8x32xf32>
    %116 = arith.addf %114, %115 : vector<8x32xf32>
    %117 = arith.truncf %116 : vector<8x32xf32> to vector<8x32xbf16>
    %cst_76 = arith.constant dense<0.000000e+00> : vector<8x64xf32>
    %118 = tpu.matmul %117, %33, %cst_76 {dimension_numbers = #tpu.dot_dimension_numbers<[1], [0], [0], [1], [0, 0, 1, 1], [], []>} : vector<8x32xbf16>, vector<32x64xbf16>, vector<8x64xf32> -> vector<8x64xf32>
    %119 = vector.broadcast %35 : vector<1x64xf32> to vector<8x64xf32>
    %120 = arith.addf %118, %119 : vector<8x64xf32>
    %cst_77 = arith.constant 0.000000e+00 : f32
    %121 = vector.broadcast %cst_77 : f32 to vector<8x64xf32>
    %122 = arith.maximumf %120, %121 : vector<8x64xf32>
    %123 = arith.truncf %122 : vector<8x64xf32> to vector<8x64xbf16>
    %cst_78 = arith.constant dense<0.000000e+00> : vector<8x32xf32>
    %124 = tpu.matmul %123, %37, %cst_78 {dimension_numbers = #tpu.dot_dimension_numbers<[1], [0], [0], [1], [0, 0, 1, 1], [], []>} : vector<8x64xbf16>, vector<64x32xbf16>, vector<8x32xf32> -> vector<8x32xf32>
    %125 = vector.broadcast %39 : vector<1x32xf32> to vector<8x32xf32>
    %126 = arith.addf %124, %125 : vector<8x32xf32>
    %127 = arith.addf %116, %126 : vector<8x32xf32>
    %cst_79 = arith.constant dense<0.000000e+00> : vector<8xf32>
    %128 = vector.multi_reduction <add>, %127, %cst_79 [1] : vector<8x32xf32> to vector<8xf32>
    %129 = vector.shape_cast %128 : vector<8xf32> to vector<8x1xf32>
    %cst_80 = arith.constant 3.200000e+01 : f32
    %130 = vector.broadcast %cst_80 : f32 to vector<8x1xf32>
    %131 = arith.divf %129, %130 : vector<8x1xf32>
    %132 = vector.broadcast %131 : vector<8x1xf32> to vector<8x32xf32>
    %133 = arith.subf %127, %132 : vector<8x32xf32>
    %134 = arith.mulf %133, %133 : vector<8x32xf32>
    %cst_81 = arith.constant dense<0.000000e+00> : vector<8xf32>
    %135 = vector.multi_reduction <add>, %134, %cst_81 [1] : vector<8x32xf32> to vector<8xf32>
    %136 = vector.shape_cast %135 : vector<8xf32> to vector<8x1xf32>
    %cst_82 = arith.constant 3.200000e+01 : f32
    %137 = vector.broadcast %cst_82 : f32 to vector<8x1xf32>
    %138 = arith.divf %136, %137 : vector<8x1xf32>
    %139 = vector.broadcast %131 : vector<8x1xf32> to vector<8x32xf32>
    %140 = arith.subf %127, %139 : vector<8x32xf32>
    %cst_83 = arith.constant 9.99999974E-6 : f32
    %141 = vector.broadcast %cst_83 : f32 to vector<8x1xf32>
    %142 = arith.addf %138, %141 : vector<8x1xf32>
    %143 = math.rsqrt %142 : vector<8x1xf32>
    %144 = vector.broadcast %143 : vector<8x1xf32> to vector<8x32xf32>
    %145 = arith.mulf %140, %144 : vector<8x32xf32>
    %146 = vector.broadcast %29 : vector<1x32xf32> to vector<8x32xf32>
    %147 = arith.mulf %145, %146 : vector<8x32xf32>
    %148 = vector.broadcast %31 : vector<1x32xf32> to vector<8x32xf32>
    %149 = arith.addf %147, %148 : vector<8x32xf32>
    %true = arith.constant true
    %150 = arith.xori %40, %true : i1
    %151 = arith.extui %150 : i1 to i32
    %c0_i32_84 = arith.constant 0 : i32
    %152 = arith.cmpi ne, %151, %c0_i32_84 : i32
    scf.if %152 {
      %c0_122 = arith.constant 0 : index
      %c0_123 = arith.constant 0 : index
      %c0_124 = arith.constant 0 : index
      %269 = vector.load %arg23[%c0_122, %c0_123, %c0_124] : memref<2x8x32xf32, #tpu.memory_space<vmem>>, vector<1x8x32xf32>
      %270 = vector.shape_cast %269 : vector<1x8x32xf32> to vector<8x32xf32>
      %271 = vector.shape_cast %149 : vector<8x32xf32> to vector<1x8x32xf32>
      tpu.vector_store %arg23[%c0_122, %c0_123, %c0_124], %271 {strides = array<i32>} : memref<2x8x32xf32, #tpu.memory_space<vmem>>, vector<1x8x32xf32>,
    } else {
    }
    %153 = arith.extui %40 : i1 to i32
    %c0_i32_85 = arith.constant 0 : i32
    %154 = arith.cmpi ne, %153, %c0_i32_85 : i32
    scf.if %154 {
      %c0_122 = arith.constant 0 : index
      %c0_123 = arith.constant 0 : index
      %269 = vector.load %arg4[%c0_122, %c0_123] : memref<1x32xf32, #tpu.memory_space<vmem>>, vector<1x32xf32>
      %c0_124 = arith.constant 0 : index
      %c0_125 = arith.constant 0 : index
      %270 = vector.load %arg5[%c0_124, %c0_125] : memref<1x32xf32, #tpu.memory_space<vmem>>, vector<1x32xf32>
      %cst_126 = arith.constant dense<0.000000e+00> : vector<8xf32>
      %271 = vector.multi_reduction <add>, %149, %cst_126 [1] : vector<8x32xf32> to vector<8xf32>
      %272 = vector.shape_cast %271 : vector<8xf32> to vector<8x1xf32>
      %cst_127 = arith.constant 3.200000e+01 : f32
      %273 = vector.broadcast %cst_127 : f32 to vector<8x1xf32>
      %274 = arith.divf %272, %273 : vector<8x1xf32>
      %275 = vector.broadcast %274 : vector<8x1xf32> to vector<8x32xf32>
      %276 = arith.subf %149, %275 : vector<8x32xf32>
      %277 = arith.mulf %276, %276 : vector<8x32xf32>
      %cst_128 = arith.constant dense<0.000000e+00> : vector<8xf32>
      %278 = vector.multi_reduction <add>, %277, %cst_128 [1] : vector<8x32xf32> to vector<8xf32>
      %279 = vector.shape_cast %278 : vector<8xf32> to vector<8x1xf32>
      %cst_129 = arith.constant 3.200000e+01 : f32
      %280 = vector.broadcast %cst_129 : f32 to vector<8x1xf32>
      %281 = arith.divf %279, %280 : vector<8x1xf32>
      %282 = vector.broadcast %274 : vector<8x1xf32> to vector<8x32xf32>
      %283 = arith.subf %149, %282 : vector<8x32xf32>
      %cst_130 = arith.constant 9.99999974E-6 : f32
      %284 = vector.broadcast %cst_130 : f32 to vector<8x1xf32>
      %285 = arith.addf %281, %284 : vector<8x1xf32>
      %286 = math.rsqrt %285 : vector<8x1xf32>
      %287 = vector.broadcast %286 : vector<8x1xf32> to vector<8x32xf32>
      %288 = arith.mulf %283, %287 : vector<8x32xf32>
      %289 = vector.broadcast %269 : vector<1x32xf32> to vector<8x32xf32>
      %290 = arith.mulf %288, %289 : vector<8x32xf32>
      %291 = vector.broadcast %270 : vector<1x32xf32> to vector<8x32xf32>
      %292 = arith.addf %290, %291 : vector<8x32xf32>
      %293 = arith.truncf %292 : vector<8x32xf32> to vector<8x32xbf16>
      %c0_131 = arith.constant 0 : index
      %c0_132 = arith.constant 0 : index
      %c0_133 = arith.constant 0 : index
      %294 = vector.load %arg22[%c0_131, %c0_132, %c0_133] : memref<2x8x32xbf16, #tpu.memory_space<vmem>>, vector<1x8x32xbf16>
      %295 = vector.shape_cast %294 : vector<1x8x32xbf16> to vector<8x32xbf16>
      %296 = vector.shape_cast %293 : vector<8x32xbf16> to vector<1x8x32xbf16>
      tpu.vector_store %arg22[%c0_131, %c0_132, %c0_133], %296 {strides = array<i32>} : memref<2x8x32xbf16, #tpu.memory_space<vmem>>, vector<1x8x32xbf16>,
    } else {
    }
    %c1 = arith.constant 1 : index
    %c0_86 = arith.constant 0 : index
    %c0_87 = arith.constant 0 : index
    %155 = vector.load %arg23[%c1, %c0_86, %c0_87] : memref<2x8x32xf32, #tpu.memory_space<vmem>>, vector<1x8x32xf32>
    %156 = vector.shape_cast %155 : vector<1x8x32xf32> to vector<8x32xf32>
    %c1_88 = arith.constant 1 : index
    %c0_89 = arith.constant 0 : index
    %c0_90 = arith.constant 0 : index
    %157 = vector.load %arg2[%c1_88, %c0_89, %c0_90] : memref<2x1x8xf32, #tpu.memory_space<vmem>>, vector<1x1x8xf32>
    %158 = vector.shape_cast %157 : vector<1x1x8xf32> to vector<1x8xf32>
    %159 = arith.truncf %156 : vector<8x32xf32> to vector<8x32xbf16>
    %cst_91 = arith.constant dense<0.000000e+00> : vector<8x32xf32>
    %160 = tpu.matmul %159, %9, %cst_91 {dimension_numbers = #tpu.dot_dimension_numbers<[1], [0], [0], [1], [0, 0, 1, 1], [], []>} : vector<8x32xbf16>, vector<32x32xbf16>, vector<8x32xf32> -> vector<8x32xf32>
    %161 = vector.broadcast %17 : vector<1x32xf32> to vector<8x32xf32>
    %162 = arith.addf %160, %161 : vector<8x32xf32>
    %cst_92 = arith.constant 0.353553385 : f32
    %163 = vector.broadcast %cst_92 : f32 to vector<8x32xf32>
    %164 = arith.mulf %162, %163 : vector<8x32xf32>
    %cst_93 = arith.constant dense<0.000000e+00> : vector<8x32xf32>
    %165 = tpu.matmul %159, %11, %cst_93 {dimension_numbers = #tpu.dot_dimension_numbers<[1], [0], [0], [1], [0, 0, 1, 1], [], []>} : vector<8x32xbf16>, vector<32x32xbf16>, vector<8x32xf32> -> vector<8x32xf32>
    %166 = vector.broadcast %19 : vector<1x32xf32> to vector<8x32xf32>
    %167 = arith.addf %165, %166 : vector<8x32xf32>
    %cst_94 = arith.constant dense<0.000000e+00> : vector<8x32xf32>
    %168 = tpu.matmul %159, %13, %cst_94 {dimension_numbers = #tpu.dot_dimension_numbers<[1], [0], [0], [1], [0, 0, 1, 1], [], []>} : vector<8x32xbf16>, vector<32x32xbf16>, vector<8x32xf32> -> vector<8x32xf32>
    %169 = vector.broadcast %21 : vector<1x32xf32> to vector<8x32xf32>
    %170 = arith.addf %168, %169 : vector<8x32xf32>
    %171 = vector.shape_cast %164 : vector<8x32xf32> to vector<8x4x8xf32>
    %172 = tpu.transpose %171, [1, 0, 2] : vector<8x4x8xf32> -> vector<4x8x8xf32>
    %173 = arith.truncf %172 : vector<4x8x8xf32> to vector<4x8x8xbf16>
    %174 = vector.shape_cast %167 : vector<8x32xf32> to vector<8x4x8xf32>
    %175 = tpu.transpose %174, [1, 0, 2] : vector<8x4x8xf32> -> vector<4x8x8xf32>
    %176 = arith.truncf %175 : vector<4x8x8xf32> to vector<4x8x8xbf16>
    %177 = vector.shape_cast %170 : vector<8x32xf32> to vector<8x4x8xf32>
    %178 = tpu.transpose %177, [1, 0, 2] : vector<8x4x8xf32> -> vector<4x8x8xf32>
    %179 = arith.truncf %178 : vector<4x8x8xf32> to vector<4x8x8xbf16>
    %c0_95 = arith.constant 0 : index
    %c0_96 = arith.constant 0 : index
    %180 = vector.load %arg24[%c0_95, %c0_96] : memref<8x8xf32, #tpu.memory_space<vmem>>, vector<8x8xf32>
    "tpu.trace_start"() <{level = 10 : i32, message = "hqd,hkd->hqk"}> : () -> ()
    %cst_97 = arith.constant dense<0.000000e+00> : vector<4x8x8xf32>
    %181 = tpu.matmul %173, %176, %cst_97 {dimension_numbers = #tpu.dot_dimension_numbers<[2], [2], [1], [1], [0, 0, 0, 1, 1, 1], [0], [0]>} : vector<4x8x8xbf16>, vector<4x8x8xbf16>, vector<4x8x8xf32> -> vector<4x8x8xf32>
    "tpu.trace_stop"() : () -> ()
    %182 = vector.shape_cast %180 : vector<8x8xf32> to vector<1x8x8xf32>
    %183 = vector.broadcast %182 : vector<1x8x8xf32> to vector<4x8x8xf32>
    %184 = arith.addf %181, %183 : vector<4x8x8xf32>
    %185 = vector.shape_cast %158 : vector<1x8xf32> to vector<1x1x8xf32>
    %186 = vector.broadcast %185 : vector<1x1x8xf32> to vector<4x8x8xf32>
    %187 = arith.addf %184, %186 : vector<4x8x8xf32>
    %cst_98 = arith.constant dense<0xFF800000> : vector<4x8xf32>
    %188 = vector.multi_reduction <maximumf>, %187, %cst_98 [2] : vector<4x8x8xf32> to vector<4x8xf32>
    %189 = vector.shape_cast %188 : vector<4x8xf32> to vector<4x8x1xf32>
    %190 = vector.broadcast %189 : vector<4x8x1xf32> to vector<4x8x8xf32>
    %191 = arith.subf %187, %190 : vector<4x8x8xf32>
    %192 = math.exp %191 : vector<4x8x8xf32>
    %cst_99 = arith.constant dense<0.000000e+00> : vector<4x8xf32>
    %193 = vector.multi_reduction <add>, %192, %cst_99 [2] : vector<4x8x8xf32> to vector<4x8xf32>
    %194 = vector.shape_cast %193 : vector<4x8xf32> to vector<4x8x1xf32>
    %195 = tpu.reciprocal %194 {approx = true} : vector<4x8x1xf32> -> vector<4x8x1xf32>
    %196 = vector.broadcast %195 : vector<4x8x1xf32> to vector<4x8x8xf32>
    %197 = arith.mulf %192, %196 : vector<4x8x8xf32>
    %198 = arith.truncf %197 : vector<4x8x8xf32> to vector<4x8x8xbf16>
    "tpu.trace_start"() <{level = 10 : i32, message = "hqk,hkd->hqd"}> : () -> ()
    %cst_100 = arith.constant dense<0.000000e+00> : vector<4x8x8xf32>
    %199 = tpu.matmul %198, %179, %cst_100 {dimension_numbers = #tpu.dot_dimension_numbers<[2], [1], [1], [2], [0, 0, 0, 1, 1, 2], [0], [0]>} : vector<4x8x8xbf16>, vector<4x8x8xbf16>, vector<4x8x8xf32> -> vector<4x8x8xf32>
    "tpu.trace_stop"() : () -> ()
    %200 = tpu.transpose %199, [1, 0, 2] : vector<4x8x8xf32> -> vector<8x4x8xf32>
    %201 = vector.shape_cast %200 : vector<8x4x8xf32> to vector<8x32xf32>
    %c0_101 = arith.constant 0 : index
    %c0_102 = arith.constant 0 : index
    %202 = vector.load %arg25[%c0_101, %c0_102] : memref<8x32xf32, #tpu.memory_space<vmem>>, vector<8x32xf32>
    tpu.vector_store %arg25[%c0_101, %c0_102], %201 {strides = array<i32>} : memref<8x32xf32, #tpu.memory_space<vmem>>, vector<8x32xf32>,
    %c0_103 = arith.constant 0 : index
    %c0_104 = arith.constant 0 : index
    %203 = vector.load %arg25[%c0_103, %c0_104] : memref<8x32xf32, #tpu.memory_space<vmem>>, vector<8x32xf32>
    %204 = arith.truncf %203 : vector<8x32xf32> to vector<8x32xbf16>
    %cst_105 = arith.constant dense<0.000000e+00> : vector<8x32xf32>
    %205 = tpu.matmul %204, %15, %cst_105 {dimension_numbers = #tpu.dot_dimension_numbers<[1], [0], [0], [1], [0, 0, 1, 1], [], []>} : vector<8x32xbf16>, vector<32x32xbf16>, vector<8x32xf32> -> vector<8x32xf32>
    %206 = vector.broadcast %23 : vector<1x32xf32> to vector<8x32xf32>
    %207 = arith.addf %205, %206 : vector<8x32xf32>
    %208 = arith.addf %156, %207 : vector<8x32xf32>
    %cst_106 = arith.constant dense<0.000000e+00> : vector<8xf32>
    %209 = vector.multi_reduction <add>, %208, %cst_106 [1] : vector<8x32xf32> to vector<8xf32>
    %210 = vector.shape_cast %209 : vector<8xf32> to vector<8x1xf32>
    %cst_107 = arith.constant 3.200000e+01 : f32
    %211 = vector.broadcast %cst_107 : f32 to vector<8x1xf32>
    %212 = arith.divf %210, %211 : vector<8x1xf32>
    %213 = vector.broadcast %212 : vector<8x1xf32> to vector<8x32xf32>
    %214 = arith.subf %208, %213 : vector<8x32xf32>
    %215 = arith.mulf %214, %214 : vector<8x32xf32>
    %cst_108 = arith.constant dense<0.000000e+00> : vector<8xf32>
    %216 = vector.multi_reduction <add>, %215, %cst_108 [1] : vector<8x32xf32> to vector<8xf32>
    %217 = vector.shape_cast %216 : vector<8xf32> to vector<8x1xf32>
    %cst_109 = arith.constant 3.200000e+01 : f32
    %218 = vector.broadcast %cst_109 : f32 to vector<8x1xf32>
    %219 = arith.divf %217, %218 : vector<8x1xf32>
    %220 = vector.broadcast %212 : vector<8x1xf32> to vector<8x32xf32>
    %221 = arith.subf %208, %220 : vector<8x32xf32>
    %cst_110 = arith.constant 9.99999974E-6 : f32
    %222 = vector.broadcast %cst_110 : f32 to vector<8x1xf32>
    %223 = arith.addf %219, %222 : vector<8x1xf32>
    %224 = math.rsqrt %223 : vector<8x1xf32>
    %225 = vector.broadcast %224 : vector<8x1xf32> to vector<8x32xf32>
    %226 = arith.mulf %221, %225 : vector<8x32xf32>
    %227 = vector.broadcast %25 : vector<1x32xf32> to vector<8x32xf32>
    %228 = arith.mulf %226, %227 : vector<8x32xf32>
    %229 = vector.broadcast %27 : vector<1x32xf32> to vector<8x32xf32>
    %230 = arith.addf %228, %229 : vector<8x32xf32>
    %231 = arith.truncf %230 : vector<8x32xf32> to vector<8x32xbf16>
    %cst_111 = arith.constant dense<0.000000e+00> : vector<8x64xf32>
    %232 = tpu.matmul %231, %33, %cst_111 {dimension_numbers = #tpu.dot_dimension_numbers<[1], [0], [0], [1], [0, 0, 1, 1], [], []>} : vector<8x32xbf16>, vector<32x64xbf16>, vector<8x64xf32> -> vector<8x64xf32>
    %233 = vector.broadcast %35 : vector<1x64xf32> to vector<8x64xf32>
    %234 = arith.addf %232, %233 : vector<8x64xf32>
    %cst_112 = arith.constant 0.000000e+00 : f32
    %235 = vector.broadcast %cst_112 : f32 to vector<8x64xf32>
    %236 = arith.maximumf %234, %235 : vector<8x64xf32>
    %237 = arith.truncf %236 : vector<8x64xf32> to vector<8x64xbf16>
    %cst_113 = arith.constant dense<0.000000e+00> : vector<8x32xf32>
    %238 = tpu.matmul %237, %37, %cst_113 {dimension_numbers = #tpu.dot_dimension_numbers<[1], [0], [0], [1], [0, 0, 1, 1], [], []>} : vector<8x64xbf16>, vector<64x32xbf16>, vector<8x32xf32> -> vector<8x32xf32>
    %239 = vector.broadcast %39 : vector<1x32xf32> to vector<8x32xf32>
    %240 = arith.addf %238, %239 : vector<8x32xf32>
    %241 = arith.addf %230, %240 : vector<8x32xf32>
    %cst_114 = arith.constant dense<0.000000e+00> : vector<8xf32>
    %242 = vector.multi_reduction <add>, %241, %cst_114 [1] : vector<8x32xf32> to vector<8xf32>
    %243 = vector.shape_cast %242 : vector<8xf32> to vector<8x1xf32>
    %cst_115 = arith.constant 3.200000e+01 : f32
    %244 = vector.broadcast %cst_115 : f32 to vector<8x1xf32>
    %245 = arith.divf %243, %244 : vector<8x1xf32>
    %246 = vector.broadcast %245 : vector<8x1xf32> to vector<8x32xf32>
    %247 = arith.subf %241, %246 : vector<8x32xf32>
    %248 = arith.mulf %247, %247 : vector<8x32xf32>
    %cst_116 = arith.constant dense<0.000000e+00> : vector<8xf32>
    %249 = vector.multi_reduction <add>, %248, %cst_116 [1] : vector<8x32xf32> to vector<8xf32>
    %250 = vector.shape_cast %249 : vector<8xf32> to vector<8x1xf32>
    %cst_117 = arith.constant 3.200000e+01 : f32
    %251 = vector.broadcast %cst_117 : f32 to vector<8x1xf32>
    %252 = arith.divf %250, %251 : vector<8x1xf32>
    %253 = vector.broadcast %245 : vector<8x1xf32> to vector<8x32xf32>
    %254 = arith.subf %241, %253 : vector<8x32xf32>
    %cst_118 = arith.constant 9.99999974E-6 : f32
    %255 = vector.broadcast %cst_118 : f32 to vector<8x1xf32>
    %256 = arith.addf %252, %255 : vector<8x1xf32>
    %257 = math.rsqrt %256 : vector<8x1xf32>
    %258 = vector.broadcast %257 : vector<8x1xf32> to vector<8x32xf32>
    %259 = arith.mulf %254, %258 : vector<8x32xf32>
    %260 = vector.broadcast %29 : vector<1x32xf32> to vector<8x32xf32>
    %261 = arith.mulf %259, %260 : vector<8x32xf32>
    %262 = vector.broadcast %31 : vector<1x32xf32> to vector<8x32xf32>
    %263 = arith.addf %261, %262 : vector<8x32xf32>
    %true_119 = arith.constant true
    %264 = arith.xori %40, %true_119 : i1
    %265 = arith.extui %264 : i1 to i32
    %c0_i32_120 = arith.constant 0 : i32
    %266 = arith.cmpi ne, %265, %c0_i32_120 : i32
    scf.if %266 {
      %c1_122 = arith.constant 1 : index
      %c0_123 = arith.constant 0 : index
      %c0_124 = arith.constant 0 : index
      %269 = vector.load %arg23[%c1_122, %c0_123, %c0_124] : memref<2x8x32xf32, #tpu.memory_space<vmem>>, vector<1x8x32xf32>
      %270 = vector.shape_cast %269 : vector<1x8x32xf32> to vector<8x32xf32>
      %271 = vector.shape_cast %263 : vector<8x32xf32> to vector<1x8x32xf32>
      tpu.vector_store %arg23[%c1_122, %c0_123, %c0_124], %271 {strides = array<i32>} : memref<2x8x32xf32, #tpu.memory_space<vmem>>, vector<1x8x32xf32>,
    } else {
    }
    %267 = arith.extui %40 : i1 to i32
    %c0_i32_121 = arith.constant 0 : i32
    %268 = arith.cmpi ne, %267, %c0_i32_121 : i32
    scf.if %268 {
      %c0_122 = arith.constant 0 : index
      %c0_123 = arith.constant 0 : index
      %269 = vector.load %arg4[%c0_122, %c0_123] : memref<1x32xf32, #tpu.memory_space<vmem>>, vector<1x32xf32>
      %c0_124 = arith.constant 0 : index
      %c0_125 = arith.constant 0 : index
      %270 = vector.load %arg5[%c0_124, %c0_125] : memref<1x32xf32, #tpu.memory_space<vmem>>, vector<1x32xf32>
      %cst_126 = arith.constant dense<0.000000e+00> : vector<8xf32>
      %271 = vector.multi_reduction <add>, %263, %cst_126 [1] : vector<8x32xf32> to vector<8xf32>
      %272 = vector.shape_cast %271 : vector<8xf32> to vector<8x1xf32>
      %cst_127 = arith.constant 3.200000e+01 : f32
      %273 = vector.broadcast %cst_127 : f32 to vector<8x1xf32>
      %274 = arith.divf %272, %273 : vector<8x1xf32>
      %275 = vector.broadcast %274 : vector<8x1xf32> to vector<8x32xf32>
      %276 = arith.subf %263, %275 : vector<8x32xf32>
      %277 = arith.mulf %276, %276 : vector<8x32xf32>
      %cst_128 = arith.constant dense<0.000000e+00> : vector<8xf32>
      %278 = vector.multi_reduction <add>, %277, %cst_128 [1] : vector<8x32xf32> to vector<8xf32>
      %279 = vector.shape_cast %278 : vector<8xf32> to vector<8x1xf32>
      %cst_129 = arith.constant 3.200000e+01 : f32
      %280 = vector.broadcast %cst_129 : f32 to vector<8x1xf32>
      %281 = arith.divf %279, %280 : vector<8x1xf32>
      %282 = vector.broadcast %274 : vector<8x1xf32> to vector<8x32xf32>
      %283 = arith.subf %263, %282 : vector<8x32xf32>
      %cst_130 = arith.constant 9.99999974E-6 : f32
      %284 = vector.broadcast %cst_130 : f32 to vector<8x1xf32>
      %285 = arith.addf %281, %284 : vector<8x1xf32>
      %286 = math.rsqrt %285 : vector<8x1xf32>
      %287 = vector.broadcast %286 : vector<8x1xf32> to vector<8x32xf32>
      %288 = arith.mulf %283, %287 : vector<8x32xf32>
      %289 = vector.broadcast %269 : vector<1x32xf32> to vector<8x32xf32>
      %290 = arith.mulf %288, %289 : vector<8x32xf32>
      %291 = vector.broadcast %270 : vector<1x32xf32> to vector<8x32xf32>
      %292 = arith.addf %290, %291 : vector<8x32xf32>
      %293 = arith.truncf %292 : vector<8x32xf32> to vector<8x32xbf16>
      %c1_131 = arith.constant 1 : index
      %c0_132 = arith.constant 0 : index
      %c0_133 = arith.constant 0 : index
      %294 = vector.load %arg22[%c1_131, %c0_132, %c0_133] : memref<2x8x32xbf16, #tpu.memory_space<vmem>>, vector<1x8x32xbf16>
      %295 = vector.shape_cast %294 : vector<1x8x32xbf16> to vector<8x32xbf16>
      %296 = vector.shape_cast %293 : vector<8x32xbf16> to vector<1x8x32xbf16>
      tpu.vector_store %arg22[%c1_131, %c0_132, %c0_133], %296 {strides = array<i32>} : memref<2x8x32xbf16, #tpu.memory_space<vmem>>, vector<1x8x32xbf16>,
    } else {
    }
    return
  }
  func.func @transform_0(%arg0: i32, %arg1: i32) -> (i32, i32, i32) {
    %c0_i32 = arith.constant 0 : i32
    %c0_i32_0 = arith.constant 0 : i32
    %c0_i32_1 = arith.constant 0 : i32
    return %arg0, %c0_i32, %c0_i32_0 : i32, i32, i32
  }
  func.func @transform_1(%arg0: i32, %arg1: i32) -> (i32, i32, i32) {
    %c0_i32 = arith.constant 0 : i32
    %c0_i32_0 = arith.constant 0 : i32
    %c0_i32_1 = arith.constant 0 : i32
    return %arg0, %c0_i32, %c0_i32_0 : i32, i32, i32
  }
  func.func @transform_2(%arg0: i32, %arg1: i32) -> (i32, i32) {
    %c0_i32 = arith.constant 0 : i32
    %c0_i32_0 = arith.constant 0 : i32
    %c0_i32_1 = arith.constant 0 : i32
    return %c0_i32, %c0_i32_0 : i32, i32
  }
  func.func @transform_3(%arg0: i32, %arg1: i32) -> (i32, i32) {
    %c0_i32 = arith.constant 0 : i32
    %c0_i32_0 = arith.constant 0 : i32
    %c0_i32_1 = arith.constant 0 : i32
    return %c0_i32, %c0_i32_0 : i32, i32
  }
  func.func @transform_4(%arg0: i32, %arg1: i32) -> (i32, i32, i32) {
    %c0_i32 = arith.constant 0 : i32
    %c0_i32_0 = arith.constant 0 : i32
    %c0_i32_1 = arith.constant 0 : i32
    return %arg1, %c0_i32, %c0_i32_0 : i32, i32, i32
  }
  func.func @transform_5(%arg0: i32, %arg1: i32) -> (i32, i32, i32) {
    %c0_i32 = arith.constant 0 : i32
    %c0_i32_0 = arith.constant 0 : i32
    %c0_i32_1 = arith.constant 0 : i32
    return %arg1, %c0_i32, %c0_i32_0 : i32, i32, i32
  }
  func.func @transform_6(%arg0: i32, %arg1: i32) -> (i32, i32, i32) {
    %c0_i32 = arith.constant 0 : i32
    %c0_i32_0 = arith.constant 0 : i32
    %c0_i32_1 = arith.constant 0 : i32
    return %arg1, %c0_i32, %c0_i32_0 : i32, i32, i32
  }
  func.func @transform_7(%arg0: i32, %arg1: i32) -> (i32, i32, i32) {
    %c0_i32 = arith.constant 0 : i32
    %c0_i32_0 = arith.constant 0 : i32
    %c0_i32_1 = arith.constant 0 : i32
    return %arg1, %c0_i32, %c0_i32_0 : i32, i32, i32
  }
  func.func @transform_8(%arg0: i32, %arg1: i32) -> (i32, i32, i32) {
    %c0_i32 = arith.constant 0 : i32
    %c0_i32_0 = arith.constant 0 : i32
    %c0_i32_1 = arith.constant 0 : i32
    return %arg1, %c0_i32, %c0_i32_0 : i32, i32, i32
  }
  func.func @transform_9(%arg0: i32, %arg1: i32) -> (i32, i32, i32) {
    %c0_i32 = arith.constant 0 : i32
    %c0_i32_0 = arith.constant 0 : i32
    %c0_i32_1 = arith.constant 0 : i32
    return %arg1, %c0_i32, %c0_i32_0 : i32, i32, i32
  }
  func.func @transform_10(%arg0: i32, %arg1: i32) -> (i32, i32, i32) {
    %c0_i32 = arith.constant 0 : i32
    %c0_i32_0 = arith.constant 0 : i32
    %c0_i32_1 = arith.constant 0 : i32
    return %arg1, %c0_i32, %c0_i32_0 : i32, i32, i32
  }
  func.func @transform_11(%arg0: i32, %arg1: i32) -> (i32, i32, i32) {
    %c0_i32 = arith.constant 0 : i32
    %c0_i32_0 = arith.constant 0 : i32
    %c0_i32_1 = arith.constant 0 : i32
    return %arg1, %c0_i32, %c0_i32_0 : i32, i32, i32
  }
  func.func @transform_12(%arg0: i32, %arg1: i32) -> (i32, i32, i32) {
    %c0_i32 = arith.constant 0 : i32
    %c0_i32_0 = arith.constant 0 : i32
    %c0_i32_1 = arith.constant 0 : i32
    return %arg1, %c0_i32, %c0_i32_0 : i32, i32, i32
  }
  func.func @transform_13(%arg0: i32, %arg1: i32) -> (i32, i32, i32) {
    %c0_i32 = arith.constant 0 : i32
    %c0_i32_0 = arith.constant 0 : i32
    %c0_i32_1 = arith.constant 0 : i32
    return %arg1, %c0_i32, %c0_i32_0 : i32, i32, i32
  }
  func.func @transform_14(%arg0: i32, %arg1: i32) -> (i32, i32, i32) {
    %c0_i32 = arith.constant 0 : i32
    %c0_i32_0 = arith.constant 0 : i32
    %c0_i32_1 = arith.constant 0 : i32
    return %arg1, %c0_i32, %c0_i32_0 : i32, i32, i32
  }
  func.func @transform_15(%arg0: i32, %arg1: i32) -> (i32, i32, i32) {
    %c0_i32 = arith.constant 0 : i32
    %c0_i32_0 = arith.constant 0 : i32
    %c0_i32_1 = arith.constant 0 : i32
    return %arg1, %c0_i32, %c0_i32_0 : i32, i32, i32
  }
  func.func @transform_16(%arg0: i32, %arg1: i32) -> (i32, i32, i32) {
    %c0_i32 = arith.constant 0 : i32
    %c0_i32_0 = arith.constant 0 : i32
    %c0_i32_1 = arith.constant 0 : i32
    return %arg1, %c0_i32, %c0_i32_0 : i32, i32, i32
  }
  func.func @transform_17(%arg0: i32, %arg1: i32) -> (i32, i32, i32) {
    %c0_i32 = arith.constant 0 : i32
    %c0_i32_0 = arith.constant 0 : i32
    %c0_i32_1 = arith.constant 0 : i32
    return %arg1, %c0_i32, %c0_i32_0 : i32, i32, i32
  }
  func.func @transform_18(%arg0: i32, %arg1: i32) -> (i32, i32, i32) {
    %c0_i32 = arith.constant 0 : i32
    %c0_i32_0 = arith.constant 0 : i32
    %c0_i32_1 = arith.constant 0 : i32
    return %arg1, %c0_i32, %c0_i32_0 : i32, i32, i32
  }
  func.func @transform_19(%arg0: i32, %arg1: i32) -> (i32, i32, i32) {
    %c0_i32 = arith.constant 0 : i32
    %c0_i32_0 = arith.constant 0 : i32
    %c0_i32_1 = arith.constant 0 : i32
    return %arg1, %c0_i32, %c0_i32_0 : i32, i32, i32
  }
  func.func @transform_20(%arg0: i32, %arg1: i32) -> (i32, i32, i32) {
    %c0_i32 = arith.constant 0 : i32
    %c0_i32_0 = arith.constant 0 : i32
    %c0_i32_1 = arith.constant 0 : i32
    return %arg0, %c0_i32, %c0_i32_0 : i32, i32, i32
  }
}

</mosaic_0001>

<llo_original>
// kernel: tpu_custom_call.1
$region0: #{tpu_custom_call.1}
  #allocation0 [shape = 'u32[]', space=smem, size = 0x4, offset = 0x4, fixed_abs, tag = 'smem constant byte address 0x4 - core index']
  #allocation1 [shape = 'u32[144,128]{1,0:T(1,128)}', space=vmem, size = 0x12000, scoped, tag = 'internal scratch']
  #allocation2 [shape = 'f32[2,8,32]{2,1,0:T(8,128)}', space=vmem, size = 0x2000, scoped, tag = 'scratch operand']
  #allocation3 [shape = 'f32[8,8]{1,0:T(8,128)}', space=vmem, size = 0x1000, scoped, tag = 'scratch operand']
  #allocation4 [shape = 'f32[8,32]{1,0:T(8,128)}', space=vmem, size = 0x1000, scoped, tag = 'scratch operand']
  %s0 = inlined_call_operand.hbm [shape: f32[2,1,8], index: 0, kind: input, shape index: {}]
  %s1 = inlined_call_operand.hbm [shape: f32[2,8,32], index: 1, kind: input, shape index: {}]
  %s2 = inlined_call_operand.hbm [shape: f32[1,32], index: 2, kind: input, shape index: {}]
  %s3 = inlined_call_operand.hbm [shape: f32[1,32], index: 3, kind: input, shape index: {}]
  %s4 = inlined_call_operand.vmem [shape: bf16[2,32,32], index: 4, kind: input, shape index: {}]
  %s5 = inlined_call_operand.vmem [shape: f32[2,1,32], index: 5, kind: input, shape index: {}]
  %s6 = inlined_call_operand.vmem [shape: bf16[2,32,32], index: 6, kind: input, shape index: {}]
  %s7 = inlined_call_operand.vmem [shape: f32[2,1,32], index: 7, kind: input, shape index: {}]
  %s8 = inlined_call_operand.vmem [shape: bf16[2,32,32], index: 8, kind: input, shape index: {}]
  %s9 = inlined_call_operand.vmem [shape: f32[2,1,32], index: 9, kind: input, shape index: {}]
  %s10 = inlined_call_operand.hbm [shape: bf16[2,32,32], index: 10, kind: input, shape index: {}]
  %s11 = inlined_call_operand.vmem [shape: f32[2,1,32], index: 11, kind: input, shape index: {}]
  %s12 = inlined_call_operand.vmem [shape: f32[2,1,32], index: 12, kind: input, shape index: {}]
  %s13 = inlined_call_operand.vmem [shape: f32[2,1,32], index: 13, kind: input, shape index: {}]
  %s14 = inlined_call_operand.hbm [shape: bf16[2,32,64], index: 14, kind: input, shape index: {}]
  %s15 = inlined_call_operand.vmem [shape: f32[2,1,64], index: 15, kind: input, shape index: {}]
  %s16 = inlined_call_operand.vmem [shape: bf16[2,64,32], index: 16, kind: input, shape index: {}]
  %s17 = inlined_call_operand.vmem [shape: f32[2,1,32], index: 17, kind: input, shape index: {}]
  %s18 = inlined_call_operand.vmem [shape: f32[2,1,32], index: 18, kind: input, shape index: {}]
  %s19 = inlined_call_operand.vmem [shape: f32[2,1,32], index: 19, kind: input, shape index: {}]
  %s20 = inlined_call_operand.hbm [shape: bf16[2,8,32], index: 20, kind: output, shape index: {}]
  %s21 = sld [smem:[#allocation0]]
  $region161: #{tpu_custom_call.1} parent=0
    _
  %s23 = ssub.s32 1, %s21
  %s24 = scalar_select 0, %s23, %s21
  $region1: #{tpu_custom_call.1} parent=0
    #allocation5 [shape = 'u8[1024]{0}', space=vmem, size = 0x400, scoped, tag = 'input window, operand 0, single buffered']
    #allocation6 [shape = 's32[2]{0}', space=sflag, size = 0x8, scoped, tag = 'scoped memory for tpu_custom_call.1']
    #allocation7 [shape = 's32[2]{0}', space=sflag, size = 0x8, scoped, tag = 'scoped memory for tpu_custom_call.1']
    #allocation8 [shape = 'u8[8192]{0}', space=vmem, size = 0x2000, scoped, tag = 'input window, operand 1, single buffered']
    #allocation9 [shape = 's32[1]{0}', space=sflag, size = 0x4, scoped, tag = 'scoped memory for tpu_custom_call.1']
    #allocation10 [shape = 'u8[512]{0}', space=vmem, size = 0x400, scoped, tag = 'input window, operand 2, single buffered']
    #allocation11 [shape = 'u8[512]{0}', space=vmem, size = 0x400, scoped, tag = 'input window, operand 3, single buffered']
    #allocation12 [shape = 's32[1]{0}', space=sflag, size = 0x4, scoped, tag = 'scoped memory for tpu_custom_call.1']
    #allocation13 [shape = 'u8[16384]{0}', space=vmem, size = 0x4000, scoped, tag = 'input window, operand 10']
    #allocation14 [shape = 'u8[16384]{0}', space=vmem, size = 0x4000, scoped, tag = 'input window, operand 14']
    #allocation15 [shape = 'u8[4096]{0}', space=vmem, size = 0x1000, scoped, tag = 'output window, operand 0, single buffered']
    %25 = vsyncpa [#allocation6], 0
    %26 = vsyncpa [#allocation9], 0
    %27 = vsyncpa [#allocation12], 0
    %28 = vsyncpa [#allocation7], 0
    loop: start=0, step=1, limit=4
    $region2: #{tpu_custom_call.1} parent=1 // loop_pre_header
      _
    $region3: #{tpu_custom_call.1} parent=1 // loop_header
      %s30 = sphi 0, %s34
      %p31 = scmp.ge.s32.totalorder %s30, 4
      %s37 = sphi 0, %s49
      %s38 = sphi 0, %s45
      %s39 = sphi 0, %s37
      %s40 = sphi 0, %s38
      %s41 = sphi 0, %s39
      %s42 = sphi 0, %s40
      %s52 = sphi 0, %s54
      %s55 = sphi 0, %s52
      %s56 = sphi 0, %s55
      %s72 = sphi 0, %s56
      %s78 = sphi 0, %s80
      %s81 = sphi 0, %s78
      %s82 = sphi 0, %s81
      %s98 = sphi 0, %s82
      %s102 = sphi 0, %s102
      %s104 = sphi 0, %s102
      %s105 = sphi 0, %s104
      %s119 = sphi 0, %s105
      %s123 = sphi 0, %s123
      %s125 = sphi 0, %s123
      %s126 = sphi 0, %s125
      %s140 = sphi 0, %s126
      %s146 = sphi 0, %s148
      %s149 = sphi 0, %s146
      %s150 = sphi 0, %s149
      %s166 = sphi 0, %s150
      %s172 = sphi 0, %s174
      %s175 = sphi 0, %s172
      %s176 = sphi 0, %s175
      %s192 = sphi 0, %s176
      %s198 = sphi 0, %s200
      %s201 = sphi 0, %s198
      %s202 = sphi 0, %s201
      %s218 = sphi 0, %s202
      %s224 = sphi 0, %s226
      %s227 = sphi 0, %s224
      %s228 = sphi 0, %s227
      %s244 = sphi 0, %s228
      %s250 = sphi 0, %s252
      %s253 = sphi 0, %s250
      %s254 = sphi 0, %s253
      %s270 = sphi 0, %s254
      %s276 = sphi 0, %s278
      %s279 = sphi 0, %s276
      %s280 = sphi 0, %s279
      %s296 = sphi 0, %s280
      %s302 = sphi 0, %s304
      %s305 = sphi 0, %s302
      %s306 = sphi 0, %s305
      %s322 = sphi 0, %s306
      %s328 = sphi 0, %s330
      %s331 = sphi 0, %s328
      %s332 = sphi 0, %s331
      %s348 = sphi 0, %s332
      %s354 = sphi 0, %s356
      %s357 = sphi 0, %s354
      %s358 = sphi 0, %s357
      %s374 = sphi 0, %s358
      %s380 = sphi 0, %s382
      %s383 = sphi 0, %s380
      %s384 = sphi 0, %s383
      %s400 = sphi 0, %s384
      %s406 = sphi 0, %s408
      %s409 = sphi 0, %s406
      %s410 = sphi 0, %s409
      %s426 = sphi 0, %s410
      %s432 = sphi 0, %s434
      %s435 = sphi 0, %s432
      %s436 = sphi 0, %s435
      %s452 = sphi 0, %s436
      %s458 = sphi 0, %s460
      %s461 = sphi 0, %s458
      %s462 = sphi 0, %s461
      %s478 = sphi 0, %s462
      %s484 = sphi 0, %s486
      %s487 = sphi 0, %s484
      %s488 = sphi 0, %s487
      %s504 = sphi 0, %s488
      %s510 = sphi 0, %s512
      %s513 = sphi 0, %s510
      %s514 = sphi 0, %s513
      %s530 = sphi 0, %s514
      %s536 = sphi 0, %s538
      %s539 = sphi 0, %s536
      %s540 = sphi 0, %s539
      %s556 = sphi 0, %s540
      %s562 = sphi 0, %s564
      %s565 = sphi 0, %s562
      %s566 = sphi 0, %s565
      %s582 = sphi 0, %s566
    $region4: #{tpu_custom_call.1} parent=1 // loop_header_branch
      %33 = sbr.rel (%p31) target = $region8
    $region5: #{tpu_custom_call.1} parent=1 // loop_body
      %s35 = ssub.s32 %s30, 1
      %s36 = ssub.s32 %s30, 2
      %s43 = sadd.s32 1, %s38
      %p44 = scmp.ge.s32.totalorder %s43, 2
      %s45 = scalar_select %p44, 0, %s43
      %s46 = sadd.s32 1, %s37
      %s47 = scalar_select %p44, %s46, %s37
      %p48 = scmp.ge.s32.totalorder %s47, 1
      %s49 = scalar_select %p48, 0, %s47
      %s50 = ssub.s32 %s37, %s49
      %p51 = scmp.eq.s32.totalorder %s50, 0
      %s53 = sadd.s32 %s52, 1
      %s54 = scalar_select %p51, %s52, %s53
      %p57 = pneg %p51
      %p58 = scmp.eq.s32.totalorder %s30, 1
      %p59 = por %p57, %p58
      %p60 = scmp.ne.s32.totalorder %s52, %s55
      %p61 = scmp.eq.s32.totalorder %s30, 0
      %p62 = por %p60, %p61
      %p63 = scmp.ne.s32.totalorder %s52, %s55
      %p64 = scmp.eq.s32.totalorder %s35, 1
      %p65 = por %p63, %p64
      %p66 = scmp.ne.s32.totalorder %s55, %s56
      %p67 = scmp.eq.s32.totalorder %s35, 0
      %p68 = por %p66, %p67
      %p69 = scmp.ne.s32.totalorder %s55, %s56
      %p70 = scmp.eq.s32.totalorder %s36, 1
      %p71 = por %p69, %p70
      %p73 = scmp.ne.s32.totalorder %s56, %s72
      %p74 = scmp.eq.s32.totalorder %s36, 0
      %p75 = por %p73, %p74
      %s76 = ssub.s32 %s37, %s49
      %p77 = scmp.eq.s32.totalorder %s76, 0
      %s79 = sadd.s32 %s78, 1
      %s80 = scalar_select %p77, %s78, %s79
      %p83 = pneg %p77
      %p84 = scmp.eq.s32.totalorder %s30, 1
      %p85 = por %p83, %p84
      %p86 = scmp.ne.s32.totalorder %s78, %s81
      %p87 = scmp.eq.s32.totalorder %s30, 0
      %p88 = por %p86, %p87
      %p89 = scmp.ne.s32.totalorder %s78, %s81
      %p90 = scmp.eq.s32.totalorder %s35, 1
      %p91 = por %p89, %p90
      %p92 = scmp.ne.s32.totalorder %s81, %s82
      %p93 = scmp.eq.s32.totalorder %s35, 0
      %p94 = por %p92, %p93
      %p95 = scmp.ne.s32.totalorder %s81, %s82
      %p96 = scmp.eq.s32.totalorder %s36, 1
      %p97 = por %p95, %p96
      %p99 = scmp.ne.s32.totalorder %s82, %s98
      %p100 = scmp.eq.s32.totalorder %s36, 0
      %p101 = por %p99, %p100
      %s103 = sadd.s32 %s102, 1
      %p106 = scmp.eq.s32.totalorder %s30, 1
      %p107 = scmp.ne.s32.totalorder %s102, %s104
      %p108 = scmp.eq.s32.totalorder %s30, 0
      %p109 = por %p107, %p108
      %p110 = scmp.ne.s32.totalorder %s102, %s104
      %p111 = scmp.eq.s32.totalorder %s35, 1
      %p112 = por %p110, %p111
      %p113 = scmp.ne.s32.totalorder %s104, %s105
      %p114 = scmp.eq.s32.totalorder %s35, 0
      %p115 = por %p113, %p114
      %p116 = scmp.ne.s32.totalorder %s104, %s105
      %p117 = scmp.eq.s32.totalorder %s36, 1
      %p118 = por %p116, %p117
      %p120 = scmp.ne.s32.totalorder %s105, %s119
      %p121 = scmp.eq.s32.totalorder %s36, 0
      %p122 = por %p120, %p121
      %s124 = sadd.s32 %s123, 1
      %p127 = scmp.eq.s32.totalorder %s30, 1
      %p128 = scmp.ne.s32.totalorder %s123, %s125
      %p129 = scmp.eq.s32.totalorder %s30, 0
      %p130 = por %p128, %p129
      %p131 = scmp.ne.s32.totalorder %s123, %s125
      %p132 = scmp.eq.s32.totalorder %s35, 1
      %p133 = por %p131, %p132
      %p134 = scmp.ne.s32.totalorder %s125, %s126
      %p135 = scmp.eq.s32.totalorder %s35, 0
      %p136 = por %p134, %p135
      %p137 = scmp.ne.s32.totalorder %s125, %s126
      %p138 = scmp.eq.s32.totalorder %s36, 1
      %p139 = por %p137, %p138
      %p141 = scmp.ne.s32.totalorder %s126, %s140
      %p142 = scmp.eq.s32.totalorder %s36, 0
      %p143 = por %p141, %p142
      %s144 = ssub.s32 %s38, %s45
      %p145 = scmp.eq.s32.totalorder %s144, 0
      %s147 = sadd.s32 %s146, 1
      %s148 = scalar_select %p145, %s146, %s147
      %p151 = pneg %p145
      %p152 = scmp.eq.s32.totalorder %s30, 1
      %p153 = por %p151, %p152
      %p154 = scmp.ne.s32.totalorder %s146, %s149
      %p155 = scmp.eq.s32.totalorder %s30, 0
      %p156 = por %p154, %p155
      %p157 = scmp.ne.s32.totalorder %s146, %s149
      %p158 = scmp.eq.s32.totalorder %s35, 1
      %p159 = por %p157, %p158
      %p160 = scmp.ne.s32.totalorder %s149, %s150
      %p161 = scmp.eq.s32.totalorder %s35, 0
      %p162 = por %p160, %p161
      %p163 = scmp.ne.s32.totalorder %s149, %s150
      %p164 = scmp.eq.s32.totalorder %s36, 1
      %p165 = por %p163, %p164
      %p167 = scmp.ne.s32.totalorder %s150, %s166
      %p168 = scmp.eq.s32.totalorder %s36, 0
      %p169 = por %p167, %p168
      %s170 = ssub.s32 %s38, %s45
      %p171 = scmp.eq.s32.totalorder %s170, 0
      %s173 = sadd.s32 %s172, 1
      %s174 = scalar_select %p171, %s172, %s173
      %p177 = pneg %p171
      %p178 = scmp.eq.s32.totalorder %s30, 1
      %p179 = por %p177, %p178
      %p180 = scmp.ne.s32.totalorder %s172, %s175
      %p181 = scmp.eq.s32.totalorder %s30, 0
      %p182 = por %p180, %p181
      %p183 = scmp.ne.s32.totalorder %s172, %s175
      %p184 = scmp.eq.s32.totalorder %s35, 1
      %p185 = por %p183, %p184
      %p186 = scmp.ne.s32.totalorder %s175, %s176
      %p187 = scmp.eq.s32.totalorder %s35, 0
      %p188 = por %p186, %p187
      %p189 = scmp.ne.s32.totalorder %s175, %s176
      %p190 = scmp.eq.s32.totalorder %s36, 1
      %p191 = por %p189, %p190
      %p193 = scmp.ne.s32.totalorder %s176, %s192
      %p194 = scmp.eq.s32.totalorder %s36, 0
      %p195 = por %p193, %p194
      %s196 = ssub.s32 %s38, %s45
      %p197 = scmp.eq.s32.totalorder %s196, 0
      %s199 = sadd.s32 %s198, 1
      %s200 = scalar_select %p197, %s198, %s199
      %p203 = pneg %p197
      %p204 = scmp.eq.s32.totalorder %s30, 1
      %p205 = por %p203, %p204
      %p206 = scmp.ne.s32.totalorder %s198, %s201
      %p207 = scmp.eq.s32.totalorder %s30, 0
      %p208 = por %p206, %p207
      %p209 = scmp.ne.s32.totalorder %s198, %s201
      %p210 = scmp.eq.s32.totalorder %s35, 1
      %p211 = por %p209, %p210
      %p212 = scmp.ne.s32.totalorder %s201, %s202
      %p213 = scmp.eq.s32.totalorder %s35, 0
      %p214 = por %p212, %p213
      %p215 = scmp.ne.s32.totalorder %s201, %s202
      %p216 = scmp.eq.s32.totalorder %s36, 1
      %p217 = por %p215, %p216
      %p219 = scmp.ne.s32.totalorder %s202, %s218
      %p220 = scmp.eq.s32.totalorder %s36, 0
      %p221 = por %p219, %p220
      %s222 = ssub.s32 %s38, %s45
      %p223 = scmp.eq.s32.totalorder %s222, 0
      %s225 = sadd.s32 %s224, 1
      %s226 = scalar_select %p223, %s224, %s225
      %p229 = pneg %p223
      %p230 = scmp.eq.s32.totalorder %s30, 1
      %p231 = por %p229, %p230
      %p232 = scmp.ne.s32.totalorder %s224, %s227
      %p233 = scmp.eq.s32.totalorder %s30, 0
      %p234 = por %p232, %p233
      %p235 = scmp.ne.s32.totalorder %s224, %s227
      %p236 = scmp.eq.s32.totalorder %s35, 1
      %p237 = por %p235, %p236
      %p238 = scmp.ne.s32.totalorder %s227, %s228
      %p239 = scmp.eq.s32.totalorder %s35, 0
      %p240 = por %p238, %p239
      %p241 = scmp.ne.s32.totalorder %s227, %s228
      %p242 = scmp.eq.s32.totalorder %s36, 1
      %p243 = por %p241, %p242
      %p245 = scmp.ne.s32.totalorder %s228, %s244
      %p246 = scmp.eq.s32.totalorder %s36, 0
      %p247 = por %p245, %p246
      %s248 = ssub.s32 %s38, %s45
      %p249 = scmp.eq.s32.totalorder %s248, 0
      %s251 = sadd.s32 %s250, 1
      %s252 = scalar_select %p249, %s250, %s251
      %p255 = pneg %p249
      %p256 = scmp.eq.s32.totalorder %s30, 1
      %p257 = por %p255, %p256
      %p258 = scmp.ne.s32.totalorder %s250, %s253
      %p259 = scmp.eq.s32.totalorder %s30, 0
      %p260 = por %p258, %p259
      %p261 = scmp.ne.s32.totalorder %s250, %s253
      %p262 = scmp.eq.s32.totalorder %s35, 1
      %p263 = por %p261, %p262
      %p264 = scmp.ne.s32.totalorder %s253, %s254
      %p265 = scmp.eq.s32.totalorder %s35, 0
      %p266 = por %p264, %p265
      %p267 = scmp.ne.s32.totalorder %s253, %s254
      %p268 = scmp.eq.s32.totalorder %s36, 1
      %p269 = por %p267, %p268
      %p271 = scmp.ne.s32.totalorder %s254, %s270
      %p272 = scmp.eq.s32.totalorder %s36, 0
      %p273 = por %p271, %p272
      %s274 = ssub.s32 %s38, %s45
      %p275 = scmp.eq.s32.totalorder %s274, 0
      %s277 = sadd.s32 %s276, 1
      %s278 = scalar_select %p275, %s276, %s277
      %p281 = pneg %p275
      %p282 = scmp.eq.s32.totalorder %s30, 1
      %p283 = por %p281, %p282
      %p284 = scmp.ne.s32.totalorder %s276, %s279
      %p285 = scmp.eq.s32.totalorder %s30, 0
      %p286 = por %p284, %p285
      %p287 = scmp.ne.s32.totalorder %s276, %s279
      %p288 = scmp.eq.s32.totalorder %s35, 1
      %p289 = por %p287, %p288
      %p290 = scmp.ne.s32.totalorder %s279, %s280
      %p291 = scmp.eq.s32.totalorder %s35, 0
      %p292 = por %p290, %p291
      %p293 = scmp.ne.s32.totalorder %s279, %s280
      %p294 = scmp.eq.s32.totalorder %s36, 1
      %p295 = por %p293, %p294
      %p297 = scmp.ne.s32.totalorder %s280, %s296
      %p298 = scmp.eq.s32.totalorder %s36, 0
      %p299 = por %p297, %p298
      %s300 = ssub.s32 %s38, %s45
      %p301 = scmp.eq.s32.totalorder %s300, 0
      %s303 = sadd.s32 %s302, 1
      %s304 = scalar_select %p301, %s302, %s303
      %p307 = pneg %p301
      %p308 = scmp.eq.s32.totalorder %s30, 1
      %p309 = por %p307, %p308
      %p310 = scmp.ne.s32.totalorder %s302, %s305
      %p311 = scmp.eq.s32.totalorder %s30, 0
      %p312 = por %p310, %p311
      %p313 = scmp.ne.s32.totalorder %s302, %s305
      %p314 = scmp.eq.s32.totalorder %s35, 1
      %p315 = por %p313, %p314
      %p316 = scmp.ne.s32.totalorder %s305, %s306
      %p317 = scmp.eq.s32.totalorder %s35, 0
      %p318 = por %p316, %p317
      %p319 = scmp.ne.s32.totalorder %s305, %s306
      %p320 = scmp.eq.s32.totalorder %s36, 1
      %p321 = por %p319, %p320
      %p323 = scmp.ne.s32.totalorder %s306, %s322
      %p324 = scmp.eq.s32.totalorder %s36, 0
      %p325 = por %p323, %p324
      %s326 = ssub.s32 %s38, %s45
      %p327 = scmp.eq.s32.totalorder %s326, 0
      %s329 = sadd.s32 %s328, 1
      %s330 = scalar_select %p327, %s328, %s329
      %p333 = pneg %p327
      %p334 = scmp.eq.s32.totalorder %s30, 1
      %p335 = por %p333, %p334
      %p336 = scmp.ne.s32.totalorder %s328, %s331
      %p337 = scmp.eq.s32.totalorder %s30, 0
      %p338 = por %p336, %p337
      %p339 = scmp.ne.s32.totalorder %s328, %s331
      %p340 = scmp.eq.s32.totalorder %s35, 1
      %p341 = por %p339, %p340
      %p342 = scmp.ne.s32.totalorder %s331, %s332
      %p343 = scmp.eq.s32.totalorder %s35, 0
      %p344 = por %p342, %p343
      %p345 = scmp.ne.s32.totalorder %s331, %s332
      %p346 = scmp.eq.s32.totalorder %s36, 1
      %p347 = por %p345, %p346
      %p349 = scmp.ne.s32.totalorder %s332, %s348
      %p350 = scmp.eq.s32.totalorder %s36, 0
      %p351 = por %p349, %p350
      %s352 = ssub.s32 %s38, %s45
      %p353 = scmp.eq.s32.totalorder %s352, 0
      %s355 = sadd.s32 %s354, 1
      %s356 = scalar_select %p353, %s354, %s355
      %p359 = pneg %p353
      %p360 = scmp.eq.s32.totalorder %s30, 1
      %p361 = por %p359, %p360
      %p362 = scmp.ne.s32.totalorder %s354, %s357
      %p363 = scmp.eq.s32.totalorder %s30, 0
      %p364 = por %p362, %p363
      %p365 = scmp.ne.s32.totalorder %s354, %s357
      %p366 = scmp.eq.s32.totalorder %s35, 1
      %p367 = por %p365, %p366
      %p368 = scmp.ne.s32.totalorder %s357, %s358
      %p369 = scmp.eq.s32.totalorder %s35, 0
      %p370 = por %p368, %p369
      %p371 = scmp.ne.s32.totalorder %s357, %s358
      %p372 = scmp.eq.s32.totalorder %s36, 1
      %p373 = por %p371, %p372
      %p375 = scmp.ne.s32.totalorder %s358, %s374
      %p376 = scmp.eq.s32.totalorder %s36, 0
      %p377 = por %p375, %p376
      %s378 = ssub.s32 %s38, %s45
      %p379 = scmp.eq.s32.totalorder %s378, 0
      %s381 = sadd.s32 %s380, 1
      %s382 = scalar_select %p379, %s380, %s381
      %p385 = pneg %p379
      %p386 = scmp.eq.s32.totalorder %s30, 1
      %p387 = por %p385, %p386
      %p388 = scmp.ne.s32.totalorder %s380, %s383
      %p389 = scmp.eq.s32.totalorder %s30, 0
      %p390 = por %p388, %p389
      %p391 = scmp.ne.s32.totalorder %s380, %s383
      %p392 = scmp.eq.s32.totalorder %s35, 1
      %p393 = por %p391, %p392
      %p394 = scmp.ne.s32.totalorder %s383, %s384
      %p395 = scmp.eq.s32.totalorder %s35, 0
      %p396 = por %p394, %p395
      %p397 = scmp.ne.s32.totalorder %s383, %s384
      %p398 = scmp.eq.s32.totalorder %s36, 1
      %p399 = por %p397, %p398
      %p401 = scmp.ne.s32.totalorder %s384, %s400
      %p402 = scmp.eq.s32.totalorder %s36, 0
      %p403 = por %p401, %p402
      %s404 = ssub.s32 %s38, %s45
      %p405 = scmp.eq.s32.totalorder %s404, 0
      %s407 = sadd.s32 %s406, 1
      %s408 = scalar_select %p405, %s406, %s407
      %p411 = pneg %p405
      %p412 = scmp.eq.s32.totalorder %s30, 1
      %p413 = por %p411, %p412
      %p414 = scmp.ne.s32.totalorder %s406, %s409
      %p415 = scmp.eq.s32.totalorder %s30, 0
      %p416 = por %p414, %p415
      %p417 = scmp.ne.s32.totalorder %s406, %s409
      %p418 = scmp.eq.s32.totalorder %s35, 1
      %p419 = por %p417, %p418
      %p420 = scmp.ne.s32.totalorder %s409, %s410
      %p421 = scmp.eq.s32.totalorder %s35, 0
      %p422 = por %p420, %p421
      %p423 = scmp.ne.s32.totalorder %s409, %s410
      %p424 = scmp.eq.s32.totalorder %s36, 1
      %p425 = por %p423, %p424
      %p427 = scmp.ne.s32.totalorder %s410, %s426
      %p428 = scmp.eq.s32.totalorder %s36, 0
      %p429 = por %p427, %p428
      %s430 = ssub.s32 %s38, %s45
      %p431 = scmp.eq.s32.totalorder %s430, 0
      %s433 = sadd.s32 %s432, 1
      %s434 = scalar_select %p431, %s432, %s433
      %p437 = pneg %p431
      %p438 = scmp.eq.s32.totalorder %s30, 1
      %p439 = por %p437, %p438
      %p440 = scmp.ne.s32.totalorder %s432, %s435
      %p441 = scmp.eq.s32.totalorder %s30, 0
      %p442 = por %p440, %p441
      %p443 = scmp.ne.s32.totalorder %s432, %s435
      %p444 = scmp.eq.s32.totalorder %s35, 1
      %p445 = por %p443, %p444
      %p446 = scmp.ne.s32.totalorder %s435, %s436
      %p447 = scmp.eq.s32.totalorder %s35, 0
      %p448 = por %p446, %p447
      %p449 = scmp.ne.s32.totalorder %s435, %s436
      %p450 = scmp.eq.s32.totalorder %s36, 1
      %p451 = por %p449, %p450
      %p453 = scmp.ne.s32.totalorder %s436, %s452
      %p454 = scmp.eq.s32.totalorder %s36, 0
      %p455 = por %p453, %p454
      %s456 = ssub.s32 %s38, %s45
      %p457 = scmp.eq.s32.totalorder %s456, 0
      %s459 = sadd.s32 %s458, 1
      %s460 = scalar_select %p457, %s458, %s459
      %p463 = pneg %p457
      %p464 = scmp.eq.s32.totalorder %s30, 1
      %p465 = por %p463, %p464
      %p466 = scmp.ne.s32.totalorder %s458, %s461
      %p467 = scmp.eq.s32.totalorder %s30, 0
      %p468 = por %p466, %p467
      %p469 = scmp.ne.s32.totalorder %s458, %s461
      %p470 = scmp.eq.s32.totalorder %s35, 1
      %p471 = por %p469, %p470
      %p472 = scmp.ne.s32.totalorder %s461, %s462
      %p473 = scmp.eq.s32.totalorder %s35, 0
      %p474 = por %p472, %p473
      %p475 = scmp.ne.s32.totalorder %s461, %s462
      %p476 = scmp.eq.s32.totalorder %s36, 1
      %p477 = por %p475, %p476
      %p479 = scmp.ne.s32.totalorder %s462, %s478
      %p480 = scmp.eq.s32.totalorder %s36, 0
      %p481 = por %p479, %p480
      %s482 = ssub.s32 %s38, %s45
      %p483 = scmp.eq.s32.totalorder %s482, 0
      %s485 = sadd.s32 %s484, 1
      %s486 = scalar_select %p483, %s484, %s485
      %p489 = pneg %p483
      %p490 = scmp.eq.s32.totalorder %s30, 1
      %p491 = por %p489, %p490
      %p492 = scmp.ne.s32.totalorder %s484, %s487
      %p493 = scmp.eq.s32.totalorder %s30, 0
      %p494 = por %p492, %p493
      %p495 = scmp.ne.s32.totalorder %s484, %s487
      %p496 = scmp.eq.s32.totalorder %s35, 1
      %p497 = por %p495, %p496
      %p498 = scmp.ne.s32.totalorder %s487, %s488
      %p499 = scmp.eq.s32.totalorder %s35, 0
      %p500 = por %p498, %p499
      %p501 = scmp.ne.s32.totalorder %s487, %s488
      %p502 = scmp.eq.s32.totalorder %s36, 1
      %p503 = por %p501, %p502
      %p505 = scmp.ne.s32.totalorder %s488, %s504
      %p506 = scmp.eq.s32.totalorder %s36, 0
      %p507 = por %p505, %p506
      %s508 = ssub.s32 %s38, %s45
      %p509 = scmp.eq.s32.totalorder %s508, 0
      %s511 = sadd.s32 %s510, 1
      %s512 = scalar_select %p509, %s510, %s511
      %p515 = pneg %p509
      %p516 = scmp.eq.s32.totalorder %s30, 1
      %p517 = por %p515, %p516
      %p518 = scmp.ne.s32.totalorder %s510, %s513
      %p519 = scmp.eq.s32.totalorder %s30, 0
      %p520 = por %p518, %p519
      %p521 = scmp.ne.s32.totalorder %s510, %s513
      %p522 = scmp.eq.s32.totalorder %s35, 1
      %p523 = por %p521, %p522
      %p524 = scmp.ne.s32.totalorder %s513, %s514
      %p525 = scmp.eq.s32.totalorder %s35, 0
      %p526 = por %p524, %p525
      %p527 = scmp.ne.s32.totalorder %s513, %s514
      %p528 = scmp.eq.s32.totalorder %s36, 1
      %p529 = por %p527, %p528
      %p531 = scmp.ne.s32.totalorder %s514, %s530
      %p532 = scmp.eq.s32.totalorder %s36, 0
      %p533 = por %p531, %p532
      %s534 = ssub.s32 %s38, %s45
      %p535 = scmp.eq.s32.totalorder %s534, 0
      %s537 = sadd.s32 %s536, 1
      %s538 = scalar_select %p535, %s536, %s537
      %p541 = pneg %p535
      %p542 = scmp.eq.s32.totalorder %s30, 1
      %p543 = por %p541, %p542
      %p544 = scmp.ne.s32.totalorder %s536, %s539
      %p545 = scmp.eq.s32.totalorder %s30, 0
      %p546 = por %p544, %p545
      %p547 = scmp.ne.s32.totalorder %s536, %s539
      %p548 = scmp.eq.s32.totalorder %s35, 1
      %p549 = por %p547, %p548
      %p550 = scmp.ne.s32.totalorder %s539, %s540
      %p551 = scmp.eq.s32.totalorder %s35, 0
      %p552 = por %p550, %p551
      %p553 = scmp.ne.s32.totalorder %s539, %s540
      %p554 = scmp.eq.s32.totalorder %s36, 1
      %p555 = por %p553, %p554
      %p557 = scmp.ne.s32.totalorder %s540, %s556
      %p558 = scmp.eq.s32.totalorder %s36, 0
      %p559 = por %p557, %p558
      %s560 = ssub.s32 %s37, %s49
      %p561 = scmp.eq.s32.totalorder %s560, 0
      %s563 = sadd.s32 %s562, 1
      %s564 = scalar_select %p561, %s562, %s563
      %p567 = pneg %p561
      %p568 = scmp.eq.s32.totalorder %s30, 1
      %p569 = por %p567, %p568
      %p570 = scmp.ne.s32.totalorder %s562, %s565
      %p571 = scmp.eq.s32.totalorder %s30, 0
      %p572 = por %p570, %p571
      %p573 = scmp.ne.s32.totalorder %s562, %s565
      %p574 = scmp.eq.s32.totalorder %s35, 1
      %p575 = por %p573, %p574
      %p576 = scmp.ne.s32.totalorder %s565, %s566
      %p577 = scmp.eq.s32.totalorder %s35, 0
      %p578 = por %p576, %p577
      %p579 = scmp.ne.s32.totalorder %s565, %s566
      %p580 = scmp.eq.s32.totalorder %s36, 1
      %p581 = por %p579, %p580
      %p583 = scmp.ne.s32.totalorder %s566, %s582
      %p584 = scmp.eq.s32.totalorder %s36, 0
      %p585 = por %p583, %p584
      %p586 = scmp.le.s32.totalorder 1, %s30
      %p587 = scmp.lt.s32.totalorder %s30, 3
      %p588 = pnand %p586, %p587
      %p589 = pneg %p588
      // Predicated region
      $region9: #{tpu_custom_call.1} parent=5 // pred_check
        _
      $region10: #{tpu_custom_call.1} parent=5 // pred_check_branch
        %591 = sbr.rel (%p588) target = $region12
      $region11: #{tpu_custom_call.1} parent=5 // pred_region
        %s592 = ssub.s32 %s30, 1
        // Predicated region
        $region13: #{tpu_custom_call.1} parent=11 // pred_check
          %p593 = pneg %p68
        $region14: #{tpu_custom_call.1} parent=11 // pred_check_branch
          %595 = sbr.rel (%p593) target = $region16
        $region15: #{tpu_custom_call.1} parent=11 // pred_region
          %s596 = smul.u32 2, %s39
          %s598 = ssub.s32 32, 32
          %599 = vsyncadd [#allocation6], %s598
          %s600 = smul.addr %s596, 16
          %s601 = scalar_lea.hbm %s0, %s600
          %s602 = sshll.u32 [#allocation5], 4
          %s603 = int_to_ptr.vmem [resolvable:$true] %s602
          %608 = dma.hbm_to_vmem [thread:$0]  %s601, 32, %s603, [#allocation6], 16, 16, 1
        $region16: #{tpu_custom_call.1} parent=11 // pred_fallthru
          _
        // Predicated region
        $region17: #{tpu_custom_call.1} parent=11 // pred_check
          %p609 = pneg %p94
        $region18: #{tpu_custom_call.1} parent=11 // pred_check_branch
          %611 = sbr.rel (%p609) target = $region20
        $region19: #{tpu_custom_call.1} parent=11 // pred_region
          %s612 = smul.u32 2, %s39
          %s614 = ssub.s32 256, 256
          %615 = vsyncadd [#allocation9], %s614
          %s616 = smul.addr %s612, 128
          %s617 = scalar_lea.hbm %s1, %s616
          %s618 = sshll.u32 [#allocation8], 4
          %s619 = int_to_ptr.vmem [resolvable:$true] %s618
          %624 = dma.hbm_to_vmem [thread:$0]  %s617, 256, %s619, [#allocation9], 128, 128, 8
        $region20: #{tpu_custom_call.1} parent=11 // pred_fallthru
          _
        // Predicated region
        $region21: #{tpu_custom_call.1} parent=11 // pred_check
          %p625 = pneg %p115
        $region22: #{tpu_custom_call.1} parent=11 // pred_check_branch
          %627 = sbr.rel (%p625) target = $region24
        $region23: #{tpu_custom_call.1} parent=11 // pred_region
          %s629 = ssub.s32 16, 16
          %630 = vsyncadd [#allocation9], %s629
          %s632 = sshll.u32 [#allocation10], 4
          %s633 = int_to_ptr.vmem [resolvable:$true] %s632
          %635 = dma.hbm_to_vmem [thread:$0]  %s2, 16, %s633, [#allocation9]
        $region24: #{tpu_custom_call.1} parent=11 // pred_fallthru
          _
        // Predicated region
        $region25: #{tpu_custom_call.1} parent=11 // pred_check
          %p636 = pneg %p136
        $region26: #{tpu_custom_call.1} parent=11 // pred_check_branch
          %638 = sbr.rel (%p636) target = $region28
        $region27: #{tpu_custom_call.1} parent=11 // pred_region
          %s640 = ssub.s32 16, 16
          %641 = vsyncadd [#allocation12], %s640
          %s643 = sshll.u32 [#allocation11], 4
          %s644 = int_to_ptr.vmem [resolvable:$true] %s643
          %646 = dma.hbm_to_vmem [thread:$0]  %s3, 16, %s644, [#allocation12]
        $region28: #{tpu_custom_call.1} parent=11 // pred_fallthru
          _
      $region12: #{tpu_custom_call.1} parent=5 // pred_fallthru
        _
      %p647 = scmp.lt.s32.totalorder %s30, 2
      // Predicated region
      $region29: #{tpu_custom_call.1} parent=5 // pred_check
        %p648 = pneg %p647
      $region30: #{tpu_custom_call.1} parent=5 // pred_check_branch
        %650 = sbr.rel (%p648) target = $region32
      $region31: #{tpu_custom_call.1} parent=5 // pred_region
        // Predicated region
        $region33: #{tpu_custom_call.1} parent=31 // pred_check
          %p651 = pneg %p156
        $region34: #{tpu_custom_call.1} parent=31 // pred_check_branch
          %653 = sbr.rel (%p651) target = $region36
        $region35: #{tpu_custom_call.1} parent=31 // pred_region
          %p654 = scmp.lt.s32.totalorder %s38, 1
          %s655 = scalar_select %p654, %s38, 1
          %s656 = smul.addr %s655, 4
          %s657 = smul.addr %s656, 4
          %s658 = scalar_lea.vmem %s4, %s657
        $region36: #{tpu_custom_call.1} parent=31 // pred_fallthru
          _
        // Predicated region
        $region37: #{tpu_custom_call.1} parent=31 // pred_check
          %p659 = pneg %p182
        $region38: #{tpu_custom_call.1} parent=31 // pred_check_branch
          %661 = sbr.rel (%p659) target = $region40
        $region39: #{tpu_custom_call.1} parent=31 // pred_region
          %p662 = scmp.lt.s32.totalorder %s38, 1
          %s663 = scalar_select %p662, %s38, 1
          %s664 = scalar_lea.vmem %s5, %s663
        $region40: #{tpu_custom_call.1} parent=31 // pred_fallthru
          _
        // Predicated region
        $region41: #{tpu_custom_call.1} parent=31 // pred_check
          %p665 = pneg %p208
        $region42: #{tpu_custom_call.1} parent=31 // pred_check_branch
          %667 = sbr.rel (%p665) target = $region44
        $region43: #{tpu_custom_call.1} parent=31 // pred_region
          %p668 = scmp.lt.s32.totalorder %s38, 1
          %s669 = scalar_select %p668, %s38, 1
          %s670 = smul.addr %s669, 4
          %s671 = smul.addr %s670, 4
          %s672 = scalar_lea.vmem %s6, %s671
        $region44: #{tpu_custom_call.1} parent=31 // pred_fallthru
          _
        // Predicated region
        $region45: #{tpu_custom_call.1} parent=31 // pred_check
          %p673 = pneg %p234
        $region46: #{tpu_custom_call.1} parent=31 // pred_check_branch
          %675 = sbr.rel (%p673) target = $region48
        $region47: #{tpu_custom_call.1} parent=31 // pred_region
          %p676 = scmp.lt.s32.totalorder %s38, 1
          %s677 = scalar_select %p676, %s38, 1
          %s678 = scalar_lea.vmem %s7, %s677
        $region48: #{tpu_custom_call.1} parent=31 // pred_fallthru
          _
        // Predicated region
        $region49: #{tpu_custom_call.1} parent=31 // pred_check
          %p679 = pneg %p260
        $region50: #{tpu_custom_call.1} parent=31 // pred_check_branch
          %681 = sbr.rel (%p679) target = $region52
        $region51: #{tpu_custom_call.1} parent=31 // pred_region
          %p682 = scmp.lt.s32.totalorder %s38, 1
          %s683 = scalar_select %p682, %s38, 1
          %s684 = smul.addr %s683, 4
          %s685 = smul.addr %s684, 4
          %s686 = scalar_lea.vmem %s8, %s685
        $region52: #{tpu_custom_call.1} parent=31 // pred_fallthru
          _
        // Predicated region
        $region53: #{tpu_custom_call.1} parent=31 // pred_check
          %p687 = pneg %p286
        $region54: #{tpu_custom_call.1} parent=31 // pred_check_branch
          %689 = sbr.rel (%p687) target = $region56
        $region55: #{tpu_custom_call.1} parent=31 // pred_region
          %p690 = scmp.lt.s32.totalorder %s38, 1
          %s691 = scalar_select %p690, %s38, 1
          %s692 = scalar_lea.vmem %s9, %s691
        $region56: #{tpu_custom_call.1} parent=31 // pred_fallthru
          _
        // Predicated region
        $region57: #{tpu_custom_call.1} parent=31 // pred_check
          %p693 = pneg %p312
        $region58: #{tpu_custom_call.1} parent=31 // pred_check_branch
          %695 = sbr.rel (%p693) target = $region60
        $region59: #{tpu_custom_call.1} parent=31 // pred_region
          %s696 = sand.u32 %s30, 1
          %s697 = scalar_lea.sflag [#allocation6], %s696
          %s698 = sand.u32 %s302, 1
          %s699 = smul.addr %s698, 16
          %s700 = scalar_lea.vmem [#allocation13], %s699
          %s702 = ssub.s32 256, 256
          %703 = vsyncadd %s697, %s702
          %s704 = smul.addr %s38, 4
          %s705 = smul.addr %s704, 64
          %s706 = scalar_lea.hbm %s10, %s705
          %s707 = sshll.u32 %s700, 4
          %s708 = int_to_ptr.vmem [resolvable:$true] %s707
          %713 = dma.hbm_to_vmem [thread:$0]  %s706, 256, %s708, %s697, 64, 64, 4
        $region60: #{tpu_custom_call.1} parent=31 // pred_fallthru
          _
        // Predicated region
        $region61: #{tpu_custom_call.1} parent=31 // pred_check
          %p714 = pneg %p338
        $region62: #{tpu_custom_call.1} parent=31 // pred_check_branch
          %716 = sbr.rel (%p714) target = $region64
        $region63: #{tpu_custom_call.1} parent=31 // pred_region
          %p717 = scmp.lt.s32.totalorder %s38, 1
          %s718 = scalar_select %p717, %s38, 1
          %s719 = scalar_lea.vmem %s11, %s718
        $region64: #{tpu_custom_call.1} parent=31 // pred_fallthru
          _
        // Predicated region
        $region65: #{tpu_custom_call.1} parent=31 // pred_check
          %p720 = pneg %p364
        $region66: #{tpu_custom_call.1} parent=31 // pred_check_branch
          %722 = sbr.rel (%p720) target = $region68
        $region67: #{tpu_custom_call.1} parent=31 // pred_region
          %p723 = scmp.lt.s32.totalorder %s38, 1
          %s724 = scalar_select %p723, %s38, 1
          %s725 = scalar_lea.vmem %s12, %s724
        $region68: #{tpu_custom_call.1} parent=31 // pred_fallthru
          _
        // Predicated region
        $region69: #{tpu_custom_call.1} parent=31 // pred_check
          %p726 = pneg %p390
        $region70: #{tpu_custom_call.1} parent=31 // pred_check_branch
          %728 = sbr.rel (%p726) target = $region72
        $region71: #{tpu_custom_call.1} parent=31 // pred_region
          %p729 = scmp.lt.s32.totalorder %s38, 1
          %s730 = scalar_select %p729, %s38, 1
          %s731 = scalar_lea.vmem %s13, %s730
        $region72: #{tpu_custom_call.1} parent=31 // pred_fallthru
          _
        // Predicated region
        $region73: #{tpu_custom_call.1} parent=31 // pred_check
          %p732 = pneg %p416
        $region74: #{tpu_custom_call.1} parent=31 // pred_check_branch
          %734 = sbr.rel (%p732) target = $region76
        $region75: #{tpu_custom_call.1} parent=31 // pred_region
          %s735 = sand.u32 %s30, 1
          %s736 = scalar_lea.sflag [#allocation6], %s735
          %s737 = sand.u32 %s406, 1
          %s738 = smul.addr %s737, 16
          %s739 = scalar_lea.vmem [#allocation14], %s738
          %s741 = ssub.s32 256, 256
          %742 = vsyncadd %s736, %s741
          %s743 = smul.addr %s38, 4
          %s744 = smul.addr %s743, 64
          %s745 = scalar_lea.hbm %s14, %s744
          %s746 = sshll.u32 %s739, 4
          %s747 = int_to_ptr.vmem [resolvable:$true] %s746
          %752 = dma.hbm_to_vmem [thread:$0]  %s745, 256, %s747, %s736, 64, 64, 4
        $region76: #{tpu_custom_call.1} parent=31 // pred_fallthru
          _
        // Predicated region
        $region77: #{tpu_custom_call.1} parent=31 // pred_check
          %p753 = pneg %p442
        $region78: #{tpu_custom_call.1} parent=31 // pred_check_branch
          %755 = sbr.rel (%p753) target = $region80
        $region79: #{tpu_custom_call.1} parent=31 // pred_region
          %p756 = scmp.lt.s32.totalorder %s38, 1
          %s757 = scalar_select %p756, %s38, 1
          %s758 = scalar_lea.vmem %s15, %s757
        $region80: #{tpu_custom_call.1} parent=31 // pred_fallthru
          _
        // Predicated region
        $region81: #{tpu_custom_call.1} parent=31 // pred_check
          %p759 = pneg %p468
        $region82: #{tpu_custom_call.1} parent=31 // pred_check_branch
          %761 = sbr.rel (%p759) target = $region84
        $region83: #{tpu_custom_call.1} parent=31 // pred_region
          %p762 = scmp.lt.s32.totalorder %s38, 1
          %s763 = scalar_select %p762, %s38, 1
          %s764 = smul.addr %s763, 8
          %s765 = smul.addr %s764, 4
          %s766 = scalar_lea.vmem %s16, %s765
        $region84: #{tpu_custom_call.1} parent=31 // pred_fallthru
          _
        // Predicated region
        $region85: #{tpu_custom_call.1} parent=31 // pred_check
          %p767 = pneg %p494
        $region86: #{tpu_custom_call.1} parent=31 // pred_check_branch
          %769 = sbr.rel (%p767) target = $region88
        $region87: #{tpu_custom_call.1} parent=31 // pred_region
          %p770 = scmp.lt.s32.totalorder %s38, 1
          %s771 = scalar_select %p770, %s38, 1
          %s772 = scalar_lea.vmem %s17, %s771
        $region88: #{tpu_custom_call.1} parent=31 // pred_fallthru
          _
        // Predicated region
        $region89: #{tpu_custom_call.1} parent=31 // pred_check
          %p773 = pneg %p520
        $region90: #{tpu_custom_call.1} parent=31 // pred_check_branch
          %775 = sbr.rel (%p773) target = $region92
        $region91: #{tpu_custom_call.1} parent=31 // pred_region
          %p776 = scmp.lt.s32.totalorder %s38, 1
          %s777 = scalar_select %p776, %s38, 1
          %s778 = scalar_lea.vmem %s18, %s777
        $region92: #{tpu_custom_call.1} parent=31 // pred_fallthru
          _
        // Predicated region
        $region93: #{tpu_custom_call.1} parent=31 // pred_check
          %p779 = pneg %p546
        $region94: #{tpu_custom_call.1} parent=31 // pred_check_branch
          %781 = sbr.rel (%p779) target = $region96
        $region95: #{tpu_custom_call.1} parent=31 // pred_region
          %p782 = scmp.lt.s32.totalorder %s38, 1
          %s783 = scalar_select %p782, %s38, 1
          %s784 = scalar_lea.vmem %s19, %s783
        $region96: #{tpu_custom_call.1} parent=31 // pred_fallthru
          _
      $region32: #{tpu_custom_call.1} parent=5 // pred_fallthru
        _
      %p785 = scmp.le.s32.totalorder 1, %s30
      %p786 = scmp.lt.s32.totalorder %s30, 3
      %p787 = pnand %p785, %p786
      %p788 = pneg %p787
      // Predicated region
      $region97: #{tpu_custom_call.1} parent=5 // pred_check
        _
      $region98: #{tpu_custom_call.1} parent=5 // pred_check_branch
        %790 = sbr.rel (%p787) target = $region100
      $region99: #{tpu_custom_call.1} parent=5 // pred_region
        %s791 = ssub.s32 %s30, 1
        // Predicated region
        $region101: #{tpu_custom_call.1} parent=99 // pred_check
          %p792 = pneg %p68
        $region102: #{tpu_custom_call.1} parent=99 // pred_check_branch
          %794 = sbr.rel (%p792) target = $region104
        $region103: #{tpu_custom_call.1} parent=99 // pred_region
          %795 = dma.done [#allocation6], 32
        $region104: #{tpu_custom_call.1} parent=99 // pred_fallthru
          _
        // Predicated region
        $region105: #{tpu_custom_call.1} parent=99 // pred_check
          %p796 = pneg %p94
        $region106: #{tpu_custom_call.1} parent=99 // pred_check_branch
          %798 = sbr.rel (%p796) target = $region108
        $region107: #{tpu_custom_call.1} parent=99 // pred_region
          %799 = dma.done [#allocation9], 256
        $region108: #{tpu_custom_call.1} parent=99 // pred_fallthru
          _
        // Predicated region
        $region109: #{tpu_custom_call.1} parent=99 // pred_check
          %p800 = pneg %p115
        $region110: #{tpu_custom_call.1} parent=99 // pred_check_branch
          %802 = sbr.rel (%p800) target = $region112
        $region111: #{tpu_custom_call.1} parent=99 // pred_region
          %803 = dma.done [#allocation9], 16
        $region112: #{tpu_custom_call.1} parent=99 // pred_fallthru
          _
        // Predicated region
        $region113: #{tpu_custom_call.1} parent=99 // pred_check
          %p804 = pneg %p136
        $region114: #{tpu_custom_call.1} parent=99 // pred_check_branch
          %806 = sbr.rel (%p804) target = $region116
        $region115: #{tpu_custom_call.1} parent=99 // pred_region
          %807 = dma.done [#allocation12], 16
        $region116: #{tpu_custom_call.1} parent=99 // pred_fallthru
          _
        %s808 = sand.u32 %s35, 1
        %s809 = scalar_lea.sflag [#allocation6], %s808
        %s810 = sand.u32 %s305, 1
        %s811 = smul.addr %s810, 16
        %s812 = scalar_lea.vmem [#allocation13], %s811
        // Predicated region
        $region117: #{tpu_custom_call.1} parent=99 // pred_check
          %p813 = pneg %p318
        $region118: #{tpu_custom_call.1} parent=99 // pred_check_branch
          %815 = sbr.rel (%p813) target = $region120
        $region119: #{tpu_custom_call.1} parent=99 // pred_region
          %816 = dma.done %s809, 256
        $region120: #{tpu_custom_call.1} parent=99 // pred_fallthru
          _
        %s817 = sand.u32 %s35, 1
        %s818 = scalar_lea.sflag [#allocation6], %s817
        %s819 = sand.u32 %s409, 1
        %s820 = smul.addr %s819, 16
        %s821 = scalar_lea.vmem [#allocation14], %s820
        // Predicated region
        $region121: #{tpu_custom_call.1} parent=99 // pred_check
          %p822 = pneg %p422
        $region122: #{tpu_custom_call.1} parent=99 // pred_check_branch
          %824 = sbr.rel (%p822) target = $region124
        $region123: #{tpu_custom_call.1} parent=99 // pred_region
          %825 = dma.done %s818, 256
        $region124: #{tpu_custom_call.1} parent=99 // pred_fallthru
          _
        %p826 = pneg %p68
        %p827 = pneg %p65
        %p828 = pneg %p94
        %p829 = pneg %p91
        %p830 = pneg %p115
        %p831 = pneg %p112
        %p832 = pneg %p136
        %p833 = pneg %p133
        %p834 = scmp.lt.s32.totalorder %s40, 1
        %s835 = scalar_select %p834, %s40, 1
        %s836 = smul.addr %s835, 4
        %s837 = smul.addr %s836, 4
        %s838 = scalar_lea.vmem %s4, %s837
        %p839 = pneg %p162
        %p840 = pneg %p159
        %p841 = scmp.lt.s32.totalorder %s40, 1
        %s842 = scalar_select %p841, %s40, 1
        %s843 = scalar_lea.vmem %s5, %s842
        %p844 = pneg %p188
        %p845 = pneg %p185
        %p846 = scmp.lt.s32.totalorder %s40, 1
        %s847 = scalar_select %p846, %s40, 1
        %s848 = smul.addr %s847, 4
        %s849 = smul.addr %s848, 4
        %s850 = scalar_lea.vmem %s6, %s849
        %p851 = pneg %p214
        %p852 = pneg %p211
        %p853 = scmp.lt.s32.totalorder %s40, 1
        %s854 = scalar_select %p853, %s40, 1
        %s855 = scalar_lea.vmem %s7, %s854
        %p856 = pneg %p240
        %p857 = pneg %p237
        %p858 = scmp.lt.s32.totalorder %s40, 1
        %s859 = scalar_select %p858, %s40, 1
        %s860 = smul.addr %s859, 4
        %s861 = smul.addr %s860, 4
        %s862 = scalar_lea.vmem %s8, %s861
        %p863 = pneg %p266
        %p864 = pneg %p263
        %p865 = scmp.lt.s32.totalorder %s40, 1
        %s866 = scalar_select %p865, %s40, 1
        %s867 = scalar_lea.vmem %s9, %s866
        %p868 = pneg %p292
        %p869 = pneg %p289
        %s870 = sand.u32 %s35, 1
        %s871 = scalar_lea.sflag [#allocation6], %s870
        %s872 = sand.u32 %s305, 1
        %s873 = smul.addr %s872, 16
        %s874 = scalar_lea.vmem [#allocation13], %s873
        %p875 = pneg %p318
        %p876 = pneg %p315
        %p877 = scmp.lt.s32.totalorder %s40, 1
        %s878 = scalar_select %p877, %s40, 1
        %s879 = scalar_lea.vmem %s11, %s878
        %p880 = pneg %p344
        %p881 = pneg %p341
        %p882 = scmp.lt.s32.totalorder %s40, 1
        %s883 = scalar_select %p882, %s40, 1
        %s884 = scalar_lea.vmem %s12, %s883
        %p885 = pneg %p370
        %p886 = pneg %p367
        %p887 = scmp.lt.s32.totalorder %s40, 1
        %s888 = scalar_select %p887, %s40, 1
        %s889 = scalar_lea.vmem %s13, %s888
        %p890 = pneg %p396
        %p891 = pneg %p393
        %s892 = sand.u32 %s35, 1
        %s893 = scalar_lea.sflag [#allocation6], %s892
        %s894 = sand.u32 %s409, 1
        %s895 = smul.addr %s894, 16
        %s896 = scalar_lea.vmem [#allocation14], %s895
        %p897 = pneg %p422
        %p898 = pneg %p419
        %p899 = scmp.lt.s32.totalorder %s40, 1
        %s900 = scalar_select %p899, %s40, 1
        %s901 = scalar_lea.vmem %s15, %s900
        %p902 = pneg %p448
        %p903 = pneg %p445
        %p904 = scmp.lt.s32.totalorder %s40, 1
        %s905 = scalar_select %p904, %s40, 1
        %s906 = smul.addr %s905, 8
        %s907 = smul.addr %s906, 4
        %s908 = scalar_lea.vmem %s16, %s907
        %p909 = pneg %p474
        %p910 = pneg %p471
        %p911 = scmp.lt.s32.totalorder %s40, 1
        %s912 = scalar_select %p911, %s40, 1
        %s913 = scalar_lea.vmem %s17, %s912
        %p914 = pneg %p500
        %p915 = pneg %p497
        %p916 = scmp.lt.s32.totalorder %s40, 1
        %s917 = scalar_select %p916, %s40, 1
        %s918 = scalar_lea.vmem %s18, %s917
        %p919 = pneg %p526
        %p920 = pneg %p523
        %p921 = scmp.lt.s32.totalorder %s40, 1
        %s922 = scalar_select %p921, %s40, 1
        %s923 = scalar_lea.vmem %s19, %s922
        %p924 = pneg %p552
        %p925 = pneg %p549
        %p926 = pneg %p578
        %p927 = pneg %p575
        %s928 = smul.u32 2, %s39
        %s929 = smul.u32 2, %s39
        %p930 = scmp.lt.s32.totalorder %s40, 1
        %s931 = scalar_select %p930, %s40, 1
        %s932 = smul.addr %s931, 4
        %s933 = smul.addr %s932, 4
        %s934 = scalar_lea.vmem %s4, %s933
        %p935 = scmp.lt.s32.totalorder %s40, 1
        %s936 = scalar_select %p935, %s40, 1
        %s937 = scalar_lea.vmem %s5, %s936
        %p938 = scmp.lt.s32.totalorder %s40, 1
        %s939 = scalar_select %p938, %s40, 1
        %s940 = smul.addr %s939, 4
        %s941 = smul.addr %s940, 4
        %s942 = scalar_lea.vmem %s6, %s941
        %p943 = scmp.lt.s32.totalorder %s40, 1
        %s944 = scalar_select %p943, %s40, 1
        %s945 = scalar_lea.vmem %s7, %s944
        %p946 = scmp.lt.s32.totalorder %s40, 1
        %s947 = scalar_select %p946, %s40, 1
        %s948 = smul.addr %s947, 4
        %s949 = smul.addr %s948, 4
        %s950 = scalar_lea.vmem %s8, %s949
        %p951 = scmp.lt.s32.totalorder %s40, 1
        %s952 = scalar_select %p951, %s40, 1
        %s953 = scalar_lea.vmem %s9, %s952
        %p954 = scmp.lt.s32.totalorder %s40, 1
        %s955 = scalar_select %p954, %s40, 1
        %s956 = scalar_lea.vmem %s11, %s955
        %p957 = scmp.lt.s32.totalorder %s40, 1
        %s958 = scalar_select %p957, %s40, 1
        %s959 = scalar_lea.vmem %s12, %s958
        %p960 = scmp.lt.s32.totalorder %s40, 1
        %s961 = scalar_select %p960, %s40, 1
        %s962 = scalar_lea.vmem %s13, %s961
        %p963 = scmp.lt.s32.totalorder %s40, 1
        %s964 = scalar_select %p963, %s40, 1
        %s965 = scalar_lea.vmem %s15, %s964
        %p966 = scmp.lt.s32.totalorder %s40, 1
        %s967 = scalar_select %p966, %s40, 1
        %s968 = smul.addr %s967, 8
        %s969 = smul.addr %s968, 4
        %s970 = scalar_lea.vmem %s16, %s969
        %p971 = scmp.lt.s32.totalorder %s40, 1
        %s972 = scalar_select %p971, %s40, 1
        %s973 = scalar_lea.vmem %s17, %s972
        %p974 = scmp.lt.s32.totalorder %s40, 1
        %s975 = scalar_select %p974, %s40, 1
        %s976 = scalar_lea.vmem %s18, %s975
        %p977 = scmp.lt.s32.totalorder %s40, 1
        %s978 = scalar_select %p977, %s40, 1
        %s979 = scalar_lea.vmem %s19, %s978
        %s980 = smul.u32 2, %s39
        %p982 = scmp.eq.s32.totalorder %s40, 0
        // Predicated region
        $region125: #{tpu_custom_call.1} parent=99 // pred_check
          %p983 = pneg %p982
        $region126: #{tpu_custom_call.1} parent=99 // pred_check_branch
          %985 = sbr.rel (%p983) target = $region128
        $region127: #{tpu_custom_call.1} parent=99 // pred_region
          %v986 = vld [vmem:[#allocation8] sm:$0xff]
          %v987 = vld [vmem:[#allocation8 + $0x8] sm:$0xff]
          %vm988 = vcmask 261120
          %989 = vst.msk [vmem:[#allocation2] sm:$0xff] %vm988, %v986
          %990 = vst.msk [vmem:[#allocation2 + $0x8] sm:$0xff] %vm988, %v987
        $region128: #{tpu_custom_call.1} parent=99 // pred_fallthru
          _
        %p991 = scmp.eq.s32.totalorder %s39, 0
        %p992 = pnand %p982, %p991
        %p993 = pneg %p992
        // Predicated region
        $region129: #{tpu_custom_call.1} parent=99 // pred_check
          _
        $region130: #{tpu_custom_call.1} parent=99 // pred_check_branch
          %995 = sbr.rel (%p992) target = $region132
        $region131: #{tpu_custom_call.1} parent=99 // pred_region
          %v996 = vlaneseq
          %v997 = vshrl.u32 %v996, 7
          %v998 = vlaneseq
          %v999 = vand.u32 %v998, 127
          %vm1000 = vcmp.ge.s32.totalorder %v997, %v999
          %v1001 = vsel %vm1000, 0.0, -1e+30
          %vm1002 = vcmask 64512
          %1003 = vst.msk [vmem:[#allocation3] sm:$0xff] %vm1002, %v1001
        $region132: #{tpu_custom_call.1} parent=99 // pred_fallthru
          _
        %v1004 = vld [vmem:[%s934] sm:$0xf]
        %v1005 = vld [vmem:[%s934 + $0x4] sm:$0xf]
        %v1006 = vld [vmem:[%s934 + $0x8] sm:$0xf]
        %v1007 = vld [vmem:[%s934 + $0xc] sm:$0xf]
        %v1008 = vld [vmem:[%s942] sm:$0xf]
        %v1009 = vld [vmem:[%s942 + $0x4] sm:$0xf]
        %v1010 = vld [vmem:[%s942 + $0x8] sm:$0xf]
        %v1011 = vld [vmem:[%s942 + $0xc] sm:$0xf]
        %v1012 = vld [vmem:[%s950] sm:$0xf]
        %v1013 = vld [vmem:[%s950 + $0x4] sm:$0xf]
        %v1014 = vld [vmem:[%s950 + $0x8] sm:$0xf]
        %v1015 = vld [vmem:[%s950 + $0xc] sm:$0xf]
        %v1016 = vld [vmem:[%s812] sm:$0xf]
        %v1017 = vld [vmem:[%s812 + $0x4] sm:$0xf]
        %v1018 = vld [vmem:[%s812 + $0x8] sm:$0xf]
        %v1019 = vld [vmem:[%s812 + $0xc] sm:$0xf]
        %v1020 = vld [vmem:[%s937] sm:$0x1]
        %v1021 = vld [vmem:[%s945] sm:$0x1]
        %v1022 = vld [vmem:[%s953] sm:$0x1]
        %v1023 = vld [vmem:[%s956] sm:$0x1]
        %v1024 = vld [vmem:[%s959] sm:$0x1]
        %v1025 = vld [vmem:[%s962] sm:$0x1]
        %v1026 = vld [vmem:[%s976] sm:$0x1]
        %v1027 = vld [vmem:[%s979] sm:$0x1]
        %v1028 = vld [vmem:[%s821] sm:$0xf]
        %v1029 = vld [vmem:[%s821 + $0x4] sm:$0xf]
        %v1030 = vld [vmem:[%s821 + $0x8] sm:$0xf]
        %v1031 = vld [vmem:[%s821 + $0xc] sm:$0xf]
        %v1032 = vld [vmem:[%s965] sm:$0x1]
        %v1033 = vld [vmem:[%s970] sm:$0xf]
        %v1034 = vld [vmem:[%s970 + $0x4] sm:$0xf]
        %v1035 = vld [vmem:[%s970 + $0x8] sm:$0xf]
        %v1036 = vld [vmem:[%s970 + $0xc] sm:$0xf]
        %v1037 = vld [vmem:[%s970 + $0x10] sm:$0xf]
        %v1038 = vld [vmem:[%s970 + $0x14] sm:$0xf]
        %v1039 = vld [vmem:[%s970 + $0x18] sm:$0xf]
        %v1040 = vld [vmem:[%s970 + $0x1c] sm:$0xf]
        %v1041 = vld [vmem:[%s973] sm:$0x1]
        %p1042 = scmp.eq.s32.totalorder %s40, 1
        %v1043 = vld [vmem:[#allocation2] sm:$0xff]
        %v1044 = vld [vmem:[#allocation5] sm:$0x1]
        %v1045 = vpack.c.bf16 %v1043, %v1043
        %v1047 = vlaneseq
        %v1048 = vshrl.u32 %v1047, 7
        %v1049 = vsub.s32 0, %v1048
        %v1050 = vrot.slane %v1020, %v1049
        %v1056 = vunpack.c.l.b16 %v1004
        %v1057 = vunpack.c.l.b16 %v1005
        %v1058 = vunpack.c.l.b16 %v1006
        %v1059 = vunpack.c.l.b16 %v1007
        %v1060 = vpack.c.b16 %v1057, %v1056
        %v1061 = vpack.c.b16 %v1059, %v1058
        %vm1064 = vcmask 261120
        %v1066 = vsel %vm1064, %v1045, 0
        %1068 = vmatprep.subr.bf16.mxu0 0
        %1069 = vmatpush1.bf16.msra.mxu0 %v1060
        %1070 = vmatprep.subr.bf16.mxu0 0
        %1071 = vmatpush1.bf16.msra.mxu0 %v1061
        %1072 = vmatprep.subr.bf16.mxu0 0
        %1073 = vmatpush1.bf16.msra.mxu0 0
        %1074 = vmatprep.subr.bf16.mxu0 0
        %1075 = vmatpush1.bf16.msra.mxu0 0
        %1076 = vmatprep.subr.bf16.mxu0 0
        %1077 = vmatpush1.bf16.msra.mxu0 0
        %1078 = vmatprep.subr.bf16.mxu0 0
        %1079 = vmatpush1.bf16.msra.mxu0 0
        %1080 = vmatprep.subr.bf16.mxu0 0
        %1081 = vmatpush1.bf16.msra.mxu0 0
        %1082 = vmatprep.subr.bf16.mxu0 0
        %1083 = vmatpush1.bf16.msra.mxu0 0
        %1084 = vmatprep.subr.bf16.mxu0 0
        %1085 = vmatpush1.bf16.msra.mxu0 0
        %1086 = vmatprep.subr.bf16.mxu0 0
        %1087 = vmatpush1.bf16.msra.mxu0 0
        %1088 = vmatprep.subr.bf16.mxu0 0
        %1089 = vmatpush1.bf16.msra.mxu0 0
        %1090 = vmatprep.subr.bf16.mxu0 0
        %1091 = vmatpush1.bf16.msra.mxu0 0
        %1092 = vmatprep.subr.bf16.mxu0 0
        %1093 = vmatpush1.bf16.msra.mxu0 0
        %1094 = vmatprep.subr.bf16.mxu0 0
        %1095 = vmatpush1.bf16.msra.mxu0 0
        %1096 = vmatprep.subr.bf16.mxu0 0
        %1097 = vmatpush1.bf16.msra.mxu0 0
        %1098 = vmatprep.subr.bf16.mxu0 0
        %1099 = vmatpush1.bf16.msra.mxu0 0
        %1100 = vmatprep.mubr.bf16.mxu0 0
        %1101 = vmatmul.mubr.bf16.gmra.mrb[0].mxu0 %v1066
        %v1102 = vpop.f32.mrb[0].mxu0
        %v1103 = vadd.f32 %v1050, %v1102
        %v1104 = vpop.f32.mrb[0].mxu0
        %v1105 = vpop.f32.mrb[0].mxu0
        %v1106 = vpop.f32.mrb[0].mxu0
        %1107 = vdwg.mxu0
        %v1108 = vmul.f32 %v1103, 0.35355338
        %v1110 = vlaneseq
        %v1111 = vshrl.u32 %v1110, 7
        %v1112 = vsub.s32 0, %v1111
        %v1113 = vrot.slane %v1021, %v1112
        %v1119 = vunpack.c.l.b16 %v1008
        %v1120 = vunpack.c.l.b16 %v1009
        %v1121 = vunpack.c.l.b16 %v1010
        %v1122 = vunpack.c.l.b16 %v1011
        %v1123 = vpack.c.b16 %v1120, %v1119
        %v1124 = vpack.c.b16 %v1122, %v1121
        %1127 = vmatprep.subr.bf16.mxu0 0
        %1128 = vmatpush1.bf16.msra.mxu0 %v1123
        %1129 = vmatprep.subr.bf16.mxu0 0
        %1130 = vmatpush1.bf16.msra.mxu0 %v1124
        %1131 = vmatprep.subr.bf16.mxu0 0
        %1132 = vmatpush1.bf16.msra.mxu0 0
        %1133 = vmatprep.subr.bf16.mxu0 0
        %1134 = vmatpush1.bf16.msra.mxu0 0
        %1135 = vmatprep.subr.bf16.mxu0 0
        %1136 = vmatpush1.bf16.msra.mxu0 0
        %1137 = vmatprep.subr.bf16.mxu0 0
        %1138 = vmatpush1.bf16.msra.mxu0 0
        %1139 = vmatprep.subr.bf16.mxu0 0
        %1140 = vmatpush1.bf16.msra.mxu0 0
        %1141 = vmatprep.subr.bf16.mxu0 0
        %1142 = vmatpush1.bf16.msra.mxu0 0
        %1143 = vmatprep.subr.bf16.mxu0 0
        %1144 = vmatpush1.bf16.msra.mxu0 0
        %1145 = vmatprep.subr.bf16.mxu0 0
        %1146 = vmatpush1.bf16.msra.mxu0 0
        %1147 = vmatprep.subr.bf16.mxu0 0
        %1148 = vmatpush1.bf16.msra.mxu0 0
        %1149 = vmatprep.subr.bf16.mxu0 0
        %1150 = vmatpush1.bf16.msra.mxu0 0
        %1151 = vmatprep.subr.bf16.mxu0 0
        %1152 = vmatpush1.bf16.msra.mxu0 0
        %1153 = vmatprep.subr.bf16.mxu0 0
        %1154 = vmatpush1.bf16.msra.mxu0 0
        %1155 = vmatprep.subr.bf16.mxu0 0
        %1156 = vmatpush1.bf16.msra.mxu0 0
        %1157 = vmatprep.subr.bf16.mxu0 0
        %1158 = vmatpush1.bf16.msra.mxu0 0
        %1159 = vmatprep.mubr.bf16.mxu0 0
        %1160 = vmatmul.mubr.bf16.gmra.mrb[0].mxu0 %v1066
        %v1161 = vpop.f32.mrb[0].mxu0
        %v1162 = vadd.f32 %v1113, %v1161
        %v1163 = vpop.f32.mrb[0].mxu0
        %v1164 = vpop.f32.mrb[0].mxu0
        %v1165 = vpop.f32.mrb[0].mxu0
        %1166 = vdwg.mxu0
        %v1168 = vlaneseq
        %v1169 = vshrl.u32 %v1168, 7
        %v1170 = vsub.s32 0, %v1169
        %v1171 = vrot.slane %v1022, %v1170
        %v1177 = vunpack.c.l.b16 %v1012
        %v1178 = vunpack.c.l.b16 %v1013
        %v1179 = vunpack.c.l.b16 %v1014
        %v1180 = vunpack.c.l.b16 %v1015
        %v1181 = vpack.c.b16 %v1178, %v1177
        %v1182 = vpack.c.b16 %v1180, %v1179
        %1185 = vmatprep.subr.bf16.mxu0 0
        %1186 = vmatpush1.bf16.msra.mxu0 %v1181
        %1187 = vmatprep.subr.bf16.mxu0 0
        %1188 = vmatpush1.bf16.msra.mxu0 %v1182
        %1189 = vmatprep.subr.bf16.mxu0 0
        %1190 = vmatpush1.bf16.msra.mxu0 0
        %1191 = vmatprep.subr.bf16.mxu0 0
        %1192 = vmatpush1.bf16.msra.mxu0 0
        %1193 = vmatprep.subr.bf16.mxu0 0
        %1194 = vmatpush1.bf16.msra.mxu0 0
        %1195 = vmatprep.subr.bf16.mxu0 0
        %1196 = vmatpush1.bf16.msra.mxu0 0
        %1197 = vmatprep.subr.bf16.mxu0 0
        %1198 = vmatpush1.bf16.msra.mxu0 0
        %1199 = vmatprep.subr.bf16.mxu0 0
        %1200 = vmatpush1.bf16.msra.mxu0 0
        %1201 = vmatprep.subr.bf16.mxu0 0
        %1202 = vmatpush1.bf16.msra.mxu0 0
        %1203 = vmatprep.subr.bf16.mxu0 0
        %1204 = vmatpush1.bf16.msra.mxu0 0
        %1205 = vmatprep.subr.bf16.mxu0 0
        %1206 = vmatpush1.bf16.msra.mxu0 0
        %1207 = vmatprep.subr.bf16.mxu0 0
        %1208 = vmatpush1.bf16.msra.mxu0 0
        %1209 = vmatprep.subr.bf16.mxu0 0
        %1210 = vmatpush1.bf16.msra.mxu0 0
        %1211 = vmatprep.subr.bf16.mxu0 0
        %1212 = vmatpush1.bf16.msra.mxu0 0
        %1213 = vmatprep.subr.bf16.mxu0 0
        %1214 = vmatpush1.bf16.msra.mxu0 0
        %1215 = vmatprep.subr.bf16.mxu0 0
        %1216 = vmatpush1.bf16.msra.mxu0 0
        %1217 = vmatprep.mubr.bf16.mxu0 0
        %1218 = vmatmul.mubr.bf16.gmra.mrb[0].mxu0 %v1066
        %v1219 = vpop.f32.mrb[0].mxu0
        %v1220 = vadd.f32 %v1171, %v1219
        %v1221 = vpop.f32.mrb[0].mxu0
        %v1222 = vpop.f32.mrb[0].mxu0
        %v1223 = vpop.f32.mrb[0].mxu0
        %1224 = vdwg.mxu0
        %1226 = vrot.lane.b32.xlu0 %v1108, 120
        %v1227 = vpop.permute.xlu0 %1226
        %1229 = vrot.lane.b32.xlu0 %v1108, 112
        %v1230 = vpop.permute.xlu0 %1229
        %1232 = vrot.lane.b32.xlu0 %v1108, 104
        %v1233 = vpop.permute.xlu0 %1232
        %v1235 = vcombine.low %v1108, %v1230
        %v1236 = vcombine.high %v1108, %v1230
        %v1238 = vunpack.c.l.s4 1983009808
        %v1239 = vunpack.c.0.s8 %v1238
        %v1240 = vlaneseq
        %v1241 = vshrl.u32 %v1240, 7
        %v1242 = vsub.s32 %v1239, %v1241
        %v1243 = vrot.slane %v1235, %v1242
        %v1245 = vunpack.c.l.s4 1983009808
        %v1246 = vunpack.c.0.s8 %v1245
        %v1247 = vlaneseq
        %v1248 = vshrl.u32 %v1247, 7
        %v1249 = vsub.s32 %v1246, %v1248
        %v1250 = vrot.slane %v1236, %v1249
        %v1251 = vcombine.low %v1227, %v1233
        %v1252 = vcombine.high %v1227, %v1233
        %v1254 = vunpack.c.l.s4 1983009808
        %v1255 = vunpack.c.0.s8 %v1254
        %v1256 = vlaneseq
        %v1257 = vshrl.u32 %v1256, 7
        %v1258 = vsub.s32 %v1255, %v1257
        %v1259 = vrot.slane %v1251, %v1258
        %v1261 = vunpack.c.l.s4 1983009808
        %v1262 = vunpack.c.0.s8 %v1261
        %v1263 = vlaneseq
        %v1264 = vshrl.u32 %v1263, 7
        %v1265 = vsub.s32 %v1262, %v1264
        %v1266 = vrot.slane %v1252, %v1265
        %v1267 = vcombine.low %v1243, %v1259
        %v1268 = vcombine.high %v1243, %v1259
        %v1270 = vunpack.c.l.s4 1934713408
        %v1271 = vunpack.c.0.s8 %v1270
        %v1272 = vlaneseq
        %v1273 = vshrl.u32 %v1272, 7
        %v1274 = vsub.s32 %v1271, %v1273
        %v1275 = vrot.slane %v1267, %v1274
        %v1277 = vunpack.c.l.s4 1934713408
        %v1278 = vunpack.c.0.s8 %v1277
        %v1279 = vlaneseq
        %v1280 = vshrl.u32 %v1279, 7
        %v1281 = vsub.s32 %v1278, %v1280
        %v1282 = vrot.slane %v1268, %v1281
        %v1283 = vcombine.low %v1250, %v1266
        %v1284 = vcombine.high %v1250, %v1266
        %v1286 = vunpack.c.l.s4 1934713408
        %v1287 = vunpack.c.0.s8 %v1286
        %v1288 = vlaneseq
        %v1289 = vshrl.u32 %v1288, 7
        %v1290 = vsub.s32 %v1287, %v1289
        %v1291 = vrot.slane %v1283, %v1290
        %v1293 = vunpack.c.l.s4 1934713408
        %v1294 = vunpack.c.0.s8 %v1293
        %v1295 = vlaneseq
        %v1296 = vshrl.u32 %v1295, 7
        %v1297 = vsub.s32 %v1294, %v1296
        %v1298 = vrot.slane %v1284, %v1297
        %v1299 = vcombine.high %v1275, 0.0
        %v1300 = vcombine.high %v1282, 0.0
        %v1301 = vcombine.high %v1291, 0.0
        %v1302 = vcombine.high %v1298, 0.0
        %v1303 = vcombine.low %v1275, %v1282
        %v1305 = vunpack.c.l.s4 1983009808
        %v1306 = vunpack.c.0.s8 %v1305
        %v1307 = vlaneseq
        %v1308 = vshrl.u32 %v1307, 7
        %v1309 = vsub.s32 %v1306, %v1308
        %v1310 = vrot.slane %v1303, %v1309
        %v1311 = vcombine.low %v1299, %v1300
        %v1313 = vunpack.c.l.s4 1983009808
        %v1314 = vunpack.c.0.s8 %v1313
        %v1315 = vlaneseq
        %v1316 = vshrl.u32 %v1315, 7
        %v1317 = vsub.s32 %v1314, %v1316
        %v1318 = vrot.slane %v1311, %v1317
        %v1319 = vcombine.low %v1291, %v1298
        %v1321 = vunpack.c.l.s4 1983009808
        %v1322 = vunpack.c.0.s8 %v1321
        %v1323 = vlaneseq
        %v1324 = vshrl.u32 %v1323, 7
        %v1325 = vsub.s32 %v1322, %v1324
        %v1326 = vrot.slane %v1319, %v1325
        %v1327 = vcombine.low %v1301, %v1302
        %v1329 = vunpack.c.l.s4 1983009808
        %v1330 = vunpack.c.0.s8 %v1329
        %v1331 = vlaneseq
        %v1332 = vshrl.u32 %v1331, 7
        %v1333 = vsub.s32 %v1330, %v1332
        %v1334 = vrot.slane %v1327, %v1333
        %v1335 = vcombine.low %v1310, %v1318
        %v1336 = vcombine.high %v1310, %v1318
        %v1338 = vunpack.c.l.s4 1934713408
        %v1339 = vunpack.c.0.s8 %v1338
        %v1340 = vlaneseq
        %v1341 = vshrl.u32 %v1340, 7
        %v1342 = vsub.s32 %v1339, %v1341
        %v1343 = vrot.slane %v1335, %v1342
        %v1345 = vunpack.c.l.s4 1934713408
        %v1346 = vunpack.c.0.s8 %v1345
        %v1347 = vlaneseq
        %v1348 = vshrl.u32 %v1347, 7
        %v1349 = vsub.s32 %v1346, %v1348
        %v1350 = vrot.slane %v1336, %v1349
        %v1351 = vcombine.low %v1326, %v1334
        %v1352 = vcombine.high %v1326, %v1334
        %v1354 = vunpack.c.l.s4 1934713408
        %v1355 = vunpack.c.0.s8 %v1354
        %v1356 = vlaneseq
        %v1357 = vshrl.u32 %v1356, 7
        %v1358 = vsub.s32 %v1355, %v1357
        %v1359 = vrot.slane %v1351, %v1358
        %v1361 = vunpack.c.l.s4 1934713408
        %v1362 = vunpack.c.0.s8 %v1361
        %v1363 = vlaneseq
        %v1364 = vshrl.u32 %v1363, 7
        %v1365 = vsub.s32 %v1362, %v1364
        %v1366 = vrot.slane %v1352, %v1365
        %v1367 = vcombine.low %v1343, %v1359
        %v1368 = vcombine.high %v1343, %v1359
        %v1369 = vcombine.low %v1350, %v1366
        %v1370 = vcombine.high %v1350, %v1366
        %v1371 = vpack.c.bf16 %v1367, %v1367
        %v1372 = vpack.c.bf16 %v1368, %v1368
        %v1373 = vpack.c.bf16 %v1369, %v1369
        %v1374 = vpack.c.bf16 %v1370, %v1370
        %1376 = vrot.lane.b32.xlu0 %v1162, 120
        %v1377 = vpop.permute.xlu0 %1376
        %1379 = vrot.lane.b32.xlu0 %v1162, 112
        %v1380 = vpop.permute.xlu0 %1379
        %1382 = vrot.lane.b32.xlu0 %v1162, 104
        %v1383 = vpop.permute.xlu0 %1382
        %v1385 = vcombine.low %v1162, %v1380
        %v1386 = vcombine.high %v1162, %v1380
        %v1388 = vunpack.c.l.s4 1983009808
        %v1389 = vunpack.c.0.s8 %v1388
        %v1390 = vlaneseq
        %v1391 = vshrl.u32 %v1390, 7
        %v1392 = vsub.s32 %v1389, %v1391
        %v1393 = vrot.slane %v1385, %v1392
        %v1395 = vunpack.c.l.s4 1983009808
        %v1396 = vunpack.c.0.s8 %v1395
        %v1397 = vlaneseq
        %v1398 = vshrl.u32 %v1397, 7
        %v1399 = vsub.s32 %v1396, %v1398
        %v1400 = vrot.slane %v1386, %v1399
        %v1401 = vcombine.low %v1377, %v1383
        %v1402 = vcombine.high %v1377, %v1383
        %v1404 = vunpack.c.l.s4 1983009808
        %v1405 = vunpack.c.0.s8 %v1404
        %v1406 = vlaneseq
        %v1407 = vshrl.u32 %v1406, 7
        %v1408 = vsub.s32 %v1405, %v1407
        %v1409 = vrot.slane %v1401, %v1408
        %v1411 = vunpack.c.l.s4 1983009808
        %v1412 = vunpack.c.0.s8 %v1411
        %v1413 = vlaneseq
        %v1414 = vshrl.u32 %v1413, 7
        %v1415 = vsub.s32 %v1412, %v1414
        %v1416 = vrot.slane %v1402, %v1415
        %v1417 = vcombine.low %v1393, %v1409
        %v1418 = vcombine.high %v1393, %v1409
        %v1420 = vunpack.c.l.s4 1934713408
        %v1421 = vunpack.c.0.s8 %v1420
        %v1422 = vlaneseq
        %v1423 = vshrl.u32 %v1422, 7
        %v1424 = vsub.s32 %v1421, %v1423
        %v1425 = vrot.slane %v1417, %v1424
        %v1427 = vunpack.c.l.s4 1934713408
        %v1428 = vunpack.c.0.s8 %v1427
        %v1429 = vlaneseq
        %v1430 = vshrl.u32 %v1429, 7
        %v1431 = vsub.s32 %v1428, %v1430
        %v1432 = vrot.slane %v1418, %v1431
        %v1433 = vcombine.low %v1400, %v1416
        %v1434 = vcombine.high %v1400, %v1416
        %v1436 = vunpack.c.l.s4 1934713408
        %v1437 = vunpack.c.0.s8 %v1436
        %v1438 = vlaneseq
        %v1439 = vshrl.u32 %v1438, 7
        %v1440 = vsub.s32 %v1437, %v1439
        %v1441 = vrot.slane %v1433, %v1440
        %v1443 = vunpack.c.l.s4 1934713408
        %v1444 = vunpack.c.0.s8 %v1443
        %v1445 = vlaneseq
        %v1446 = vshrl.u32 %v1445, 7
        %v1447 = vsub.s32 %v1444, %v1446
        %v1448 = vrot.slane %v1434, %v1447
        %v1449 = vcombine.high %v1425, 0.0
        %v1450 = vcombine.high %v1432, 0.0
        %v1451 = vcombine.high %v1441, 0.0
        %v1452 = vcombine.high %v1448, 0.0
        %v1453 = vcombine.low %v1425, %v1432
        %v1455 = vunpack.c.l.s4 1983009808
        %v1456 = vunpack.c.0.s8 %v1455
        %v1457 = vlaneseq
        %v1458 = vshrl.u32 %v1457, 7
        %v1459 = vsub.s32 %v1456, %v1458
        %v1460 = vrot.slane %v1453, %v1459
        %v1461 = vcombine.low %v1449, %v1450
        %v1463 = vunpack.c.l.s4 1983009808
        %v1464 = vunpack.c.0.s8 %v1463
        %v1465 = vlaneseq
        %v1466 = vshrl.u32 %v1465, 7
        %v1467 = vsub.s32 %v1464, %v1466
        %v1468 = vrot.slane %v1461, %v1467
        %v1469 = vcombine.low %v1441, %v1448
        %v1471 = vunpack.c.l.s4 1983009808
        %v1472 = vunpack.c.0.s8 %v1471
        %v1473 = vlaneseq
        %v1474 = vshrl.u32 %v1473, 7
        %v1475 = vsub.s32 %v1472, %v1474
        %v1476 = vrot.slane %v1469, %v1475
        %v1477 = vcombine.low %v1451, %v1452
        %v1479 = vunpack.c.l.s4 1983009808
        %v1480 = vunpack.c.0.s8 %v1479
        %v1481 = vlaneseq
        %v1482 = vshrl.u32 %v1481, 7
        %v1483 = vsub.s32 %v1480, %v1482
        %v1484 = vrot.slane %v1477, %v1483
        %v1485 = vcombine.low %v1460, %v1468
        %v1486 = vcombine.high %v1460, %v1468
        %v1488 = vunpack.c.l.s4 1934713408
        %v1489 = vunpack.c.0.s8 %v1488
        %v1490 = vlaneseq
        %v1491 = vshrl.u32 %v1490, 7
        %v1492 = vsub.s32 %v1489, %v1491
        %v1493 = vrot.slane %v1485, %v1492
        %v1495 = vunpack.c.l.s4 1934713408
        %v1496 = vunpack.c.0.s8 %v1495
        %v1497 = vlaneseq
        %v1498 = vshrl.u32 %v1497, 7
        %v1499 = vsub.s32 %v1496, %v1498
        %v1500 = vrot.slane %v1486, %v1499
        %v1501 = vcombine.low %v1476, %v1484
        %v1502 = vcombine.high %v1476, %v1484
        %v1504 = vunpack.c.l.s4 1934713408
        %v1505 = vunpack.c.0.s8 %v1504
        %v1506 = vlaneseq
        %v1507 = vshrl.u32 %v1506, 7
        %v1508 = vsub.s32 %v1505, %v1507
        %v1509 = vrot.slane %v1501, %v1508
        %v1511 = vunpack.c.l.s4 1934713408
        %v1512 = vunpack.c.0.s8 %v1511
        %v1513 = vlaneseq
        %v1514 = vshrl.u32 %v1513, 7
        %v1515 = vsub.s32 %v1512, %v1514
        %v1516 = vrot.slane %v1502, %v1515
        %v1517 = vcombine.low %v1493, %v1509
        %v1518 = vcombine.high %v1493, %v1509
        %v1519 = vcombine.low %v1500, %v1516
        %v1520 = vcombine.high %v1500, %v1516
        %v1521 = vpack.c.bf16 %v1517, %v1517
        %v1522 = vpack.c.bf16 %v1518, %v1518
        %v1523 = vpack.c.bf16 %v1519, %v1519
        %v1524 = vpack.c.bf16 %v1520, %v1520
        %1526 = vrot.lane.b32.xlu0 %v1220, 120
        %v1527 = vpop.permute.xlu0 %1526
        %1529 = vrot.lane.b32.xlu0 %v1220, 112
        %v1530 = vpop.permute.xlu0 %1529
        %1532 = vrot.lane.b32.xlu0 %v1220, 104
        %v1533 = vpop.permute.xlu0 %1532
        %v1535 = vcombine.low %v1220, %v1530
        %v1536 = vcombine.high %v1220, %v1530
        %v1538 = vunpack.c.l.s4 1983009808
        %v1539 = vunpack.c.0.s8 %v1538
        %v1540 = vlaneseq
        %v1541 = vshrl.u32 %v1540, 7
        %v1542 = vsub.s32 %v1539, %v1541
        %v1543 = vrot.slane %v1535, %v1542
        %v1545 = vunpack.c.l.s4 1983009808
        %v1546 = vunpack.c.0.s8 %v1545
        %v1547 = vlaneseq
        %v1548 = vshrl.u32 %v1547, 7
        %v1549 = vsub.s32 %v1546, %v1548
        %v1550 = vrot.slane %v1536, %v1549
        %v1551 = vcombine.low %v1527, %v1533
        %v1552 = vcombine.high %v1527, %v1533
        %v1554 = vunpack.c.l.s4 1983009808
        %v1555 = vunpack.c.0.s8 %v1554
        %v1556 = vlaneseq
        %v1557 = vshrl.u32 %v1556, 7
        %v1558 = vsub.s32 %v1555, %v1557
        %v1559 = vrot.slane %v1551, %v1558
        %v1561 = vunpack.c.l.s4 1983009808
        %v1562 = vunpack.c.0.s8 %v1561
        %v1563 = vlaneseq
        %v1564 = vshrl.u32 %v1563, 7
        %v1565 = vsub.s32 %v1562, %v1564
        %v1566 = vrot.slane %v1552, %v1565
        %v1567 = vcombine.low %v1543, %v1559
        %v1568 = vcombine.high %v1543, %v1559
        %v1570 = vunpack.c.l.s4 1934713408
        %v1571 = vunpack.c.0.s8 %v1570
        %v1572 = vlaneseq
        %v1573 = vshrl.u32 %v1572, 7
        %v1574 = vsub.s32 %v1571, %v1573
        %v1575 = vrot.slane %v1567, %v1574
        %v1577 = vunpack.c.l.s4 1934713408
        %v1578 = vunpack.c.0.s8 %v1577
        %v1579 = vlaneseq
        %v1580 = vshrl.u32 %v1579, 7
        %v1581 = vsub.s32 %v1578, %v1580
        %v1582 = vrot.slane %v1568, %v1581
        %v1583 = vcombine.low %v1550, %v1566
        %v1584 = vcombine.high %v1550, %v1566
        %v1586 = vunpack.c.l.s4 1934713408
        %v1587 = vunpack.c.0.s8 %v1586
        %v1588 = vlaneseq
        %v1589 = vshrl.u32 %v1588, 7
        %v1590 = vsub.s32 %v1587, %v1589
        %v1591 = vrot.slane %v1583, %v1590
        %v1593 = vunpack.c.l.s4 1934713408
        %v1594 = vunpack.c.0.s8 %v1593
        %v1595 = vlaneseq
        %v1596 = vshrl.u32 %v1595, 7
        %v1597 = vsub.s32 %v1594, %v1596
        %v1598 = vrot.slane %v1584, %v1597
        %v1599 = vcombine.high %v1575, 0.0
        %v1600 = vcombine.high %v1582, 0.0
        %v1601 = vcombine.high %v1591, 0.0
        %v1602 = vcombine.high %v1598, 0.0
        %v1603 = vcombine.low %v1575, %v1582
        %v1605 = vunpack.c.l.s4 1983009808
        %v1606 = vunpack.c.0.s8 %v1605
        %v1607 = vlaneseq
        %v1608 = vshrl.u32 %v1607, 7
        %v1609 = vsub.s32 %v1606, %v1608
        %v1610 = vrot.slane %v1603, %v1609
        %v1611 = vcombine.low %v1599, %v1600
        %v1613 = vunpack.c.l.s4 1983009808
        %v1614 = vunpack.c.0.s8 %v1613
        %v1615 = vlaneseq
        %v1616 = vshrl.u32 %v1615, 7
        %v1617 = vsub.s32 %v1614, %v1616
        %v1618 = vrot.slane %v1611, %v1617
        %v1619 = vcombine.low %v1591, %v1598
        %v1621 = vunpack.c.l.s4 1983009808
        %v1622 = vunpack.c.0.s8 %v1621
        %v1623 = vlaneseq
        %v1624 = vshrl.u32 %v1623, 7
        %v1625 = vsub.s32 %v1622, %v1624
        %v1626 = vrot.slane %v1619, %v1625
        %v1627 = vcombine.low %v1601, %v1602
        %v1629 = vunpack.c.l.s4 1983009808
        %v1630 = vunpack.c.0.s8 %v1629
        %v1631 = vlaneseq
        %v1632 = vshrl.u32 %v1631, 7
        %v1633 = vsub.s32 %v1630, %v1632
        %v1634 = vrot.slane %v1627, %v1633
        %v1635 = vcombine.low %v1610, %v1618
        %v1636 = vcombine.high %v1610, %v1618
        %v1638 = vunpack.c.l.s4 1934713408
        %v1639 = vunpack.c.0.s8 %v1638
        %v1640 = vlaneseq
        %v1641 = vshrl.u32 %v1640, 7
        %v1642 = vsub.s32 %v1639, %v1641
        %v1643 = vrot.slane %v1635, %v1642
        %v1645 = vunpack.c.l.s4 1934713408
        %v1646 = vunpack.c.0.s8 %v1645
        %v1647 = vlaneseq
        %v1648 = vshrl.u32 %v1647, 7
        %v1649 = vsub.s32 %v1646, %v1648
        %v1650 = vrot.slane %v1636, %v1649
        %v1651 = vcombine.low %v1626, %v1634
        %v1652 = vcombine.high %v1626, %v1634
        %v1654 = vunpack.c.l.s4 1934713408
        %v1655 = vunpack.c.0.s8 %v1654
        %v1656 = vlaneseq
        %v1657 = vshrl.u32 %v1656, 7
        %v1658 = vsub.s32 %v1655, %v1657
        %v1659 = vrot.slane %v1651, %v1658
        %v1661 = vunpack.c.l.s4 1934713408
        %v1662 = vunpack.c.0.s8 %v1661
        %v1663 = vlaneseq
        %v1664 = vshrl.u32 %v1663, 7
        %v1665 = vsub.s32 %v1662, %v1664
        %v1666 = vrot.slane %v1652, %v1665
        %v1667 = vcombine.low %v1643, %v1659
        %v1668 = vcombine.high %v1643, %v1659
        %v1669 = vcombine.low %v1650, %v1666
        %v1670 = vcombine.high %v1650, %v1666
        %v1671 = vpack.c.bf16 %v1667, %v1667
        %v1672 = vpack.c.bf16 %v1668, %v1668
        %v1673 = vpack.c.bf16 %v1669, %v1669
        %v1674 = vpack.c.bf16 %v1670, %v1670
        %v1675 = vld [vmem:[#allocation3] sm:$0xff]
        %vm1676 = vcmask 64512
        %v1678 = vsel %vm1676, %v1371, 0
        %v1681 = vsel %vm1676, %v1521, 0
        %1683 = vmatprep.subr.bf16.mxu0 0
        %1684 = vmatpush1.bf16.xpose.msra.mxu0 %v1681
        %1685 = vmatprep.subr.bf16.mxu0 0
        %1686 = vmatpush1.bf16.xpose.msra.mxu0 0
        %1687 = vmatprep.subr.bf16.mxu0 0
        %1688 = vmatpush1.bf16.xpose.msra.mxu0 0
        %1689 = vmatprep.subr.bf16.mxu0 0
        %1690 = vmatpush1.bf16.xpose.msra.mxu0 0
        %1691 = vmatprep.subr.bf16.mxu0 0
        %1692 = vmatpush1.bf16.xpose.msra.mxu0 0
        %1693 = vmatprep.subr.bf16.mxu0 0
        %1694 = vmatpush1.bf16.xpose.msra.mxu0 0
        %1695 = vmatprep.subr.bf16.mxu0 0
        %1696 = vmatpush1.bf16.xpose.msra.mxu0 0
        %1697 = vmatprep.subr.bf16.mxu0 0
        %1698 = vmatpush1.bf16.xpose.msra.mxu0 0
        %1699 = vmatprep.subr.bf16.mxu0 0
        %1700 = vmatpush1.bf16.xpose.msra.mxu0 0
        %1701 = vmatprep.subr.bf16.mxu0 0
        %1702 = vmatpush1.bf16.xpose.msra.mxu0 0
        %1703 = vmatprep.subr.bf16.mxu0 0
        %1704 = vmatpush1.bf16.xpose.msra.mxu0 0
        %1705 = vmatprep.subr.bf16.mxu0 0
        %1706 = vmatpush1.bf16.xpose.msra.mxu0 0
        %1707 = vmatprep.subr.bf16.mxu0 0
        %1708 = vmatpush1.bf16.xpose.msra.mxu0 0
        %1709 = vmatprep.subr.bf16.mxu0 0
        %1710 = vmatpush1.bf16.xpose.msra.mxu0 0
        %1711 = vmatprep.subr.bf16.mxu0 0
        %1712 = vmatpush1.bf16.xpose.msra.mxu0 0
        %1713 = vmatprep.subr.bf16.mxu0 0
        %1714 = vmatpush1.bf16.xpose.msra.mxu0 0
        %1715 = vmatprep.mubr.bf16.mxu0 0
        %1716 = vmatmul.mubr.bf16.gmra.mrb[0].mxu0 %v1678
        %v1717 = vpop.f32.mrb[0].mxu0
        %v1718 = vadd.f32 %v1675, %v1717
        %v1719 = vpop.f32.mrb[0].mxu0
        %v1720 = vpop.f32.mrb[0].mxu0
        %v1721 = vpop.f32.mrb[0].mxu0
        %1722 = vdwg.mxu0
        %v1724 = vsel %vm1676, %v1372, 0
        %v1727 = vsel %vm1676, %v1522, 0
        %1729 = vmatprep.subr.bf16.mxu0 0
        %1730 = vmatpush1.bf16.xpose.msra.mxu0 %v1727
        %1731 = vmatprep.subr.bf16.mxu0 0
        %1732 = vmatpush1.bf16.xpose.msra.mxu0 0
        %1733 = vmatprep.subr.bf16.mxu0 0
        %1734 = vmatpush1.bf16.xpose.msra.mxu0 0
        %1735 = vmatprep.subr.bf16.mxu0 0
        %1736 = vmatpush1.bf16.xpose.msra.mxu0 0
        %1737 = vmatprep.subr.bf16.mxu0 0
        %1738 = vmatpush1.bf16.xpose.msra.mxu0 0
        %1739 = vmatprep.subr.bf16.mxu0 0
        %1740 = vmatpush1.bf16.xpose.msra.mxu0 0
        %1741 = vmatprep.subr.bf16.mxu0 0
        %1742 = vmatpush1.bf16.xpose.msra.mxu0 0
        %1743 = vmatprep.subr.bf16.mxu0 0
        %1744 = vmatpush1.bf16.xpose.msra.mxu0 0
        %1745 = vmatprep.subr.bf16.mxu0 0
        %1746 = vmatpush1.bf16.xpose.msra.mxu0 0
        %1747 = vmatprep.subr.bf16.mxu0 0
        %1748 = vmatpush1.bf16.xpose.msra.mxu0 0
        %1749 = vmatprep.subr.bf16.mxu0 0
        %1750 = vmatpush1.bf16.xpose.msra.mxu0 0
        %1751 = vmatprep.subr.bf16.mxu0 0
        %1752 = vmatpush1.bf16.xpose.msra.mxu0 0
        %1753 = vmatprep.subr.bf16.mxu0 0
        %1754 = vmatpush1.bf16.xpose.msra.mxu0 0
        %1755 = vmatprep.subr.bf16.mxu0 0
        %1756 = vmatpush1.bf16.xpose.msra.mxu0 0
        %1757 = vmatprep.subr.bf16.mxu0 0
        %1758 = vmatpush1.bf16.xpose.msra.mxu0 0
        %1759 = vmatprep.subr.bf16.mxu0 0
        %1760 = vmatpush1.bf16.xpose.msra.mxu0 0
        %1761 = vmatprep.mubr.bf16.mxu0 0
        %1762 = vmatmul.mubr.bf16.gmra.mrb[0].mxu0 %v1724
        %v1763 = vpop.f32.mrb[0].mxu0
        %v1764 = vadd.f32 %v1675, %v1763
        %v1765 = vpop.f32.mrb[0].mxu0
        %v1766 = vpop.f32.mrb[0].mxu0
        %v1767 = vpop.f32.mrb[0].mxu0
        %1768 = vdwg.mxu0
        %v1770 = vsel %vm1676, %v1373, 0
        %v1773 = vsel %vm1676, %v1523, 0
        %1775 = vmatprep.subr.bf16.mxu0 0
        %1776 = vmatpush1.bf16.xpose.msra.mxu0 %v1773
        %1777 = vmatprep.subr.bf16.mxu0 0
        %1778 = vmatpush1.bf16.xpose.msra.mxu0 0
        %1779 = vmatprep.subr.bf16.mxu0 0
        %1780 = vmatpush1.bf16.xpose.msra.mxu0 0
        %1781 = vmatprep.subr.bf16.mxu0 0
        %1782 = vmatpush1.bf16.xpose.msra.mxu0 0
        %1783 = vmatprep.subr.bf16.mxu0 0
        %1784 = vmatpush1.bf16.xpose.msra.mxu0 0
        %1785 = vmatprep.subr.bf16.mxu0 0
        %1786 = vmatpush1.bf16.xpose.msra.mxu0 0
        %1787 = vmatprep.subr.bf16.mxu0 0
        %1788 = vmatpush1.bf16.xpose.msra.mxu0 0
        %1789 = vmatprep.subr.bf16.mxu0 0
        %1790 = vmatpush1.bf16.xpose.msra.mxu0 0
        %1791 = vmatprep.subr.bf16.mxu0 0
        %1792 = vmatpush1.bf16.xpose.msra.mxu0 0
        %1793 = vmatprep.subr.bf16.mxu0 0
        %1794 = vmatpush1.bf16.xpose.msra.mxu0 0
        %1795 = vmatprep.subr.bf16.mxu0 0
        %1796 = vmatpush1.bf16.xpose.msra.mxu0 0
        %1797 = vmatprep.subr.bf16.mxu0 0
        %1798 = vmatpush1.bf16.xpose.msra.mxu0 0
        %1799 = vmatprep.subr.bf16.mxu0 0
        %1800 = vmatpush1.bf16.xpose.msra.mxu0 0
        %1801 = vmatprep.subr.bf16.mxu0 0
        %1802 = vmatpush1.bf16.xpose.msra.mxu0 0
        %1803 = vmatprep.subr.bf16.mxu0 0
        %1804 = vmatpush1.bf16.xpose.msra.mxu0 0
        %1805 = vmatprep.subr.bf16.mxu0 0
        %1806 = vmatpush1.bf16.xpose.msra.mxu0 0
        %1807 = vmatprep.mubr.bf16.mxu0 0
        %1808 = vmatmul.mubr.bf16.gmra.mrb[0].mxu0 %v1770
        %v1809 = vpop.f32.mrb[0].mxu0
        %v1810 = vadd.f32 %v1675, %v1809
        %v1811 = vpop.f32.mrb[0].mxu0
        %v1812 = vpop.f32.mrb[0].mxu0
        %v1813 = vpop.f32.mrb[0].mxu0
        %1814 = vdwg.mxu0
        %v1816 = vsel %vm1676, %v1374, 0
        %v1819 = vsel %vm1676, %v1524, 0
        %1821 = vmatprep.subr.bf16.mxu0 0
        %1822 = vmatpush1.bf16.xpose.msra.mxu0 %v1819
        %1823 = vmatprep.subr.bf16.mxu0 0
        %1824 = vmatpush1.bf16.xpose.msra.mxu0 0
        %1825 = vmatprep.subr.bf16.mxu0 0
        %1826 = vmatpush1.bf16.xpose.msra.mxu0 0
        %1827 = vmatprep.subr.bf16.mxu0 0
        %1828 = vmatpush1.bf16.xpose.msra.mxu0 0
        %1829 = vmatprep.subr.bf16.mxu0 0
        %1830 = vmatpush1.bf16.xpose.msra.mxu0 0
        %1831 = vmatprep.subr.bf16.mxu0 0
        %1832 = vmatpush1.bf16.xpose.msra.mxu0 0
        %1833 = vmatprep.subr.bf16.mxu0 0
        %1834 = vmatpush1.bf16.xpose.msra.mxu0 0
        %1835 = vmatprep.subr.bf16.mxu0 0
        %1836 = vmatpush1.bf16.xpose.msra.mxu0 0
        %1837 = vmatprep.subr.bf16.mxu0 0
        %1838 = vmatpush1.bf16.xpose.msra.mxu0 0
        %1839 = vmatprep.subr.bf16.mxu0 0
        %1840 = vmatpush1.bf16.xpose.msra.mxu0 0
        %1841 = vmatprep.subr.bf16.mxu0 0
        %1842 = vmatpush1.bf16.xpose.msra.mxu0 0
        %1843 = vmatprep.subr.bf16.mxu0 0
        %1844 = vmatpush1.bf16.xpose.msra.mxu0 0
        %1845 = vmatprep.subr.bf16.mxu0 0
        %1846 = vmatpush1.bf16.xpose.msra.mxu0 0
        %1847 = vmatprep.subr.bf16.mxu0 0
        %1848 = vmatpush1.bf16.xpose.msra.mxu0 0
        %1849 = vmatprep.subr.bf16.mxu0 0
        %1850 = vmatpush1.bf16.xpose.msra.mxu0 0
        %1851 = vmatprep.subr.bf16.mxu0 0
        %1852 = vmatpush1.bf16.xpose.msra.mxu0 0
        %1853 = vmatprep.mubr.bf16.mxu0 0
        %1854 = vmatmul.mubr.bf16.gmra.mrb[0].mxu0 %v1816
        %v1855 = vpop.f32.mrb[0].mxu0
        %v1856 = vadd.f32 %v1675, %v1855
        %v1857 = vpop.f32.mrb[0].mxu0
        %v1858 = vpop.f32.mrb[0].mxu0
        %v1859 = vpop.f32.mrb[0].mxu0
        %1860 = vdwg.mxu0
        %v1862 = vlaneseq
        %v1863 = vshrl.u32 %v1862, 7
        %v1864 = vsub.s32 0, %v1863
        %v1865 = vrot.slane %v1044, %v1864
        %v1867 = vadd.f32 %v1718, %v1865
        %v1868 = vadd.f32 %v1764, %v1865
        %v1869 = vadd.f32 %v1810, %v1865
        %v1870 = vadd.f32 %v1856, %v1865
        %v1871 = vsel %vm1676, %v1867, -inf
        %1872 = vmax.xlane.f32.xlu0 %v1871
        %v1873 = vpop.xlane.xlu0 %1872
        %v1874 = vsel %vm1676, %v1868, -inf
        %1875 = vmax.xlane.f32.xlu0 %v1874
        %v1876 = vpop.xlane.xlu0 %1875
        %v1877 = vsel %vm1676, %v1869, -inf
        %1878 = vmax.xlane.f32.xlu0 %v1877
        %v1879 = vpop.xlane.xlu0 %1878
        %v1880 = vsel %vm1676, %v1870, -inf
        %1881 = vmax.xlane.f32.xlu0 %v1880
        %v1882 = vpop.xlane.xlu0 %1881
        %v1883 = vsub.f32 %v1867, %v1873
        %v1884 = vsub.f32 %v1868, %v1876
        %v1885 = vsub.f32 %v1869, %v1879
        %v1886 = vsub.f32 %v1870, %v1882
        %v1887 = vmul.f32 %v1883, 1.442695
        %v1888 = vpow.pop %v1887
        %v1889 = vmul.f32 %v1884, 1.442695
        %v1890 = vpow.pop %v1889
        %v1891 = vmul.f32 %v1885, 1.442695
        %v1892 = vpow.pop %v1891
        %v1893 = vmul.f32 %v1886, 1.442695
        %v1894 = vpow.pop %v1893
        %v1895 = vsel %vm1676, %v1888, 0.0
        %1896 = vadd.xlane.f32.xlu0 %v1895
        %v1897 = vpop.xlane.xlu0 %1896
        %v1898 = vsel %vm1676, %v1890, 0.0
        %1899 = vadd.xlane.f32.xlu0 %v1898
        %v1900 = vpop.xlane.xlu0 %1899
        %v1901 = vsel %vm1676, %v1892, 0.0
        %1902 = vadd.xlane.f32.xlu0 %v1901
        %v1903 = vpop.xlane.xlu0 %1902
        %v1904 = vsel %vm1676, %v1894, 0.0
        %1905 = vadd.xlane.f32.xlu0 %v1904
        %v1906 = vpop.xlane.xlu0 %1905
        %v1907 = vrcp.pop %v1897
        %v1908 = vrcp.pop %v1900
        %v1909 = vrcp.pop %v1903
        %v1910 = vrcp.pop %v1906
        %v1911 = vmul.f32 %v1888, %v1907
        %v1912 = vmul.f32 %v1890, %v1908
        %v1913 = vmul.f32 %v1892, %v1909
        %v1914 = vmul.f32 %v1894, %v1910
        %v1915 = vpack.c.bf16 %v1911, %v1911
        %v1916 = vpack.c.bf16 %v1912, %v1912
        %v1917 = vpack.c.bf16 %v1913, %v1913
        %v1918 = vpack.c.bf16 %v1914, %v1914
        %v1920 = vsel %vm1676, %v1915, 0
        %vm1922 = vcmask 1043456
        %v1924 = vsel %vm1922, %v1671, 0
        %1926 = vmatprep.subr.bf16.mxu0 0
        %1927 = vmatpush1.bf16.msra.mxu0 %v1924
        %1928 = vmatprep.subr.bf16.mxu0 0
        %1929 = vmatpush1.bf16.msra.mxu0 0
        %1930 = vmatprep.subr.bf16.mxu0 0
        %1931 = vmatpush1.bf16.msra.mxu0 0
        %1932 = vmatprep.subr.bf16.mxu0 0
        %1933 = vmatpush1.bf16.msra.mxu0 0
        %1934 = vmatprep.subr.bf16.mxu0 0
        %1935 = vmatpush1.bf16.msra.mxu0 0
        %1936 = vmatprep.subr.bf16.mxu0 0
        %1937 = vmatpush1.bf16.msra.mxu0 0
        %1938 = vmatprep.subr.bf16.mxu0 0
        %1939 = vmatpush1.bf16.msra.mxu0 0
        %1940 = vmatprep.subr.bf16.mxu0 0
        %1941 = vmatpush1.bf16.msra.mxu0 0
        %1942 = vmatprep.subr.bf16.mxu0 0
        %1943 = vmatpush1.bf16.msra.mxu0 0
        %1944 = vmatprep.subr.bf16.mxu0 0
        %1945 = vmatpush1.bf16.msra.mxu0 0
        %1946 = vmatprep.subr.bf16.mxu0 0
        %1947 = vmatpush1.bf16.msra.mxu0 0
        %1948 = vmatprep.subr.bf16.mxu0 0
        %1949 = vmatpush1.bf16.msra.mxu0 0
        %1950 = vmatprep.subr.bf16.mxu0 0
        %1951 = vmatpush1.bf16.msra.mxu0 0
        %1952 = vmatprep.subr.bf16.mxu0 0
        %1953 = vmatpush1.bf16.msra.mxu0 0
        %1954 = vmatprep.subr.bf16.mxu0 0
        %1955 = vmatpush1.bf16.msra.mxu0 0
        %1956 = vmatprep.subr.bf16.mxu0 0
        %1957 = vmatpush1.bf16.msra.mxu0 0
        %1958 = vmatprep.mubr.bf16.mxu0 0
        %1959 = vmatmul.mubr.bf16.gmra.mrb[0].mxu0 %v1920
        %v1960 = vpop.f32.mrb[0].mxu0
        %v1961 = vadd.f32 0.0, %v1960
        %v1962 = vpop.f32.mrb[0].mxu0
        %v1963 = vpop.f32.mrb[0].mxu0
        %v1964 = vpop.f32.mrb[0].mxu0
        %1965 = vdwg.mxu0
        %v1967 = vsel %vm1676, %v1916, 0
        %v1970 = vsel %vm1922, %v1672, 0
        %1972 = vmatprep.subr.bf16.mxu0 0
        %1973 = vmatpush1.bf16.msra.mxu0 %v1970
        %1974 = vmatprep.subr.bf16.mxu0 0
        %1975 = vmatpush1.bf16.msra.mxu0 0
        %1976 = vmatprep.subr.bf16.mxu0 0
        %1977 = vmatpush1.bf16.msra.mxu0 0
        %1978 = vmatprep.subr.bf16.mxu0 0
        %1979 = vmatpush1.bf16.msra.mxu0 0
        %1980 = vmatprep.subr.bf16.mxu0 0
        %1981 = vmatpush1.bf16.msra.mxu0 0
        %1982 = vmatprep.subr.bf16.mxu0 0
        %1983 = vmatpush1.bf16.msra.mxu0 0
        %1984 = vmatprep.subr.bf16.mxu0 0
        %1985 = vmatpush1.bf16.msra.mxu0 0
        %1986 = vmatprep.subr.bf16.mxu0 0
        %1987 = vmatpush1.bf16.msra.mxu0 0
        %1988 = vmatprep.subr.bf16.mxu0 0
        %1989 = vmatpush1.bf16.msra.mxu0 0
        %1990 = vmatprep.subr.bf16.mxu0 0
        %1991 = vmatpush1.bf16.msra.mxu0 0
        %1992 = vmatprep.subr.bf16.mxu0 0
        %1993 = vmatpush1.bf16.msra.mxu0 0
        %1994 = vmatprep.subr.bf16.mxu0 0
        %1995 = vmatpush1.bf16.msra.mxu0 0
        %1996 = vmatprep.subr.bf16.mxu0 0
        %1997 = vmatpush1.bf16.msra.mxu0 0
        %1998 = vmatprep.subr.bf16.mxu0 0
        %1999 = vmatpush1.bf16.msra.mxu0 0
        %2000 = vmatprep.subr.bf16.mxu0 0
        %2001 = vmatpush1.bf16.msra.mxu0 0
        %2002 = vmatprep.subr.bf16.mxu0 0
        %2003 = vmatpush1.bf16.msra.mxu0 0
        %2004 = vmatprep.mubr.bf16.mxu0 0
        %2005 = vmatmul.mubr.bf16.gmra.mrb[0].mxu0 %v1967
        %v2006 = vpop.f32.mrb[0].mxu0
        %v2007 = vadd.f32 0.0, %v2006
        %v2008 = vpop.f32.mrb[0].mxu0
        %v2009 = vpop.f32.mrb[0].mxu0
        %v2010 = vpop.f32.mrb[0].mxu0
        %2011 = vdwg.mxu0
        %v2013 = vsel %vm1676, %v1917, 0
        %v2016 = vsel %vm1922, %v1673, 0
        %2018 = vmatprep.subr.bf16.mxu0 0
        %2019 = vmatpush1.bf16.msra.mxu0 %v2016
        %2020 = vmatprep.subr.bf16.mxu0 0
        %2021 = vmatpush1.bf16.msra.mxu0 0
        %2022 = vmatprep.subr.bf16.mxu0 0
        %2023 = vmatpush1.bf16.msra.mxu0 0
        %2024 = vmatprep.subr.bf16.mxu0 0
        %2025 = vmatpush1.bf16.msra.mxu0 0
        %2026 = vmatprep.subr.bf16.mxu0 0
        %2027 = vmatpush1.bf16.msra.mxu0 0
        %2028 = vmatprep.subr.bf16.mxu0 0
        %2029 = vmatpush1.bf16.msra.mxu0 0
        %2030 = vmatprep.subr.bf16.mxu0 0
        %2031 = vmatpush1.bf16.msra.mxu0 0
        %2032 = vmatprep.subr.bf16.mxu0 0
        %2033 = vmatpush1.bf16.msra.mxu0 0
        %2034 = vmatprep.subr.bf16.mxu0 0
        %2035 = vmatpush1.bf16.msra.mxu0 0
        %2036 = vmatprep.subr.bf16.mxu0 0
        %2037 = vmatpush1.bf16.msra.mxu0 0
        %2038 = vmatprep.subr.bf16.mxu0 0
        %2039 = vmatpush1.bf16.msra.mxu0 0
        %2040 = vmatprep.subr.bf16.mxu0 0
        %2041 = vmatpush1.bf16.msra.mxu0 0
        %2042 = vmatprep.subr.bf16.mxu0 0
        %2043 = vmatpush1.bf16.msra.mxu0 0
        %2044 = vmatprep.subr.bf16.mxu0 0
        %2045 = vmatpush1.bf16.msra.mxu0 0
        %2046 = vmatprep.subr.bf16.mxu0 0
        %2047 = vmatpush1.bf16.msra.mxu0 0
        %2048 = vmatprep.subr.bf16.mxu0 0
        %2049 = vmatpush1.bf16.msra.mxu0 0
        %2050 = vmatprep.mubr.bf16.mxu0 0
        %2051 = vmatmul.mubr.bf16.gmra.mrb[0].mxu0 %v2013
        %v2052 = vpop.f32.mrb[0].mxu0
        %v2053 = vadd.f32 0.0, %v2052
        %v2054 = vpop.f32.mrb[0].mxu0
        %v2055 = vpop.f32.mrb[0].mxu0
        %v2056 = vpop.f32.mrb[0].mxu0
        %2057 = vdwg.mxu0
        %v2059 = vsel %vm1676, %v1918, 0
        %v2062 = vsel %vm1922, %v1674, 0
        %2064 = vmatprep.subr.bf16.mxu0 0
        %2065 = vmatpush1.bf16.msra.mxu0 %v2062
        %2066 = vmatprep.subr.bf16.mxu0 0
        %2067 = vmatpush1.bf16.msra.mxu0 0
        %2068 = vmatprep.subr.bf16.mxu0 0
        %2069 = vmatpush1.bf16.msra.mxu0 0
        %2070 = vmatprep.subr.bf16.mxu0 0
        %2071 = vmatpush1.bf16.msra.mxu0 0
        %2072 = vmatprep.subr.bf16.mxu0 0
        %2073 = vmatpush1.bf16.msra.mxu0 0
        %2074 = vmatprep.subr.bf16.mxu0 0
        %2075 = vmatpush1.bf16.msra.mxu0 0
        %2076 = vmatprep.subr.bf16.mxu0 0
        %2077 = vmatpush1.bf16.msra.mxu0 0
        %2078 = vmatprep.subr.bf16.mxu0 0
        %2079 = vmatpush1.bf16.msra.mxu0 0
        %2080 = vmatprep.subr.bf16.mxu0 0
        %2081 = vmatpush1.bf16.msra.mxu0 0
        %2082 = vmatprep.subr.bf16.mxu0 0
        %2083 = vmatpush1.bf16.msra.mxu0 0
        %2084 = vmatprep.subr.bf16.mxu0 0
        %2085 = vmatpush1.bf16.msra.mxu0 0
        %2086 = vmatprep.subr.bf16.mxu0 0
        %2087 = vmatpush1.bf16.msra.mxu0 0
        %2088 = vmatprep.subr.bf16.mxu0 0
        %2089 = vmatpush1.bf16.msra.mxu0 0
        %2090 = vmatprep.subr.bf16.mxu0 0
        %2091 = vmatpush1.bf16.msra.mxu0 0
        %2092 = vmatprep.subr.bf16.mxu0 0
        %2093 = vmatpush1.bf16.msra.mxu0 0
        %2094 = vmatprep.subr.bf16.mxu0 0
        %2095 = vmatpush1.bf16.msra.mxu0 0
        %2096 = vmatprep.mubr.bf16.mxu0 0
        %2097 = vmatmul.mubr.bf16.gmra.mrb[0].mxu0 %v2059
        %v2098 = vpop.f32.mrb[0].mxu0
        %v2099 = vadd.f32 0.0, %v2098
        %v2100 = vpop.f32.mrb[0].mxu0
        %v2101 = vpop.f32.mrb[0].mxu0
        %v2102 = vpop.f32.mrb[0].mxu0
        %2103 = vdwg.mxu0
        %v2104 = vcombine.low %v1961, %v2053
        %v2105 = vcombine.high %v1961, %v2053
        %v2107 = vunpack.c.l.s4 1983009808
        %v2108 = vunpack.c.0.s8 %v2107
        %v2109 = vlaneseq
        %v2110 = vshrl.u32 %v2109, 7
        %v2111 = vsub.s32 %v2108, %v2110
        %v2112 = vrot.slane %v2104, %v2111
        %v2114 = vunpack.c.l.s4 1983009808
        %v2115 = vunpack.c.0.s8 %v2114
        %v2116 = vlaneseq
        %v2117 = vshrl.u32 %v2116, 7
        %v2118 = vsub.s32 %v2115, %v2117
        %v2119 = vrot.slane %v2105, %v2118
        %v2120 = vcombine.low %v2007, %v2099
        %v2121 = vcombine.high %v2007, %v2099
        %v2123 = vunpack.c.l.s4 1983009808
        %v2124 = vunpack.c.0.s8 %v2123
        %v2125 = vlaneseq
        %v2126 = vshrl.u32 %v2125, 7
        %v2127 = vsub.s32 %v2124, %v2126
        %v2128 = vrot.slane %v2120, %v2127
        %v2130 = vunpack.c.l.s4 1983009808
        %v2131 = vunpack.c.0.s8 %v2130
        %v2132 = vlaneseq
        %v2133 = vshrl.u32 %v2132, 7
        %v2134 = vsub.s32 %v2131, %v2133
        %v2135 = vrot.slane %v2121, %v2134
        %v2136 = vcombine.low %v2112, %v2128
        %v2137 = vcombine.high %v2112, %v2128
        %v2139 = vunpack.c.l.s4 1934713408
        %v2140 = vunpack.c.0.s8 %v2139
        %v2141 = vlaneseq
        %v2142 = vshrl.u32 %v2141, 7
        %v2143 = vsub.s32 %v2140, %v2142
        %v2144 = vrot.slane %v2136, %v2143
        %v2146 = vunpack.c.l.s4 1934713408
        %v2147 = vunpack.c.0.s8 %v2146
        %v2148 = vlaneseq
        %v2149 = vshrl.u32 %v2148, 7
        %v2150 = vsub.s32 %v2147, %v2149
        %v2151 = vrot.slane %v2137, %v2150
        %v2152 = vcombine.low %v2119, %v2135
        %v2153 = vcombine.high %v2119, %v2135
        %v2155 = vunpack.c.l.s4 1934713408
        %v2156 = vunpack.c.0.s8 %v2155
        %v2157 = vlaneseq
        %v2158 = vshrl.u32 %v2157, 7
        %v2159 = vsub.s32 %v2156, %v2158
        %v2160 = vrot.slane %v2152, %v2159
        %v2162 = vunpack.c.l.s4 1934713408
        %v2163 = vunpack.c.0.s8 %v2162
        %v2164 = vlaneseq
        %v2165 = vshrl.u32 %v2164, 7
        %v2166 = vsub.s32 %v2163, %v2165
        %v2167 = vrot.slane %v2153, %v2166
        %v2168 = vcombine.high %v2144, 0.0
        %v2169 = vcombine.high %v2151, 0.0
        %v2170 = vcombine.high %v2160, 0.0
        %v2171 = vcombine.high %v2167, 0.0
        %v2172 = vcombine.low %v2144, %v2151
        %v2174 = vunpack.c.l.s4 1983009808
        %v2175 = vunpack.c.0.s8 %v2174
        %v2176 = vlaneseq
        %v2177 = vshrl.u32 %v2176, 7
        %v2178 = vsub.s32 %v2175, %v2177
        %v2179 = vrot.slane %v2172, %v2178
        %v2180 = vcombine.low %v2168, %v2169
        %v2182 = vunpack.c.l.s4 1983009808
        %v2183 = vunpack.c.0.s8 %v2182
        %v2184 = vlaneseq
        %v2185 = vshrl.u32 %v2184, 7
        %v2186 = vsub.s32 %v2183, %v2185
        %v2187 = vrot.slane %v2180, %v2186
        %v2188 = vcombine.low %v2160, %v2167
        %v2190 = vunpack.c.l.s4 1983009808
        %v2191 = vunpack.c.0.s8 %v2190
        %v2192 = vlaneseq
        %v2193 = vshrl.u32 %v2192, 7
        %v2194 = vsub.s32 %v2191, %v2193
        %v2195 = vrot.slane %v2188, %v2194
        %v2196 = vcombine.low %v2170, %v2171
        %v2198 = vunpack.c.l.s4 1983009808
        %v2199 = vunpack.c.0.s8 %v2198
        %v2200 = vlaneseq
        %v2201 = vshrl.u32 %v2200, 7
        %v2202 = vsub.s32 %v2199, %v2201
        %v2203 = vrot.slane %v2196, %v2202
        %v2204 = vcombine.low %v2179, %v2187
        %v2205 = vcombine.high %v2179, %v2187
        %v2207 = vunpack.c.l.s4 1934713408
        %v2208 = vunpack.c.0.s8 %v2207
        %v2209 = vlaneseq
        %v2210 = vshrl.u32 %v2209, 7
        %v2211 = vsub.s32 %v2208, %v2210
        %v2212 = vrot.slane %v2204, %v2211
        %v2214 = vunpack.c.l.s4 1934713408
        %v2215 = vunpack.c.0.s8 %v2214
        %v2216 = vlaneseq
        %v2217 = vshrl.u32 %v2216, 7
        %v2218 = vsub.s32 %v2215, %v2217
        %v2219 = vrot.slane %v2205, %v2218
        %v2220 = vcombine.low %v2195, %v2203
        %v2221 = vcombine.high %v2195, %v2203
        %v2223 = vunpack.c.l.s4 1934713408
        %v2224 = vunpack.c.0.s8 %v2223
        %v2225 = vlaneseq
        %v2226 = vshrl.u32 %v2225, 7
        %v2227 = vsub.s32 %v2224, %v2226
        %v2228 = vrot.slane %v2220, %v2227
        %v2230 = vunpack.c.l.s4 1934713408
        %v2231 = vunpack.c.0.s8 %v2230
        %v2232 = vlaneseq
        %v2233 = vshrl.u32 %v2232, 7
        %v2234 = vsub.s32 %v2231, %v2233
        %v2235 = vrot.slane %v2221, %v2234
        %v2236 = vcombine.low %v2212, %v2228
        %v2237 = vcombine.high %v2212, %v2228
        %v2238 = vcombine.low %v2219, %v2235
        %v2239 = vcombine.high %v2219, %v2235
        %2241 = vrot.lane.b32.xlu0 %v2237, 8
        %v2242 = vpop.permute.xlu0 %2241
        %2245 = vrot.lane.b32.xlu0 %v2238, 16
        %v2246 = vpop.permute.xlu0 %2245
        %2249 = vrot.lane.b32.xlu0 %v2239, 24
        %v2250 = vpop.permute.xlu0 %2249
        %v2252 = vsel %vm1676, %v2236, %v2242
        %vm2253 = vcmask 130048
        %v2254 = vsel %vm2253, %v2252, %v2246
        %vm2255 = vcmask 195584
        %v2256 = vsel %vm2255, %v2254, %v2250
        %2257 = vst.msk [vmem:[#allocation4] sm:$0xff] %vm1064, %v2256
        %v2258 = vld [vmem:[#allocation4] sm:$0xff]
        %v2259 = vpack.c.bf16 %v2258, %v2258
        %v2261 = vlaneseq
        %v2262 = vshrl.u32 %v2261, 7
        %v2263 = vsub.s32 0, %v2262
        %v2264 = vrot.slane %v1023, %v2263
        %v2270 = vunpack.c.l.b16 %v1016
        %v2271 = vunpack.c.l.b16 %v1017
        %v2272 = vunpack.c.l.b16 %v1018
        %v2273 = vunpack.c.l.b16 %v1019
        %v2274 = vpack.c.b16 %v2271, %v2270
        %v2275 = vpack.c.b16 %v2273, %v2272
        %v2279 = vsel %vm1064, %v2259, 0
        %2281 = vmatprep.subr.bf16.mxu0 0
        %2282 = vmatpush1.bf16.msra.mxu0 %v2274
        %2283 = vmatprep.subr.bf16.mxu0 0
        %2284 = vmatpush1.bf16.msra.mxu0 %v2275
        %2285 = vmatprep.subr.bf16.mxu0 0
        %2286 = vmatpush1.bf16.msra.mxu0 0
        %2287 = vmatprep.subr.bf16.mxu0 0
        %2288 = vmatpush1.bf16.msra.mxu0 0
        %2289 = vmatprep.subr.bf16.mxu0 0
        %2290 = vmatpush1.bf16.msra.mxu0 0
        %2291 = vmatprep.subr.bf16.mxu0 0
        %2292 = vmatpush1.bf16.msra.mxu0 0
        %2293 = vmatprep.subr.bf16.mxu0 0
        %2294 = vmatpush1.bf16.msra.mxu0 0
        %2295 = vmatprep.subr.bf16.mxu0 0
        %2296 = vmatpush1.bf16.msra.mxu0 0
        %2297 = vmatprep.subr.bf16.mxu0 0
        %2298 = vmatpush1.bf16.msra.mxu0 0
        %2299 = vmatprep.subr.bf16.mxu0 0
        %2300 = vmatpush1.bf16.msra.mxu0 0
        %2301 = vmatprep.subr.bf16.mxu0 0
        %2302 = vmatpush1.bf16.msra.mxu0 0
        %2303 = vmatprep.subr.bf16.mxu0 0
        %2304 = vmatpush1.bf16.msra.mxu0 0
        %2305 = vmatprep.subr.bf16.mxu0 0
        %2306 = vmatpush1.bf16.msra.mxu0 0
        %2307 = vmatprep.subr.bf16.mxu0 0
        %2308 = vmatpush1.bf16.msra.mxu0 0
        %2309 = vmatprep.subr.bf16.mxu0 0
        %2310 = vmatpush1.bf16.msra.mxu0 0
        %2311 = vmatprep.subr.bf16.mxu0 0
        %2312 = vmatpush1.bf16.msra.mxu0 0
        %2313 = vmatprep.mubr.bf16.mxu0 0
        %2314 = vmatmul.mubr.bf16.gmra.mrb[0].mxu0 %v2279
        %v2315 = vpop.f32.mrb[0].mxu0
        %v2316 = vadd.f32 %v2264, %v2315
        %v2317 = vpop.f32.mrb[0].mxu0
        %v2318 = vpop.f32.mrb[0].mxu0
        %v2319 = vpop.f32.mrb[0].mxu0
        %2320 = vdwg.mxu0
        %v2321 = vadd.f32 %v1043, %v2316
        %v2322 = vsel %vm1064, %v2321, 0.0
        %2323 = vadd.xlane.f32.xlu0 %v2322
        %v2324 = vpop.xlane.xlu0 %2323
        %v2325 = vrcp.pop 32.0
        %v2326 = vmul.f32 %v2324, %v2325
        %v2327 = vsub.f32 %v2321, %v2326
        %v2328 = vmul.f32 %v2327, %v2327
        %v2329 = vsel %vm1064, %v2328, 0.0
        %2330 = vadd.xlane.f32.xlu0 %v2329
        %v2331 = vpop.xlane.xlu0 %2330
        %v2332 = vmul.f32 %v2331, %v2325
        %v2333 = vadd.f32 %v2332, 1e-05
        %v2334 = vrsqrt.pop %v2333
        %v2335 = vmul.f32 %v2327, %v2334
        %v2337 = vlaneseq
        %v2338 = vshrl.u32 %v2337, 7
        %v2339 = vsub.s32 0, %v2338
        %v2340 = vrot.slane %v1024, %v2339
        %v2342 = vmul.f32 %v2335, %v2340
        %v2344 = vlaneseq
        %v2345 = vshrl.u32 %v2344, 7
        %v2346 = vsub.s32 0, %v2345
        %v2347 = vrot.slane %v1025, %v2346
        %v2349 = vadd.f32 %v2342, %v2347
        %v2350 = vpack.c.bf16 %v2349, %v2349
        %v2352 = vlaneseq
        %v2353 = vshrl.u32 %v2352, 7
        %v2354 = vsub.s32 0, %v2353
        %v2355 = vrot.slane %v1032, %v2354
        %v2361 = vunpack.c.l.b16 %v1028
        %v2362 = vunpack.c.l.b16 %v1029
        %v2363 = vunpack.c.l.b16 %v1030
        %v2364 = vunpack.c.l.b16 %v1031
        %v2365 = vpack.c.b16 %v2362, %v2361
        %v2366 = vpack.c.b16 %v2364, %v2363
        %v2370 = vsel %vm1064, %v2350, 0
        %2372 = vmatprep.subr.bf16.mxu0 0
        %2373 = vmatpush1.bf16.msra.mxu0 %v2365
        %2374 = vmatprep.subr.bf16.mxu0 0
        %2375 = vmatpush1.bf16.msra.mxu0 %v2366
        %2376 = vmatprep.subr.bf16.mxu0 0
        %2377 = vmatpush1.bf16.msra.mxu0 0
        %2378 = vmatprep.subr.bf16.mxu0 0
        %2379 = vmatpush1.bf16.msra.mxu0 0
        %2380 = vmatprep.subr.bf16.mxu0 0
        %2381 = vmatpush1.bf16.msra.mxu0 0
        %2382 = vmatprep.subr.bf16.mxu0 0
        %2383 = vmatpush1.bf16.msra.mxu0 0
        %2384 = vmatprep.subr.bf16.mxu0 0
        %2385 = vmatpush1.bf16.msra.mxu0 0
        %2386 = vmatprep.subr.bf16.mxu0 0
        %2387 = vmatpush1.bf16.msra.mxu0 0
        %2388 = vmatprep.subr.bf16.mxu0 0
        %2389 = vmatpush1.bf16.msra.mxu0 0
        %2390 = vmatprep.subr.bf16.mxu0 0
        %2391 = vmatpush1.bf16.msra.mxu0 0
        %2392 = vmatprep.subr.bf16.mxu0 0
        %2393 = vmatpush1.bf16.msra.mxu0 0
        %2394 = vmatprep.subr.bf16.mxu0 0
        %2395 = vmatpush1.bf16.msra.mxu0 0
        %2396 = vmatprep.subr.bf16.mxu0 0
        %2397 = vmatpush1.bf16.msra.mxu0 0
        %2398 = vmatprep.subr.bf16.mxu0 0
        %2399 = vmatpush1.bf16.msra.mxu0 0
        %2400 = vmatprep.subr.bf16.mxu0 0
        %2401 = vmatpush1.bf16.msra.mxu0 0
        %2402 = vmatprep.subr.bf16.mxu0 0
        %2403 = vmatpush1.bf16.msra.mxu0 0
        %2404 = vmatprep.mubr.bf16.mxu0 0
        %2405 = vmatmul.mubr.bf16.gmra.mrb[0].mxu0 %v2370
        %v2406 = vpop.f32.mrb[0].mxu0
        %v2407 = vadd.f32 %v2355, %v2406
        %v2408 = vpop.f32.mrb[0].mxu0
        %v2409 = vpop.f32.mrb[0].mxu0
        %v2410 = vpop.f32.mrb[0].mxu0
        %2411 = vdwg.mxu0
        %v2412 = vmax.f32 %v2407, 0.0
        %v2413 = vpack.c.bf16 %v2412, %v2412
        %v2415 = vlaneseq
        %v2416 = vshrl.u32 %v2415, 7
        %v2417 = vsub.s32 0, %v2416
        %v2418 = vrot.slane %v1041, %v2417
        %v2428 = vunpack.c.l.b16 %v1033
        %v2429 = vunpack.c.l.b16 %v1034
        %v2430 = vunpack.c.l.b16 %v1035
        %v2431 = vunpack.c.l.b16 %v1036
        %v2432 = vunpack.c.l.b16 %v1037
        %v2433 = vunpack.c.l.b16 %v1038
        %v2434 = vunpack.c.l.b16 %v1039
        %v2435 = vunpack.c.l.b16 %v1040
        %v2436 = vpack.c.b16 %v2429, %v2428
        %v2437 = vpack.c.b16 %v2431, %v2430
        %v2438 = vpack.c.b16 %v2433, %v2432
        %v2439 = vpack.c.b16 %v2435, %v2434
        %vm2444 = vcmask 523264
        %v2446 = vsel %vm2444, %v2413, 0
        %2448 = vmatprep.subr.bf16.mxu0 0
        %2449 = vmatpush1.bf16.msra.mxu0 %v2436
        %2450 = vmatprep.subr.bf16.mxu0 0
        %2451 = vmatpush1.bf16.msra.mxu0 %v2437
        %2452 = vmatprep.subr.bf16.mxu0 0
        %2453 = vmatpush1.bf16.msra.mxu0 %v2438
        %2454 = vmatprep.subr.bf16.mxu0 0
        %2455 = vmatpush1.bf16.msra.mxu0 %v2439
        %2456 = vmatprep.subr.bf16.mxu0 0
        %2457 = vmatpush1.bf16.msra.mxu0 0
        %2458 = vmatprep.subr.bf16.mxu0 0
        %2459 = vmatpush1.bf16.msra.mxu0 0
        %2460 = vmatprep.subr.bf16.mxu0 0
        %2461 = vmatpush1.bf16.msra.mxu0 0
        %2462 = vmatprep.subr.bf16.mxu0 0
        %2463 = vmatpush1.bf16.msra.mxu0 0
        %2464 = vmatprep.subr.bf16.mxu0 0
        %2465 = vmatpush1.bf16.msra.mxu0 0
        %2466 = vmatprep.subr.bf16.mxu0 0
        %2467 = vmatpush1.bf16.msra.mxu0 0
        %2468 = vmatprep.subr.bf16.mxu0 0
        %2469 = vmatpush1.bf16.msra.mxu0 0
        %2470 = vmatprep.subr.bf16.mxu0 0
        %2471 = vmatpush1.bf16.msra.mxu0 0
        %2472 = vmatprep.subr.bf16.mxu0 0
        %2473 = vmatpush1.bf16.msra.mxu0 0
        %2474 = vmatprep.subr.bf16.mxu0 0
        %2475 = vmatpush1.bf16.msra.mxu0 0
        %2476 = vmatprep.subr.bf16.mxu0 0
        %2477 = vmatpush1.bf16.msra.mxu0 0
        %2478 = vmatprep.subr.bf16.mxu0 0
        %2479 = vmatpush1.bf16.msra.mxu0 0
        %2480 = vmatprep.mubr.bf16.mxu0 0
        %2481 = vmatmul.mubr.bf16.gmra.mrb[0].mxu0 %v2446
        %v2482 = vpop.f32.mrb[0].mxu0
        %v2483 = vadd.f32 %v2418, %v2482
        %v2484 = vpop.f32.mrb[0].mxu0
        %v2485 = vpop.f32.mrb[0].mxu0
        %v2486 = vpop.f32.mrb[0].mxu0
        %2487 = vdwg.mxu0
        %v2488 = vadd.f32 %v2349, %v2483
        %v2489 = vsel %vm1064, %v2488, 0.0
        %2490 = vadd.xlane.f32.xlu0 %v2489
        %v2491 = vpop.xlane.xlu0 %2490
        %v2492 = vmul.f32 %v2491, %v2325
        %v2493 = vsub.f32 %v2488, %v2492
        %v2494 = vmul.f32 %v2493, %v2493
        %v2495 = vsel %vm1064, %v2494, 0.0
        %2496 = vadd.xlane.f32.xlu0 %v2495
        %v2497 = vpop.xlane.xlu0 %2496
        %v2498 = vmul.f32 %v2497, %v2325
        %v2499 = vadd.f32 %v2498, 1e-05
        %v2500 = vrsqrt.pop %v2499
        %v2501 = vmul.f32 %v2493, %v2500
        %v2503 = vlaneseq
        %v2504 = vshrl.u32 %v2503, 7
        %v2505 = vsub.s32 0, %v2504
        %v2506 = vrot.slane %v1026, %v2505
        %v2508 = vmul.f32 %v2501, %v2506
        %v2510 = vlaneseq
        %v2511 = vshrl.u32 %v2510, 7
        %v2512 = vsub.s32 0, %v2511
        %v2513 = vrot.slane %v1027, %v2512
        %v2515 = vadd.f32 %v2508, %v2513
        %p2516 = scmp.ne.s32.totalorder %s40, 1
        // Predicated region
        $region133: #{tpu_custom_call.1} parent=99 // pred_check
          %p2517 = pneg %p2516
        $region134: #{tpu_custom_call.1} parent=99 // pred_check_branch
          %2519 = sbr.rel (%p2517) target = $region136
        $region135: #{tpu_custom_call.1} parent=99 // pred_region
          %2520 = vst.msk [vmem:[#allocation2] sm:$0xff] %vm1064, %v2515
        $region136: #{tpu_custom_call.1} parent=99 // pred_fallthru
          _
        // Predicated region
        $region137: #{tpu_custom_call.1} parent=99 // pred_check
          %p2521 = pneg %p1042
        $region138: #{tpu_custom_call.1} parent=99 // pred_check_branch
          %2523 = sbr.rel (%p2521) target = $region140
        $region139: #{tpu_custom_call.1} parent=99 // pred_region
          %v2524 = vld [vmem:[#allocation10] sm:$0x1]
          %v2525 = vld [vmem:[#allocation11] sm:$0x1]
          %v2526 = vsel %vm1064, %v2515, 0.0
          %2527 = vadd.xlane.f32.xlu0 %v2526
          %v2528 = vpop.xlane.xlu0 %2527
          %v2529 = vmul.f32 %v2528, %v2325
          %v2530 = vsub.f32 %v2515, %v2529
          %v2531 = vmul.f32 %v2530, %v2530
          %v2532 = vsel %vm1064, %v2531, 0.0
          %2533 = vadd.xlane.f32.xlu0 %v2532
          %v2534 = vpop.xlane.xlu0 %2533
          %v2535 = vmul.f32 %v2534, %v2325
          %v2536 = vadd.f32 %v2535, 1e-05
          %v2537 = vrsqrt.pop %v2536
          %v2538 = vmul.f32 %v2530, %v2537
          %v2540 = vlaneseq
          %v2541 = vshrl.u32 %v2540, 7
          %v2542 = vsub.s32 0, %v2541
          %v2543 = vrot.slane %v2524, %v2542
          %v2545 = vmul.f32 %v2538, %v2543
          %v2547 = vlaneseq
          %v2548 = vshrl.u32 %v2547, 7
          %v2549 = vsub.s32 0, %v2548
          %v2550 = vrot.slane %v2525, %v2549
          %v2552 = vadd.f32 %v2545, %v2550
          %v2553 = vpack.c.bf16 %v2552, %v2552
          %vm2554 = vcmask 257024
          %2555 = vst.msk [vmem:[#allocation15] sm:$0xf] %vm2554, %v2553
        $region140: #{tpu_custom_call.1} parent=99 // pred_fallthru
          _
        %s2556 = scalar_lea.vmem [#allocation2], 8
        %v2557 = vld [vmem:[%s2556] sm:$0xff]
        %s2558 = scalar_lea.vmem [#allocation5], 1
        %v2559 = vld [vmem:[%s2558] sm:$0x1]
        %v2560 = vpack.c.bf16 %v2557, %v2557
        %v2562 = vsel %vm1064, %v2560, 0
        %2564 = vmatprep.subr.bf16.mxu0 0
        %2565 = vmatpush1.bf16.msra.mxu0 %v1060
        %2566 = vmatprep.subr.bf16.mxu0 0
        %2567 = vmatpush1.bf16.msra.mxu0 %v1061
        %2568 = vmatprep.subr.bf16.mxu0 0
        %2569 = vmatpush1.bf16.msra.mxu0 0
        %2570 = vmatprep.subr.bf16.mxu0 0
        %2571 = vmatpush1.bf16.msra.mxu0 0
        %2572 = vmatprep.subr.bf16.mxu0 0
        %2573 = vmatpush1.bf16.msra.mxu0 0
        %2574 = vmatprep.subr.bf16.mxu0 0
        %2575 = vmatpush1.bf16.msra.mxu0 0
        %2576 = vmatprep.subr.bf16.mxu0 0
        %2577 = vmatpush1.bf16.msra.mxu0 0
        %2578 = vmatprep.subr.bf16.mxu0 0
        %2579 = vmatpush1.bf16.msra.mxu0 0
        %2580 = vmatprep.subr.bf16.mxu0 0
        %2581 = vmatpush1.bf16.msra.mxu0 0
        %2582 = vmatprep.subr.bf16.mxu0 0
        %2583 = vmatpush1.bf16.msra.mxu0 0
        %2584 = vmatprep.subr.bf16.mxu0 0
        %2585 = vmatpush1.bf16.msra.mxu0 0
        %2586 = vmatprep.subr.bf16.mxu0 0
        %2587 = vmatpush1.bf16.msra.mxu0 0
        %2588 = vmatprep.subr.bf16.mxu0 0
        %2589 = vmatpush1.bf16.msra.mxu0 0
        %2590 = vmatprep.subr.bf16.mxu0 0
        %2591 = vmatpush1.bf16.msra.mxu0 0
        %2592 = vmatprep.subr.bf16.mxu0 0
        %2593 = vmatpush1.bf16.msra.mxu0 0
        %2594 = vmatprep.subr.bf16.mxu0 0
        %2595 = vmatpush1.bf16.msra.mxu0 0
        %2596 = vmatprep.mubr.bf16.mxu0 0
        %2597 = vmatmul.mubr.bf16.gmra.mrb[0].mxu0 %v2562
        %v2598 = vpop.f32.mrb[0].mxu0
        %v2599 = vadd.f32 %v1050, %v2598
        %v2600 = vpop.f32.mrb[0].mxu0
        %v2601 = vpop.f32.mrb[0].mxu0
        %v2602 = vpop.f32.mrb[0].mxu0
        %2603 = vdwg.mxu0
        %v2604 = vmul.f32 %v2599, 0.35355338
        %2605 = vmatprep.subr.bf16.mxu0 0
        %2606 = vmatpush1.bf16.msra.mxu0 %v1123
        %2607 = vmatprep.subr.bf16.mxu0 0
        %2608 = vmatpush1.bf16.msra.mxu0 %v1124
        %2609 = vmatprep.subr.bf16.mxu0 0
        %2610 = vmatpush1.bf16.msra.mxu0 0
        %2611 = vmatprep.subr.bf16.mxu0 0
        %2612 = vmatpush1.bf16.msra.mxu0 0
        %2613 = vmatprep.subr.bf16.mxu0 0
        %2614 = vmatpush1.bf16.msra.mxu0 0
        %2615 = vmatprep.subr.bf16.mxu0 0
        %2616 = vmatpush1.bf16.msra.mxu0 0
        %2617 = vmatprep.subr.bf16.mxu0 0
        %2618 = vmatpush1.bf16.msra.mxu0 0
        %2619 = vmatprep.subr.bf16.mxu0 0
        %2620 = vmatpush1.bf16.msra.mxu0 0
        %2621 = vmatprep.subr.bf16.mxu0 0
        %2622 = vmatpush1.bf16.msra.mxu0 0
        %2623 = vmatprep.subr.bf16.mxu0 0
        %2624 = vmatpush1.bf16.msra.mxu0 0
        %2625 = vmatprep.subr.bf16.mxu0 0
        %2626 = vmatpush1.bf16.msra.mxu0 0
        %2627 = vmatprep.subr.bf16.mxu0 0
        %2628 = vmatpush1.bf16.msra.mxu0 0
        %2629 = vmatprep.subr.bf16.mxu0 0
        %2630 = vmatpush1.bf16.msra.mxu0 0
        %2631 = vmatprep.subr.bf16.mxu0 0
        %2632 = vmatpush1.bf16.msra.mxu0 0
        %2633 = vmatprep.subr.bf16.mxu0 0
        %2634 = vmatpush1.bf16.msra.mxu0 0
        %2635 = vmatprep.subr.bf16.mxu0 0
        %2636 = vmatpush1.bf16.msra.mxu0 0
        %2637 = vmatprep.mubr.bf16.mxu0 0
        %2638 = vmatmul.mubr.bf16.gmra.mrb[0].mxu0 %v2562
        %v2639 = vpop.f32.mrb[0].mxu0
        %v2640 = vadd.f32 %v1113, %v2639
        %v2641 = vpop.f32.mrb[0].mxu0
        %v2642 = vpop.f32.mrb[0].mxu0
        %v2643 = vpop.f32.mrb[0].mxu0
        %2644 = vdwg.mxu0
        %2645 = vmatprep.subr.bf16.mxu0 0
        %2646 = vmatpush1.bf16.msra.mxu0 %v1181
        %2647 = vmatprep.subr.bf16.mxu0 0
        %2648 = vmatpush1.bf16.msra.mxu0 %v1182
        %2649 = vmatprep.subr.bf16.mxu0 0
        %2650 = vmatpush1.bf16.msra.mxu0 0
        %2651 = vmatprep.subr.bf16.mxu0 0
        %2652 = vmatpush1.bf16.msra.mxu0 0
        %2653 = vmatprep.subr.bf16.mxu0 0
        %2654 = vmatpush1.bf16.msra.mxu0 0
        %2655 = vmatprep.subr.bf16.mxu0 0
        %2656 = vmatpush1.bf16.msra.mxu0 0
        %2657 = vmatprep.subr.bf16.mxu0 0
        %2658 = vmatpush1.bf16.msra.mxu0 0
        %2659 = vmatprep.subr.bf16.mxu0 0
        %2660 = vmatpush1.bf16.msra.mxu0 0
        %2661 = vmatprep.subr.bf16.mxu0 0
        %2662 = vmatpush1.bf16.msra.mxu0 0
        %2663 = vmatprep.subr.bf16.mxu0 0
        %2664 = vmatpush1.bf16.msra.mxu0 0
        %2665 = vmatprep.subr.bf16.mxu0 0
        %2666 = vmatpush1.bf16.msra.mxu0 0
        %2667 = vmatprep.subr.bf16.mxu0 0
        %2668 = vmatpush1.bf16.msra.mxu0 0
        %2669 = vmatprep.subr.bf16.mxu0 0
        %2670 = vmatpush1.bf16.msra.mxu0 0
        %2671 = vmatprep.subr.bf16.mxu0 0
        %2672 = vmatpush1.bf16.msra.mxu0 0
        %2673 = vmatprep.subr.bf16.mxu0 0
        %2674 = vmatpush1.bf16.msra.mxu0 0
        %2675 = vmatprep.subr.bf16.mxu0 0
        %2676 = vmatpush1.bf16.msra.mxu0 0
        %2677 = vmatprep.mubr.bf16.mxu0 0
        %2678 = vmatmul.mubr.bf16.gmra.mrb[0].mxu0 %v2562
        %v2679 = vpop.f32.mrb[0].mxu0
        %v2680 = vadd.f32 %v1171, %v2679
        %v2681 = vpop.f32.mrb[0].mxu0
        %v2682 = vpop.f32.mrb[0].mxu0
        %v2683 = vpop.f32.mrb[0].mxu0
        %2684 = vdwg.mxu0
        %2686 = vrot.lane.b32.xlu0 %v2604, 120
        %v2687 = vpop.permute.xlu0 %2686
        %2689 = vrot.lane.b32.xlu0 %v2604, 112
        %v2690 = vpop.permute.xlu0 %2689
        %2692 = vrot.lane.b32.xlu0 %v2604, 104
        %v2693 = vpop.permute.xlu0 %2692
        %v2695 = vcombine.low %v2604, %v2690
        %v2696 = vcombine.high %v2604, %v2690
        %v2698 = vunpack.c.l.s4 1983009808
        %v2699 = vunpack.c.0.s8 %v2698
        %v2700 = vlaneseq
        %v2701 = vshrl.u32 %v2700, 7
        %v2702 = vsub.s32 %v2699, %v2701
        %v2703 = vrot.slane %v2695, %v2702
        %v2705 = vunpack.c.l.s4 1983009808
        %v2706 = vunpack.c.0.s8 %v2705
        %v2707 = vlaneseq
        %v2708 = vshrl.u32 %v2707, 7
        %v2709 = vsub.s32 %v2706, %v2708
        %v2710 = vrot.slane %v2696, %v2709
        %v2711 = vcombine.low %v2687, %v2693
        %v2712 = vcombine.high %v2687, %v2693
        %v2714 = vunpack.c.l.s4 1983009808
        %v2715 = vunpack.c.0.s8 %v2714
        %v2716 = vlaneseq
        %v2717 = vshrl.u32 %v2716, 7
        %v2718 = vsub.s32 %v2715, %v2717
        %v2719 = vrot.slane %v2711, %v2718
        %v2721 = vunpack.c.l.s4 1983009808
        %v2722 = vunpack.c.0.s8 %v2721
        %v2723 = vlaneseq
        %v2724 = vshrl.u32 %v2723, 7
        %v2725 = vsub.s32 %v2722, %v2724
        %v2726 = vrot.slane %v2712, %v2725
        %v2727 = vcombine.low %v2703, %v2719
        %v2728 = vcombine.high %v2703, %v2719
        %v2730 = vunpack.c.l.s4 1934713408
        %v2731 = vunpack.c.0.s8 %v2730
        %v2732 = vlaneseq
        %v2733 = vshrl.u32 %v2732, 7
        %v2734 = vsub.s32 %v2731, %v2733
        %v2735 = vrot.slane %v2727, %v2734
        %v2737 = vunpack.c.l.s4 1934713408
        %v2738 = vunpack.c.0.s8 %v2737
        %v2739 = vlaneseq
        %v2740 = vshrl.u32 %v2739, 7
        %v2741 = vsub.s32 %v2738, %v2740
        %v2742 = vrot.slane %v2728, %v2741
        %v2743 = vcombine.low %v2710, %v2726
        %v2744 = vcombine.high %v2710, %v2726
        %v2746 = vunpack.c.l.s4 1934713408
        %v2747 = vunpack.c.0.s8 %v2746
        %v2748 = vlaneseq
        %v2749 = vshrl.u32 %v2748, 7
        %v2750 = vsub.s32 %v2747, %v2749
        %v2751 = vrot.slane %v2743, %v2750
        %v2753 = vunpack.c.l.s4 1934713408
        %v2754 = vunpack.c.0.s8 %v2753
        %v2755 = vlaneseq
        %v2756 = vshrl.u32 %v2755, 7
        %v2757 = vsub.s32 %v2754, %v2756
        %v2758 = vrot.slane %v2744, %v2757
        %v2759 = vcombine.high %v2735, 0.0
        %v2760 = vcombine.high %v2742, 0.0
        %v2761 = vcombine.high %v2751, 0.0
        %v2762 = vcombine.high %v2758, 0.0
        %v2763 = vcombine.low %v2735, %v2742
        %v2765 = vunpack.c.l.s4 1983009808
        %v2766 = vunpack.c.0.s8 %v2765
        %v2767 = vlaneseq
        %v2768 = vshrl.u32 %v2767, 7
        %v2769 = vsub.s32 %v2766, %v2768
        %v2770 = vrot.slane %v2763, %v2769
        %v2771 = vcombine.low %v2759, %v2760
        %v2773 = vunpack.c.l.s4 1983009808
        %v2774 = vunpack.c.0.s8 %v2773
        %v2775 = vlaneseq
        %v2776 = vshrl.u32 %v2775, 7
        %v2777 = vsub.s32 %v2774, %v2776
        %v2778 = vrot.slane %v2771, %v2777
        %v2779 = vcombine.low %v2751, %v2758
        %v2781 = vunpack.c.l.s4 1983009808
        %v2782 = vunpack.c.0.s8 %v2781
        %v2783 = vlaneseq
        %v2784 = vshrl.u32 %v2783, 7
        %v2785 = vsub.s32 %v2782, %v2784
        %v2786 = vrot.slane %v2779, %v2785
        %v2787 = vcombine.low %v2761, %v2762
        %v2789 = vunpack.c.l.s4 1983009808
        %v2790 = vunpack.c.0.s8 %v2789
        %v2791 = vlaneseq
        %v2792 = vshrl.u32 %v2791, 7
        %v2793 = vsub.s32 %v2790, %v2792
        %v2794 = vrot.slane %v2787, %v2793
        %v2795 = vcombine.low %v2770, %v2778
        %v2796 = vcombine.high %v2770, %v2778
        %v2798 = vunpack.c.l.s4 1934713408
        %v2799 = vunpack.c.0.s8 %v2798
        %v2800 = vlaneseq
        %v2801 = vshrl.u32 %v2800, 7
        %v2802 = vsub.s32 %v2799, %v2801
        %v2803 = vrot.slane %v2795, %v2802
        %v2805 = vunpack.c.l.s4 1934713408
        %v2806 = vunpack.c.0.s8 %v2805
        %v2807 = vlaneseq
        %v2808 = vshrl.u32 %v2807, 7
        %v2809 = vsub.s32 %v2806, %v2808
        %v2810 = vrot.slane %v2796, %v2809
        %v2811 = vcombine.low %v2786, %v2794
        %v2812 = vcombine.high %v2786, %v2794
        %v2814 = vunpack.c.l.s4 1934713408
        %v2815 = vunpack.c.0.s8 %v2814
        %v2816 = vlaneseq
        %v2817 = vshrl.u32 %v2816, 7
        %v2818 = vsub.s32 %v2815, %v2817
        %v2819 = vrot.slane %v2811, %v2818
        %v2821 = vunpack.c.l.s4 1934713408
        %v2822 = vunpack.c.0.s8 %v2821
        %v2823 = vlaneseq
        %v2824 = vshrl.u32 %v2823, 7
        %v2825 = vsub.s32 %v2822, %v2824
        %v2826 = vrot.slane %v2812, %v2825
        %v2827 = vcombine.low %v2803, %v2819
        %v2828 = vcombine.high %v2803, %v2819
        %v2829 = vcombine.low %v2810, %v2826
        %v2830 = vcombine.high %v2810, %v2826
        %v2831 = vpack.c.bf16 %v2827, %v2827
        %v2832 = vpack.c.bf16 %v2828, %v2828
        %v2833 = vpack.c.bf16 %v2829, %v2829
        %v2834 = vpack.c.bf16 %v2830, %v2830
        %2836 = vrot.lane.b32.xlu0 %v2640, 120
        %v2837 = vpop.permute.xlu0 %2836
        %2839 = vrot.lane.b32.xlu0 %v2640, 112
        %v2840 = vpop.permute.xlu0 %2839
        %2842 = vrot.lane.b32.xlu0 %v2640, 104
        %v2843 = vpop.permute.xlu0 %2842
        %v2845 = vcombine.low %v2640, %v2840
        %v2846 = vcombine.high %v2640, %v2840
        %v2848 = vunpack.c.l.s4 1983009808
        %v2849 = vunpack.c.0.s8 %v2848
        %v2850 = vlaneseq
        %v2851 = vshrl.u32 %v2850, 7
        %v2852 = vsub.s32 %v2849, %v2851
        %v2853 = vrot.slane %v2845, %v2852
        %v2855 = vunpack.c.l.s4 1983009808
        %v2856 = vunpack.c.0.s8 %v2855
        %v2857 = vlaneseq
        %v2858 = vshrl.u32 %v2857, 7
        %v2859 = vsub.s32 %v2856, %v2858
        %v2860 = vrot.slane %v2846, %v2859
        %v2861 = vcombine.low %v2837, %v2843
        %v2862 = vcombine.high %v2837, %v2843
        %v2864 = vunpack.c.l.s4 1983009808
        %v2865 = vunpack.c.0.s8 %v2864
        %v2866 = vlaneseq
        %v2867 = vshrl.u32 %v2866, 7
        %v2868 = vsub.s32 %v2865, %v2867
        %v2869 = vrot.slane %v2861, %v2868
        %v2871 = vunpack.c.l.s4 1983009808
        %v2872 = vunpack.c.0.s8 %v2871
        %v2873 = vlaneseq
        %v2874 = vshrl.u32 %v2873, 7
        %v2875 = vsub.s32 %v2872, %v2874
        %v2876 = vrot.slane %v2862, %v2875
        %v2877 = vcombine.low %v2853, %v2869
        %v2878 = vcombine.high %v2853, %v2869
        %v2880 = vunpack.c.l.s4 1934713408
        %v2881 = vunpack.c.0.s8 %v2880
        %v2882 = vlaneseq
        %v2883 = vshrl.u32 %v2882, 7
        %v2884 = vsub.s32 %v2881, %v2883
        %v2885 = vrot.slane %v2877, %v2884
        %v2887 = vunpack.c.l.s4 1934713408
        %v2888 = vunpack.c.0.s8 %v2887
        %v2889 = vlaneseq
        %v2890 = vshrl.u32 %v2889, 7
        %v2891 = vsub.s32 %v2888, %v2890
        %v2892 = vrot.slane %v2878, %v2891
        %v2893 = vcombine.low %v2860, %v2876
        %v2894 = vcombine.high %v2860, %v2876
        %v2896 = vunpack.c.l.s4 1934713408
        %v2897 = vunpack.c.0.s8 %v2896
        %v2898 = vlaneseq
        %v2899 = vshrl.u32 %v2898, 7
        %v2900 = vsub.s32 %v2897, %v2899
        %v2901 = vrot.slane %v2893, %v2900
        %v2903 = vunpack.c.l.s4 1934713408
        %v2904 = vunpack.c.0.s8 %v2903
        %v2905 = vlaneseq
        %v2906 = vshrl.u32 %v2905, 7
        %v2907 = vsub.s32 %v2904, %v2906
        %v2908 = vrot.slane %v2894, %v2907
        %v2909 = vcombine.high %v2885, 0.0
        %v2910 = vcombine.high %v2892, 0.0
        %v2911 = vcombine.high %v2901, 0.0
        %v2912 = vcombine.high %v2908, 0.0
        %v2913 = vcombine.low %v2885, %v2892
        %v2915 = vunpack.c.l.s4 1983009808
        %v2916 = vunpack.c.0.s8 %v2915
        %v2917 = vlaneseq
        %v2918 = vshrl.u32 %v2917, 7
        %v2919 = vsub.s32 %v2916, %v2918
        %v2920 = vrot.slane %v2913, %v2919
        %v2921 = vcombine.low %v2909, %v2910
        %v2923 = vunpack.c.l.s4 1983009808
        %v2924 = vunpack.c.0.s8 %v2923
        %v2925 = vlaneseq
        %v2926 = vshrl.u32 %v2925, 7
        %v2927 = vsub.s32 %v2924, %v2926
        %v2928 = vrot.slane %v2921, %v2927
        %v2929 = vcombine.low %v2901, %v2908
        %v2931 = vunpack.c.l.s4 1983009808
        %v2932 = vunpack.c.0.s8 %v2931
        %v2933 = vlaneseq
        %v2934 = vshrl.u32 %v2933, 7
        %v2935 = vsub.s32 %v2932, %v2934
        %v2936 = vrot.slane %v2929, %v2935
        %v2937 = vcombine.low %v2911, %v2912
        %v2939 = vunpack.c.l.s4 1983009808
        %v2940 = vunpack.c.0.s8 %v2939
        %v2941 = vlaneseq
        %v2942 = vshrl.u32 %v2941, 7
        %v2943 = vsub.s32 %v2940, %v2942
        %v2944 = vrot.slane %v2937, %v2943
        %v2945 = vcombine.low %v2920, %v2928
        %v2946 = vcombine.high %v2920, %v2928
        %v2948 = vunpack.c.l.s4 1934713408
        %v2949 = vunpack.c.0.s8 %v2948
        %v2950 = vlaneseq
        %v2951 = vshrl.u32 %v2950, 7
        %v2952 = vsub.s32 %v2949, %v2951
        %v2953 = vrot.slane %v2945, %v2952
        %v2955 = vunpack.c.l.s4 1934713408
        %v2956 = vunpack.c.0.s8 %v2955
        %v2957 = vlaneseq
        %v2958 = vshrl.u32 %v2957, 7
        %v2959 = vsub.s32 %v2956, %v2958
        %v2960 = vrot.slane %v2946, %v2959
        %v2961 = vcombine.low %v2936, %v2944
        %v2962 = vcombine.high %v2936, %v2944
        %v2964 = vunpack.c.l.s4 1934713408
        %v2965 = vunpack.c.0.s8 %v2964
        %v2966 = vlaneseq
        %v2967 = vshrl.u32 %v2966, 7
        %v2968 = vsub.s32 %v2965, %v2967
        %v2969 = vrot.slane %v2961, %v2968
        %v2971 = vunpack.c.l.s4 1934713408
        %v2972 = vunpack.c.0.s8 %v2971
        %v2973 = vlaneseq
        %v2974 = vshrl.u32 %v2973, 7
        %v2975 = vsub.s32 %v2972, %v2974
        %v2976 = vrot.slane %v2962, %v2975
        %v2977 = vcombine.low %v2953, %v2969
        %v2978 = vcombine.high %v2953, %v2969
        %v2979 = vcombine.low %v2960, %v2976
        %v2980 = vcombine.high %v2960, %v2976
        %v2981 = vpack.c.bf16 %v2977, %v2977
        %v2982 = vpack.c.bf16 %v2978, %v2978
        %v2983 = vpack.c.bf16 %v2979, %v2979
        %v2984 = vpack.c.bf16 %v2980, %v2980
        %2986 = vrot.lane.b32.xlu0 %v2680, 120
        %v2987 = vpop.permute.xlu0 %2986
        %2989 = vrot.lane.b32.xlu0 %v2680, 112
        %v2990 = vpop.permute.xlu0 %2989
        %2992 = vrot.lane.b32.xlu0 %v2680, 104
        %v2993 = vpop.permute.xlu0 %2992
        %v2995 = vcombine.low %v2680, %v2990
        %v2996 = vcombine.high %v2680, %v2990
        %v2998 = vunpack.c.l.s4 1983009808
        %v2999 = vunpack.c.0.s8 %v2998
        %v3000 = vlaneseq
        %v3001 = vshrl.u32 %v3000, 7
        %v3002 = vsub.s32 %v2999, %v3001
        %v3003 = vrot.slane %v2995, %v3002
        %v3005 = vunpack.c.l.s4 1983009808
        %v3006 = vunpack.c.0.s8 %v3005
        %v3007 = vlaneseq
        %v3008 = vshrl.u32 %v3007, 7
        %v3009 = vsub.s32 %v3006, %v3008
        %v3010 = vrot.slane %v2996, %v3009
        %v3011 = vcombine.low %v2987, %v2993
        %v3012 = vcombine.high %v2987, %v2993
        %v3014 = vunpack.c.l.s4 1983009808
        %v3015 = vunpack.c.0.s8 %v3014
        %v3016 = vlaneseq
        %v3017 = vshrl.u32 %v3016, 7
        %v3018 = vsub.s32 %v3015, %v3017
        %v3019 = vrot.slane %v3011, %v3018
        %v3021 = vunpack.c.l.s4 1983009808
        %v3022 = vunpack.c.0.s8 %v3021
        %v3023 = vlaneseq
        %v3024 = vshrl.u32 %v3023, 7
        %v3025 = vsub.s32 %v3022, %v3024
        %v3026 = vrot.slane %v3012, %v3025
        %v3027 = vcombine.low %v3003, %v3019
        %v3028 = vcombine.high %v3003, %v3019
        %v3030 = vunpack.c.l.s4 1934713408
        %v3031 = vunpack.c.0.s8 %v3030
        %v3032 = vlaneseq
        %v3033 = vshrl.u32 %v3032, 7
        %v3034 = vsub.s32 %v3031, %v3033
        %v3035 = vrot.slane %v3027, %v3034
        %v3037 = vunpack.c.l.s4 1934713408
        %v3038 = vunpack.c.0.s8 %v3037
        %v3039 = vlaneseq
        %v3040 = vshrl.u32 %v3039, 7
        %v3041 = vsub.s32 %v3038, %v3040
        %v3042 = vrot.slane %v3028, %v3041
        %v3043 = vcombine.low %v3010, %v3026
        %v3044 = vcombine.high %v3010, %v3026
        %v3046 = vunpack.c.l.s4 1934713408
        %v3047 = vunpack.c.0.s8 %v3046
        %v3048 = vlaneseq
        %v3049 = vshrl.u32 %v3048, 7
        %v3050 = vsub.s32 %v3047, %v3049
        %v3051 = vrot.slane %v3043, %v3050
        %v3053 = vunpack.c.l.s4 1934713408
        %v3054 = vunpack.c.0.s8 %v3053
        %v3055 = vlaneseq
        %v3056 = vshrl.u32 %v3055, 7
        %v3057 = vsub.s32 %v3054, %v3056
        %v3058 = vrot.slane %v3044, %v3057
        %v3059 = vcombine.high %v3035, 0.0
        %v3060 = vcombine.high %v3042, 0.0
        %v3061 = vcombine.high %v3051, 0.0
        %v3062 = vcombine.high %v3058, 0.0
        %v3063 = vcombine.low %v3035, %v3042
        %v3065 = vunpack.c.l.s4 1983009808
        %v3066 = vunpack.c.0.s8 %v3065
        %v3067 = vlaneseq
        %v3068 = vshrl.u32 %v3067, 7
        %v3069 = vsub.s32 %v3066, %v3068
        %v3070 = vrot.slane %v3063, %v3069
        %v3071 = vcombine.low %v3059, %v3060
        %v3073 = vunpack.c.l.s4 1983009808
        %v3074 = vunpack.c.0.s8 %v3073
        %v3075 = vlaneseq
        %v3076 = vshrl.u32 %v3075, 7
        %v3077 = vsub.s32 %v3074, %v3076
        %v3078 = vrot.slane %v3071, %v3077
        %v3079 = vcombine.low %v3051, %v3058
        %v3081 = vunpack.c.l.s4 1983009808
        %v3082 = vunpack.c.0.s8 %v3081
        %v3083 = vlaneseq
        %v3084 = vshrl.u32 %v3083, 7
        %v3085 = vsub.s32 %v3082, %v3084
        %v3086 = vrot.slane %v3079, %v3085
        %v3087 = vcombine.low %v3061, %v3062
        %v3089 = vunpack.c.l.s4 1983009808
        %v3090 = vunpack.c.0.s8 %v3089
        %v3091 = vlaneseq
        %v3092 = vshrl.u32 %v3091, 7
        %v3093 = vsub.s32 %v3090, %v3092
        %v3094 = vrot.slane %v3087, %v3093
        %v3095 = vcombine.low %v3070, %v3078
        %v3096 = vcombine.high %v3070, %v3078
        %v3098 = vunpack.c.l.s4 1934713408
        %v3099 = vunpack.c.0.s8 %v3098
        %v3100 = vlaneseq
        %v3101 = vshrl.u32 %v3100, 7
        %v3102 = vsub.s32 %v3099, %v3101
        %v3103 = vrot.slane %v3095, %v3102
        %v3105 = vunpack.c.l.s4 1934713408
        %v3106 = vunpack.c.0.s8 %v3105
        %v3107 = vlaneseq
        %v3108 = vshrl.u32 %v3107, 7
        %v3109 = vsub.s32 %v3106, %v3108
        %v3110 = vrot.slane %v3096, %v3109
        %v3111 = vcombine.low %v3086, %v3094
        %v3112 = vcombine.high %v3086, %v3094
        %v3114 = vunpack.c.l.s4 1934713408
        %v3115 = vunpack.c.0.s8 %v3114
        %v3116 = vlaneseq
        %v3117 = vshrl.u32 %v3116, 7
        %v3118 = vsub.s32 %v3115, %v3117
        %v3119 = vrot.slane %v3111, %v3118
        %v3121 = vunpack.c.l.s4 1934713408
        %v3122 = vunpack.c.0.s8 %v3121
        %v3123 = vlaneseq
        %v3124 = vshrl.u32 %v3123, 7
        %v3125 = vsub.s32 %v3122, %v3124
        %v3126 = vrot.slane %v3112, %v3125
        %v3127 = vcombine.low %v3103, %v3119
        %v3128 = vcombine.high %v3103, %v3119
        %v3129 = vcombine.low %v3110, %v3126
        %v3130 = vcombine.high %v3110, %v3126
        %v3131 = vpack.c.bf16 %v3127, %v3127
        %v3132 = vpack.c.bf16 %v3128, %v3128
        %v3133 = vpack.c.bf16 %v3129, %v3129
        %v3134 = vpack.c.bf16 %v3130, %v3130
        %v3135 = vld [vmem:[#allocation3] sm:$0xff]
        %v3137 = vsel %vm1676, %v2831, 0
        %v3140 = vsel %vm1676, %v2981, 0
        %3142 = vmatprep.subr.bf16.mxu0 0
        %3143 = vmatpush1.bf16.xpose.msra.mxu0 %v3140
        %3144 = vmatprep.subr.bf16.mxu0 0
        %3145 = vmatpush1.bf16.xpose.msra.mxu0 0
        %3146 = vmatprep.subr.bf16.mxu0 0
        %3147 = vmatpush1.bf16.xpose.msra.mxu0 0
        %3148 = vmatprep.subr.bf16.mxu0 0
        %3149 = vmatpush1.bf16.xpose.msra.mxu0 0
        %3150 = vmatprep.subr.bf16.mxu0 0
        %3151 = vmatpush1.bf16.xpose.msra.mxu0 0
        %3152 = vmatprep.subr.bf16.mxu0 0
        %3153 = vmatpush1.bf16.xpose.msra.mxu0 0
        %3154 = vmatprep.subr.bf16.mxu0 0
        %3155 = vmatpush1.bf16.xpose.msra.mxu0 0
        %3156 = vmatprep.subr.bf16.mxu0 0
        %3157 = vmatpush1.bf16.xpose.msra.mxu0 0
        %3158 = vmatprep.subr.bf16.mxu0 0
        %3159 = vmatpush1.bf16.xpose.msra.mxu0 0
        %3160 = vmatprep.subr.bf16.mxu0 0
        %3161 = vmatpush1.bf16.xpose.msra.mxu0 0
        %3162 = vmatprep.subr.bf16.mxu0 0
        %3163 = vmatpush1.bf16.xpose.msra.mxu0 0
        %3164 = vmatprep.subr.bf16.mxu0 0
        %3165 = vmatpush1.bf16.xpose.msra.mxu0 0
        %3166 = vmatprep.subr.bf16.mxu0 0
        %3167 = vmatpush1.bf16.xpose.msra.mxu0 0
        %3168 = vmatprep.subr.bf16.mxu0 0
        %3169 = vmatpush1.bf16.xpose.msra.mxu0 0
        %3170 = vmatprep.subr.bf16.mxu0 0
        %3171 = vmatpush1.bf16.xpose.msra.mxu0 0
        %3172 = vmatprep.subr.bf16.mxu0 0
        %3173 = vmatpush1.bf16.xpose.msra.mxu0 0
        %3174 = vmatprep.mubr.bf16.mxu0 0
        %3175 = vmatmul.mubr.bf16.gmra.mrb[0].mxu0 %v3137
        %v3176 = vpop.f32.mrb[0].mxu0
        %v3177 = vadd.f32 %v3135, %v3176
        %v3178 = vpop.f32.mrb[0].mxu0
        %v3179 = vpop.f32.mrb[0].mxu0
        %v3180 = vpop.f32.mrb[0].mxu0
        %3181 = vdwg.mxu0
        %v3183 = vsel %vm1676, %v2832, 0
        %v3186 = vsel %vm1676, %v2982, 0
        %3188 = vmatprep.subr.bf16.mxu0 0
        %3189 = vmatpush1.bf16.xpose.msra.mxu0 %v3186
        %3190 = vmatprep.subr.bf16.mxu0 0
        %3191 = vmatpush1.bf16.xpose.msra.mxu0 0
        %3192 = vmatprep.subr.bf16.mxu0 0
        %3193 = vmatpush1.bf16.xpose.msra.mxu0 0
        %3194 = vmatprep.subr.bf16.mxu0 0
        %3195 = vmatpush1.bf16.xpose.msra.mxu0 0
        %3196 = vmatprep.subr.bf16.mxu0 0
        %3197 = vmatpush1.bf16.xpose.msra.mxu0 0
        %3198 = vmatprep.subr.bf16.mxu0 0
        %3199 = vmatpush1.bf16.xpose.msra.mxu0 0
        %3200 = vmatprep.subr.bf16.mxu0 0
        %3201 = vmatpush1.bf16.xpose.msra.mxu0 0
        %3202 = vmatprep.subr.bf16.mxu0 0
        %3203 = vmatpush1.bf16.xpose.msra.mxu0 0
        %3204 = vmatprep.subr.bf16.mxu0 0
        %3205 = vmatpush1.bf16.xpose.msra.mxu0 0
        %3206 = vmatprep.subr.bf16.mxu0 0
        %3207 = vmatpush1.bf16.xpose.msra.mxu0 0
        %3208 = vmatprep.subr.bf16.mxu0 0
        %3209 = vmatpush1.bf16.xpose.msra.mxu0 0
        %3210 = vmatprep.subr.bf16.mxu0 0
        %3211 = vmatpush1.bf16.xpose.msra.mxu0 0
        %3212 = vmatprep.subr.bf16.mxu0 0
        %3213 = vmatpush1.bf16.xpose.msra.mxu0 0
        %3214 = vmatprep.subr.bf16.mxu0 0
        %3215 = vmatpush1.bf16.xpose.msra.mxu0 0
        %3216 = vmatprep.subr.bf16.mxu0 0
        %3217 = vmatpush1.bf16.xpose.msra.mxu0 0
        %3218 = vmatprep.subr.bf16.mxu0 0
        %3219 = vmatpush1.bf16.xpose.msra.mxu0 0
        %3220 = vmatprep.mubr.bf16.mxu0 0
        %3221 = vmatmul.mubr.bf16.gmra.mrb[0].mxu0 %v3183
        %v3222 = vpop.f32.mrb[0].mxu0
        %v3223 = vadd.f32 %v3135, %v3222
        %v3224 = vpop.f32.mrb[0].mxu0
        %v3225 = vpop.f32.mrb[0].mxu0
        %v3226 = vpop.f32.mrb[0].mxu0
        %3227 = vdwg.mxu0
        %v3229 = vsel %vm1676, %v2833, 0
        %v3232 = vsel %vm1676, %v2983, 0
        %3234 = vmatprep.subr.bf16.mxu0 0
        %3235 = vmatpush1.bf16.xpose.msra.mxu0 %v3232
        %3236 = vmatprep.subr.bf16.mxu0 0
        %3237 = vmatpush1.bf16.xpose.msra.mxu0 0
        %3238 = vmatprep.subr.bf16.mxu0 0
        %3239 = vmatpush1.bf16.xpose.msra.mxu0 0
        %3240 = vmatprep.subr.bf16.mxu0 0
        %3241 = vmatpush1.bf16.xpose.msra.mxu0 0
        %3242 = vmatprep.subr.bf16.mxu0 0
        %3243 = vmatpush1.bf16.xpose.msra.mxu0 0
        %3244 = vmatprep.subr.bf16.mxu0 0
        %3245 = vmatpush1.bf16.xpose.msra.mxu0 0
        %3246 = vmatprep.subr.bf16.mxu0 0
        %3247 = vmatpush1.bf16.xpose.msra.mxu0 0
        %3248 = vmatprep.subr.bf16.mxu0 0
        %3249 = vmatpush1.bf16.xpose.msra.mxu0 0
        %3250 = vmatprep.subr.bf16.mxu0 0
        %3251 = vmatpush1.bf16.xpose.msra.mxu0 0
        %3252 = vmatprep.subr.bf16.mxu0 0
        %3253 = vmatpush1.bf16.xpose.msra.mxu0 0
        %3254 = vmatprep.subr.bf16.mxu0 0
        %3255 = vmatpush1.bf16.xpose.msra.mxu0 0
        %3256 = vmatprep.subr.bf16.mxu0 0
        %3257 = vmatpush1.bf16.xpose.msra.mxu0 0
        %3258 = vmatprep.subr.bf16.mxu0 0
        %3259 = vmatpush1.bf16.xpose.msra.mxu0 0
        %3260 = vmatprep.subr.bf16.mxu0 0
        %3261 = vmatpush1.bf16.xpose.msra.mxu0 0
        %3262 = vmatprep.subr.bf16.mxu0 0
        %3263 = vmatpush1.bf16.xpose.msra.mxu0 0
        %3264 = vmatprep.subr.bf16.mxu0 0
        %3265 = vmatpush1.bf16.xpose.msra.mxu0 0
        %3266 = vmatprep.mubr.bf16.mxu0 0
        %3267 = vmatmul.mubr.bf16.gmra.mrb[0].mxu0 %v3229
        %v3268 = vpop.f32.mrb[0].mxu0
        %v3269 = vadd.f32 %v3135, %v3268
        %v3270 = vpop.f32.mrb[0].mxu0
        %v3271 = vpop.f32.mrb[0].mxu0
        %v3272 = vpop.f32.mrb[0].mxu0
        %3273 = vdwg.mxu0
        %v3275 = vsel %vm1676, %v2834, 0
        %v3278 = vsel %vm1676, %v2984, 0
        %3280 = vmatprep.subr.bf16.mxu0 0
        %3281 = vmatpush1.bf16.xpose.msra.mxu0 %v3278
        %3282 = vmatprep.subr.bf16.mxu0 0
        %3283 = vmatpush1.bf16.xpose.msra.mxu0 0
        %3284 = vmatprep.subr.bf16.mxu0 0
        %3285 = vmatpush1.bf16.xpose.msra.mxu0 0
        %3286 = vmatprep.subr.bf16.mxu0 0
        %3287 = vmatpush1.bf16.xpose.msra.mxu0 0
        %3288 = vmatprep.subr.bf16.mxu0 0
        %3289 = vmatpush1.bf16.xpose.msra.mxu0 0
        %3290 = vmatprep.subr.bf16.mxu0 0
        %3291 = vmatpush1.bf16.xpose.msra.mxu0 0
        %3292 = vmatprep.subr.bf16.mxu0 0
        %3293 = vmatpush1.bf16.xpose.msra.mxu0 0
        %3294 = vmatprep.subr.bf16.mxu0 0
        %3295 = vmatpush1.bf16.xpose.msra.mxu0 0
        %3296 = vmatprep.subr.bf16.mxu0 0
        %3297 = vmatpush1.bf16.xpose.msra.mxu0 0
        %3298 = vmatprep.subr.bf16.mxu0 0
        %3299 = vmatpush1.bf16.xpose.msra.mxu0 0
        %3300 = vmatprep.subr.bf16.mxu0 0
        %3301 = vmatpush1.bf16.xpose.msra.mxu0 0
        %3302 = vmatprep.subr.bf16.mxu0 0
        %3303 = vmatpush1.bf16.xpose.msra.mxu0 0
        %3304 = vmatprep.subr.bf16.mxu0 0
        %3305 = vmatpush1.bf16.xpose.msra.mxu0 0
        %3306 = vmatprep.subr.bf16.mxu0 0
        %3307 = vmatpush1.bf16.xpose.msra.mxu0 0
        %3308 = vmatprep.subr.bf16.mxu0 0
        %3309 = vmatpush1.bf16.xpose.msra.mxu0 0
        %3310 = vmatprep.subr.bf16.mxu0 0
        %3311 = vmatpush1.bf16.xpose.msra.mxu0 0
        %3312 = vmatprep.mubr.bf16.mxu0 0
        %3313 = vmatmul.mubr.bf16.gmra.mrb[0].mxu0 %v3275
        %v3314 = vpop.f32.mrb[0].mxu0
        %v3315 = vadd.f32 %v3135, %v3314
        %v3316 = vpop.f32.mrb[0].mxu0
        %v3317 = vpop.f32.mrb[0].mxu0
        %v3318 = vpop.f32.mrb[0].mxu0
        %3319 = vdwg.mxu0
        %v3321 = vlaneseq
        %v3322 = vshrl.u32 %v3321, 7
        %v3323 = vsub.s32 0, %v3322
        %v3324 = vrot.slane %v2559, %v3323
        %v3326 = vadd.f32 %v3177, %v3324
        %v3327 = vadd.f32 %v3223, %v3324
        %v3328 = vadd.f32 %v3269, %v3324
        %v3329 = vadd.f32 %v3315, %v3324
        %v3330 = vsel %vm1676, %v3326, -inf
        %3331 = vmax.xlane.f32.xlu0 %v3330
        %v3332 = vpop.xlane.xlu0 %3331
        %v3333 = vsel %vm1676, %v3327, -inf
        %3334 = vmax.xlane.f32.xlu0 %v3333
        %v3335 = vpop.xlane.xlu0 %3334
        %v3336 = vsel %vm1676, %v3328, -inf
        %3337 = vmax.xlane.f32.xlu0 %v3336
        %v3338 = vpop.xlane.xlu0 %3337
        %v3339 = vsel %vm1676, %v3329, -inf
        %3340 = vmax.xlane.f32.xlu0 %v3339
        %v3341 = vpop.xlane.xlu0 %3340
        %v3342 = vsub.f32 %v3326, %v3332
        %v3343 = vsub.f32 %v3327, %v3335
        %v3344 = vsub.f32 %v3328, %v3338
        %v3345 = vsub.f32 %v3329, %v3341
        %v3346 = vmul.f32 %v3342, 1.442695
        %v3347 = vpow.pop %v3346
        %v3348 = vmul.f32 %v3343, 1.442695
        %v3349 = vpow.pop %v3348
        %v3350 = vmul.f32 %v3344, 1.442695
        %v3351 = vpow.pop %v3350
        %v3352 = vmul.f32 %v3345, 1.442695
        %v3353 = vpow.pop %v3352
        %v3354 = vsel %vm1676, %v3347, 0.0
        %3355 = vadd.xlane.f32.xlu0 %v3354
        %v3356 = vpop.xlane.xlu0 %3355
        %v3357 = vsel %vm1676, %v3349, 0.0
        %3358 = vadd.xlane.f32.xlu0 %v3357
        %v3359 = vpop.xlane.xlu0 %3358
        %v3360 = vsel %vm1676, %v3351, 0.0
        %3361 = vadd.xlane.f32.xlu0 %v3360
        %v3362 = vpop.xlane.xlu0 %3361
        %v3363 = vsel %vm1676, %v3353, 0.0
        %3364 = vadd.xlane.f32.xlu0 %v3363
        %v3365 = vpop.xlane.xlu0 %3364
        %v3366 = vrcp.pop %v3356
        %v3367 = vrcp.pop %v3359
        %v3368 = vrcp.pop %v3362
        %v3369 = vrcp.pop %v3365
        %v3370 = vmul.f32 %v3347, %v3366
        %v3371 = vmul.f32 %v3349, %v3367
        %v3372 = vmul.f32 %v3351, %v3368
        %v3373 = vmul.f32 %v3353, %v3369
        %v3374 = vpack.c.bf16 %v3370, %v3370
        %v3375 = vpack.c.bf16 %v3371, %v3371
        %v3376 = vpack.c.bf16 %v3372, %v3372
        %v3377 = vpack.c.bf16 %v3373, %v3373
        %v3379 = vsel %vm1676, %v3374, 0
        %v3382 = vsel %vm1922, %v3131, 0
        %3384 = vmatprep.subr.bf16.mxu0 0
        %3385 = vmatpush1.bf16.msra.mxu0 %v3382
        %3386 = vmatprep.subr.bf16.mxu0 0
        %3387 = vmatpush1.bf16.msra.mxu0 0
        %3388 = vmatprep.subr.bf16.mxu0 0
        %3389 = vmatpush1.bf16.msra.mxu0 0
        %3390 = vmatprep.subr.bf16.mxu0 0
        %3391 = vmatpush1.bf16.msra.mxu0 0
        %3392 = vmatprep.subr.bf16.mxu0 0
        %3393 = vmatpush1.bf16.msra.mxu0 0
        %3394 = vmatprep.subr.bf16.mxu0 0
        %3395 = vmatpush1.bf16.msra.mxu0 0
        %3396 = vmatprep.subr.bf16.mxu0 0
        %3397 = vmatpush1.bf16.msra.mxu0 0
        %3398 = vmatprep.subr.bf16.mxu0 0
        %3399 = vmatpush1.bf16.msra.mxu0 0
        %3400 = vmatprep.subr.bf16.mxu0 0
        %3401 = vmatpush1.bf16.msra.mxu0 0
        %3402 = vmatprep.subr.bf16.mxu0 0
        %3403 = vmatpush1.bf16.msra.mxu0 0
        %3404 = vmatprep.subr.bf16.mxu0 0
        %3405 = vmatpush1.bf16.msra.mxu0 0
        %3406 = vmatprep.subr.bf16.mxu0 0
        %3407 = vmatpush1.bf16.msra.mxu0 0
        %3408 = vmatprep.subr.bf16.mxu0 0
        %3409 = vmatpush1.bf16.msra.mxu0 0
        %3410 = vmatprep.subr.bf16.mxu0 0
        %3411 = vmatpush1.bf16.msra.mxu0 0
        %3412 = vmatprep.subr.bf16.mxu0 0
        %3413 = vmatpush1.bf16.msra.mxu0 0
        %3414 = vmatprep.subr.bf16.mxu0 0
        %3415 = vmatpush1.bf16.msra.mxu0 0
        %3416 = vmatprep.mubr.bf16.mxu0 0
        %3417 = vmatmul.mubr.bf16.gmra.mrb[0].mxu0 %v3379
        %v3418 = vpop.f32.mrb[0].mxu0
        %v3419 = vadd.f32 0.0, %v3418
        %v3420 = vpop.f32.mrb[0].mxu0
        %v3421 = vpop.f32.mrb[0].mxu0
        %v3422 = vpop.f32.mrb[0].mxu0
        %3423 = vdwg.mxu0
        %v3425 = vsel %vm1676, %v3375, 0
        %v3428 = vsel %vm1922, %v3132, 0
        %3430 = vmatprep.subr.bf16.mxu0 0
        %3431 = vmatpush1.bf16.msra.mxu0 %v3428
        %3432 = vmatprep.subr.bf16.mxu0 0
        %3433 = vmatpush1.bf16.msra.mxu0 0
        %3434 = vmatprep.subr.bf16.mxu0 0
        %3435 = vmatpush1.bf16.msra.mxu0 0
        %3436 = vmatprep.subr.bf16.mxu0 0
        %3437 = vmatpush1.bf16.msra.mxu0 0
        %3438 = vmatprep.subr.bf16.mxu0 0
        %3439 = vmatpush1.bf16.msra.mxu0 0
        %3440 = vmatprep.subr.bf16.mxu0 0
        %3441 = vmatpush1.bf16.msra.mxu0 0
        %3442 = vmatprep.subr.bf16.mxu0 0
        %3443 = vmatpush1.bf16.msra.mxu0 0
        %3444 = vmatprep.subr.bf16.mxu0 0
        %3445 = vmatpush1.bf16.msra.mxu0 0
        %3446 = vmatprep.subr.bf16.mxu0 0
        %3447 = vmatpush1.bf16.msra.mxu0 0
        %3448 = vmatprep.subr.bf16.mxu0 0
        %3449 = vmatpush1.bf16.msra.mxu0 0
        %3450 = vmatprep.subr.bf16.mxu0 0
        %3451 = vmatpush1.bf16.msra.mxu0 0
        %3452 = vmatprep.subr.bf16.mxu0 0
        %3453 = vmatpush1.bf16.msra.mxu0 0
        %3454 = vmatprep.subr.bf16.mxu0 0
        %3455 = vmatpush1.bf16.msra.mxu0 0
        %3456 = vmatprep.subr.bf16.mxu0 0
        %3457 = vmatpush1.bf16.msra.mxu0 0
        %3458 = vmatprep.subr.bf16.mxu0 0
        %3459 = vmatpush1.bf16.msra.mxu0 0
        %3460 = vmatprep.subr.bf16.mxu0 0
        %3461 = vmatpush1.bf16.msra.mxu0 0
        %3462 = vmatprep.mubr.bf16.mxu0 0
        %3463 = vmatmul.mubr.bf16.gmra.mrb[0].mxu0 %v3425
        %v3464 = vpop.f32.mrb[0].mxu0
        %v3465 = vadd.f32 0.0, %v3464
        %v3466 = vpop.f32.mrb[0].mxu0
        %v3467 = vpop.f32.mrb[0].mxu0
        %v3468 = vpop.f32.mrb[0].mxu0
        %3469 = vdwg.mxu0
        %v3471 = vsel %vm1676, %v3376, 0
        %v3474 = vsel %vm1922, %v3133, 0
        %3476 = vmatprep.subr.bf16.mxu0 0
        %3477 = vmatpush1.bf16.msra.mxu0 %v3474
        %3478 = vmatprep.subr.bf16.mxu0 0
        %3479 = vmatpush1.bf16.msra.mxu0 0
        %3480 = vmatprep.subr.bf16.mxu0 0
        %3481 = vmatpush1.bf16.msra.mxu0 0
        %3482 = vmatprep.subr.bf16.mxu0 0
        %3483 = vmatpush1.bf16.msra.mxu0 0
        %3484 = vmatprep.subr.bf16.mxu0 0
        %3485 = vmatpush1.bf16.msra.mxu0 0
        %3486 = vmatprep.subr.bf16.mxu0 0
        %3487 = vmatpush1.bf16.msra.mxu0 0
        %3488 = vmatprep.subr.bf16.mxu0 0
        %3489 = vmatpush1.bf16.msra.mxu0 0
        %3490 = vmatprep.subr.bf16.mxu0 0
        %3491 = vmatpush1.bf16.msra.mxu0 0
        %3492 = vmatprep.subr.bf16.mxu0 0
        %3493 = vmatpush1.bf16.msra.mxu0 0
        %3494 = vmatprep.subr.bf16.mxu0 0
        %3495 = vmatpush1.bf16.msra.mxu0 0
        %3496 = vmatprep.subr.bf16.mxu0 0
        %3497 = vmatpush1.bf16.msra.mxu0 0
        %3498 = vmatprep.subr.bf16.mxu0 0
        %3499 = vmatpush1.bf16.msra.mxu0 0
        %3500 = vmatprep.subr.bf16.mxu0 0
        %3501 = vmatpush1.bf16.msra.mxu0 0
        %3502 = vmatprep.subr.bf16.mxu0 0
        %3503 = vmatpush1.bf16.msra.mxu0 0
        %3504 = vmatprep.subr.bf16.mxu0 0
        %3505 = vmatpush1.bf16.msra.mxu0 0
        %3506 = vmatprep.subr.bf16.mxu0 0
        %3507 = vmatpush1.bf16.msra.mxu0 0
        %3508 = vmatprep.mubr.bf16.mxu0 0
        %3509 = vmatmul.mubr.bf16.gmra.mrb[0].mxu0 %v3471
        %v3510 = vpop.f32.mrb[0].mxu0
        %v3511 = vadd.f32 0.0, %v3510
        %v3512 = vpop.f32.mrb[0].mxu0
        %v3513 = vpop.f32.mrb[0].mxu0
        %v3514 = vpop.f32.mrb[0].mxu0
        %3515 = vdwg.mxu0
        %v3517 = vsel %vm1676, %v3377, 0
        %v3520 = vsel %vm1922, %v3134, 0
        %3522 = vmatprep.subr.bf16.mxu0 0
        %3523 = vmatpush1.bf16.msra.mxu0 %v3520
        %3524 = vmatprep.subr.bf16.mxu0 0
        %3525 = vmatpush1.bf16.msra.mxu0 0
        %3526 = vmatprep.subr.bf16.mxu0 0
        %3527 = vmatpush1.bf16.msra.mxu0 0
        %3528 = vmatprep.subr.bf16.mxu0 0
        %3529 = vmatpush1.bf16.msra.mxu0 0
        %3530 = vmatprep.subr.bf16.mxu0 0
        %3531 = vmatpush1.bf16.msra.mxu0 0
        %3532 = vmatprep.subr.bf16.mxu0 0
        %3533 = vmatpush1.bf16.msra.mxu0 0
        %3534 = vmatprep.subr.bf16.mxu0 0
        %3535 = vmatpush1.bf16.msra.mxu0 0
        %3536 = vmatprep.subr.bf16.mxu0 0
        %3537 = vmatpush1.bf16.msra.mxu0 0
        %3538 = vmatprep.subr.bf16.mxu0 0
        %3539 = vmatpush1.bf16.msra.mxu0 0
        %3540 = vmatprep.subr.bf16.mxu0 0
        %3541 = vmatpush1.bf16.msra.mxu0 0
        %3542 = vmatprep.subr.bf16.mxu0 0
        %3543 = vmatpush1.bf16.msra.mxu0 0
        %3544 = vmatprep.subr.bf16.mxu0 0
        %3545 = vmatpush1.bf16.msra.mxu0 0
        %3546 = vmatprep.subr.bf16.mxu0 0
        %3547 = vmatpush1.bf16.msra.mxu0 0
        %3548 = vmatprep.subr.bf16.mxu0 0
        %3549 = vmatpush1.bf16.msra.mxu0 0
        %3550 = vmatprep.subr.bf16.mxu0 0
        %3551 = vmatpush1.bf16.msra.mxu0 0
        %3552 = vmatprep.subr.bf16.mxu0 0
        %3553 = vmatpush1.bf16.msra.mxu0 0
        %3554 = vmatprep.mubr.bf16.mxu0 0
        %3555 = vmatmul.mubr.bf16.gmra.mrb[0].mxu0 %v3517
        %v3556 = vpop.f32.mrb[0].mxu0
        %v3557 = vadd.f32 0.0, %v3556
        %v3558 = vpop.f32.mrb[0].mxu0
        %v3559 = vpop.f32.mrb[0].mxu0
        %v3560 = vpop.f32.mrb[0].mxu0
        %3561 = vdwg.mxu0
        %v3562 = vcombine.low %v3419, %v3511
        %v3563 = vcombine.high %v3419, %v3511
        %v3565 = vunpack.c.l.s4 1983009808
        %v3566 = vunpack.c.0.s8 %v3565
        %v3567 = vlaneseq
        %v3568 = vshrl.u32 %v3567, 7
        %v3569 = vsub.s32 %v3566, %v3568
        %v3570 = vrot.slane %v3562, %v3569
        %v3572 = vunpack.c.l.s4 1983009808
        %v3573 = vunpack.c.0.s8 %v3572
        %v3574 = vlaneseq
        %v3575 = vshrl.u32 %v3574, 7
        %v3576 = vsub.s32 %v3573, %v3575
        %v3577 = vrot.slane %v3563, %v3576
        %v3578 = vcombine.low %v3465, %v3557
        %v3579 = vcombine.high %v3465, %v3557
        %v3581 = vunpack.c.l.s4 1983009808
        %v3582 = vunpack.c.0.s8 %v3581
        %v3583 = vlaneseq
        %v3584 = vshrl.u32 %v3583, 7
        %v3585 = vsub.s32 %v3582, %v3584
        %v3586 = vrot.slane %v3578, %v3585
        %v3588 = vunpack.c.l.s4 1983009808
        %v3589 = vunpack.c.0.s8 %v3588
        %v3590 = vlaneseq
        %v3591 = vshrl.u32 %v3590, 7
        %v3592 = vsub.s32 %v3589, %v3591
        %v3593 = vrot.slane %v3579, %v3592
        %v3594 = vcombine.low %v3570, %v3586
        %v3595 = vcombine.high %v3570, %v3586
        %v3597 = vunpack.c.l.s4 1934713408
        %v3598 = vunpack.c.0.s8 %v3597
        %v3599 = vlaneseq
        %v3600 = vshrl.u32 %v3599, 7
        %v3601 = vsub.s32 %v3598, %v3600
        %v3602 = vrot.slane %v3594, %v3601
        %v3604 = vunpack.c.l.s4 1934713408
        %v3605 = vunpack.c.0.s8 %v3604
        %v3606 = vlaneseq
        %v3607 = vshrl.u32 %v3606, 7
        %v3608 = vsub.s32 %v3605, %v3607
        %v3609 = vrot.slane %v3595, %v3608
        %v3610 = vcombine.low %v3577, %v3593
        %v3611 = vcombine.high %v3577, %v3593
        %v3613 = vunpack.c.l.s4 1934713408
        %v3614 = vunpack.c.0.s8 %v3613
        %v3615 = vlaneseq
        %v3616 = vshrl.u32 %v3615, 7
        %v3617 = vsub.s32 %v3614, %v3616
        %v3618 = vrot.slane %v3610, %v3617
        %v3620 = vunpack.c.l.s4 1934713408
        %v3621 = vunpack.c.0.s8 %v3620
        %v3622 = vlaneseq
        %v3623 = vshrl.u32 %v3622, 7
        %v3624 = vsub.s32 %v3621, %v3623
        %v3625 = vrot.slane %v3611, %v3624
        %v3626 = vcombine.high %v3602, 0.0
        %v3627 = vcombine.high %v3609, 0.0
        %v3628 = vcombine.high %v3618, 0.0
        %v3629 = vcombine.high %v3625, 0.0
        %v3630 = vcombine.low %v3602, %v3609
        %v3632 = vunpack.c.l.s4 1983009808
        %v3633 = vunpack.c.0.s8 %v3632
        %v3634 = vlaneseq
        %v3635 = vshrl.u32 %v3634, 7
        %v3636 = vsub.s32 %v3633, %v3635
        %v3637 = vrot.slane %v3630, %v3636
        %v3638 = vcombine.low %v3626, %v3627
        %v3640 = vunpack.c.l.s4 1983009808
        %v3641 = vunpack.c.0.s8 %v3640
        %v3642 = vlaneseq
        %v3643 = vshrl.u32 %v3642, 7
        %v3644 = vsub.s32 %v3641, %v3643
        %v3645 = vrot.slane %v3638, %v3644
        %v3646 = vcombine.low %v3618, %v3625
        %v3648 = vunpack.c.l.s4 1983009808
        %v3649 = vunpack.c.0.s8 %v3648
        %v3650 = vlaneseq
        %v3651 = vshrl.u32 %v3650, 7
        %v3652 = vsub.s32 %v3649, %v3651
        %v3653 = vrot.slane %v3646, %v3652
        %v3654 = vcombine.low %v3628, %v3629
        %v3656 = vunpack.c.l.s4 1983009808
        %v3657 = vunpack.c.0.s8 %v3656
        %v3658 = vlaneseq
        %v3659 = vshrl.u32 %v3658, 7
        %v3660 = vsub.s32 %v3657, %v3659
        %v3661 = vrot.slane %v3654, %v3660
        %v3662 = vcombine.low %v3637, %v3645
        %v3663 = vcombine.high %v3637, %v3645
        %v3665 = vunpack.c.l.s4 1934713408
        %v3666 = vunpack.c.0.s8 %v3665
        %v3667 = vlaneseq
        %v3668 = vshrl.u32 %v3667, 7
        %v3669 = vsub.s32 %v3666, %v3668
        %v3670 = vrot.slane %v3662, %v3669
        %v3672 = vunpack.c.l.s4 1934713408
        %v3673 = vunpack.c.0.s8 %v3672
        %v3674 = vlaneseq
        %v3675 = vshrl.u32 %v3674, 7
        %v3676 = vsub.s32 %v3673, %v3675
        %v3677 = vrot.slane %v3663, %v3676
        %v3678 = vcombine.low %v3653, %v3661
        %v3679 = vcombine.high %v3653, %v3661
        %v3681 = vunpack.c.l.s4 1934713408
        %v3682 = vunpack.c.0.s8 %v3681
        %v3683 = vlaneseq
        %v3684 = vshrl.u32 %v3683, 7
        %v3685 = vsub.s32 %v3682, %v3684
        %v3686 = vrot.slane %v3678, %v3685
        %v3688 = vunpack.c.l.s4 1934713408
        %v3689 = vunpack.c.0.s8 %v3688
        %v3690 = vlaneseq
        %v3691 = vshrl.u32 %v3690, 7
        %v3692 = vsub.s32 %v3689, %v3691
        %v3693 = vrot.slane %v3679, %v3692
        %v3694 = vcombine.low %v3670, %v3686
        %v3695 = vcombine.high %v3670, %v3686
        %v3696 = vcombine.low %v3677, %v3693
        %v3697 = vcombine.high %v3677, %v3693
        %3699 = vrot.lane.b32.xlu0 %v3695, 8
        %v3700 = vpop.permute.xlu0 %3699
        %3703 = vrot.lane.b32.xlu0 %v3696, 16
        %v3704 = vpop.permute.xlu0 %3703
        %3707 = vrot.lane.b32.xlu0 %v3697, 24
        %v3708 = vpop.permute.xlu0 %3707
        %v3710 = vsel %vm1676, %v3694, %v3700
        %v3711 = vsel %vm2253, %v3710, %v3704
        %v3712 = vsel %vm2255, %v3711, %v3708
        %3713 = vst.msk [vmem:[#allocation4] sm:$0xff] %vm1064, %v3712
        %v3714 = vld [vmem:[#allocation4] sm:$0xff]
        %v3715 = vpack.c.bf16 %v3714, %v3714
        %v3717 = vsel %vm1064, %v3715, 0
        %3719 = vmatprep.subr.bf16.mxu0 0
        %3720 = vmatpush1.bf16.msra.mxu0 %v2274
        %3721 = vmatprep.subr.bf16.mxu0 0
        %3722 = vmatpush1.bf16.msra.mxu0 %v2275
        %3723 = vmatprep.subr.bf16.mxu0 0
        %3724 = vmatpush1.bf16.msra.mxu0 0
        %3725 = vmatprep.subr.bf16.mxu0 0
        %3726 = vmatpush1.bf16.msra.mxu0 0
        %3727 = vmatprep.subr.bf16.mxu0 0
        %3728 = vmatpush1.bf16.msra.mxu0 0
        %3729 = vmatprep.subr.bf16.mxu0 0
        %3730 = vmatpush1.bf16.msra.mxu0 0
        %3731 = vmatprep.subr.bf16.mxu0 0
        %3732 = vmatpush1.bf16.msra.mxu0 0
        %3733 = vmatprep.subr.bf16.mxu0 0
        %3734 = vmatpush1.bf16.msra.mxu0 0
        %3735 = vmatprep.subr.bf16.mxu0 0
        %3736 = vmatpush1.bf16.msra.mxu0 0
        %3737 = vmatprep.subr.bf16.mxu0 0
        %3738 = vmatpush1.bf16.msra.mxu0 0
        %3739 = vmatprep.subr.bf16.mxu0 0
        %3740 = vmatpush1.bf16.msra.mxu0 0
        %3741 = vmatprep.subr.bf16.mxu0 0
        %3742 = vmatpush1.bf16.msra.mxu0 0
        %3743 = vmatprep.subr.bf16.mxu0 0
        %3744 = vmatpush1.bf16.msra.mxu0 0
        %3745 = vmatprep.subr.bf16.mxu0 0
        %3746 = vmatpush1.bf16.msra.mxu0 0
        %3747 = vmatprep.subr.bf16.mxu0 0
        %3748 = vmatpush1.bf16.msra.mxu0 0
        %3749 = vmatprep.subr.bf16.mxu0 0
        %3750 = vmatpush1.bf16.msra.mxu0 0
        %3751 = vmatprep.mubr.bf16.mxu0 0
        %3752 = vmatmul.mubr.bf16.gmra.mrb[0].mxu0 %v3717
        %v3753 = vpop.f32.mrb[0].mxu0
        %v3754 = vadd.f32 %v2264, %v3753
        %v3755 = vpop.f32.mrb[0].mxu0
        %v3756 = vpop.f32.mrb[0].mxu0
        %v3757 = vpop.f32.mrb[0].mxu0
        %3758 = vdwg.mxu0
        %v3759 = vadd.f32 %v2557, %v3754
        %v3760 = vsel %vm1064, %v3759, 0.0
        %3761 = vadd.xlane.f32.xlu0 %v3760
        %v3762 = vpop.xlane.xlu0 %3761
        %v3763 = vmul.f32 %v3762, %v2325
        %v3764 = vsub.f32 %v3759, %v3763
        %v3765 = vmul.f32 %v3764, %v3764
        %v3766 = vsel %vm1064, %v3765, 0.0
        %3767 = vadd.xlane.f32.xlu0 %v3766
        %v3768 = vpop.xlane.xlu0 %3767
        %v3769 = vmul.f32 %v3768, %v2325
        %v3770 = vadd.f32 %v3769, 1e-05
        %v3771 = vrsqrt.pop %v3770
        %v3772 = vmul.f32 %v3764, %v3771
        %v3773 = vmul.f32 %v3772, %v2340
        %v3774 = vadd.f32 %v3773, %v2347
        %v3775 = vpack.c.bf16 %v3774, %v3774
        %v3777 = vsel %vm1064, %v3775, 0
        %3779 = vmatprep.subr.bf16.mxu0 0
        %3780 = vmatpush1.bf16.msra.mxu0 %v2365
        %3781 = vmatprep.subr.bf16.mxu0 0
        %3782 = vmatpush1.bf16.msra.mxu0 %v2366
        %3783 = vmatprep.subr.bf16.mxu0 0
        %3784 = vmatpush1.bf16.msra.mxu0 0
        %3785 = vmatprep.subr.bf16.mxu0 0
        %3786 = vmatpush1.bf16.msra.mxu0 0
        %3787 = vmatprep.subr.bf16.mxu0 0
        %3788 = vmatpush1.bf16.msra.mxu0 0
        %3789 = vmatprep.subr.bf16.mxu0 0
        %3790 = vmatpush1.bf16.msra.mxu0 0
        %3791 = vmatprep.subr.bf16.mxu0 0
        %3792 = vmatpush1.bf16.msra.mxu0 0
        %3793 = vmatprep.subr.bf16.mxu0 0
        %3794 = vmatpush1.bf16.msra.mxu0 0
        %3795 = vmatprep.subr.bf16.mxu0 0
        %3796 = vmatpush1.bf16.msra.mxu0 0
        %3797 = vmatprep.subr.bf16.mxu0 0
        %3798 = vmatpush1.bf16.msra.mxu0 0
        %3799 = vmatprep.subr.bf16.mxu0 0
        %3800 = vmatpush1.bf16.msra.mxu0 0
        %3801 = vmatprep.subr.bf16.mxu0 0
        %3802 = vmatpush1.bf16.msra.mxu0 0
        %3803 = vmatprep.subr.bf16.mxu0 0
        %3804 = vmatpush1.bf16.msra.mxu0 0
        %3805 = vmatprep.subr.bf16.mxu0 0
        %3806 = vmatpush1.bf16.msra.mxu0 0
        %3807 = vmatprep.subr.bf16.mxu0 0
        %3808 = vmatpush1.bf16.msra.mxu0 0
        %3809 = vmatprep.subr.bf16.mxu0 0
        %3810 = vmatpush1.bf16.msra.mxu0 0
        %3811 = vmatprep.mubr.bf16.mxu0 0
        %3812 = vmatmul.mubr.bf16.gmra.mrb[0].mxu0 %v3777
        %v3813 = vpop.f32.mrb[0].mxu0
        %v3814 = vadd.f32 %v2355, %v3813
        %v3815 = vpop.f32.mrb[0].mxu0
        %v3816 = vpop.f32.mrb[0].mxu0
        %v3817 = vpop.f32.mrb[0].mxu0
        %3818 = vdwg.mxu0
        %v3819 = vmax.f32 %v3814, 0.0
        %v3820 = vpack.c.bf16 %v3819, %v3819
        %v3822 = vsel %vm2444, %v3820, 0
        %3824 = vmatprep.subr.bf16.mxu0 0
        %3825 = vmatpush1.bf16.msra.mxu0 %v2436
        %3826 = vmatprep.subr.bf16.mxu0 0
        %3827 = vmatpush1.bf16.msra.mxu0 %v2437
        %3828 = vmatprep.subr.bf16.mxu0 0
        %3829 = vmatpush1.bf16.msra.mxu0 %v2438
        %3830 = vmatprep.subr.bf16.mxu0 0
        %3831 = vmatpush1.bf16.msra.mxu0 %v2439
        %3832 = vmatprep.subr.bf16.mxu0 0
        %3833 = vmatpush1.bf16.msra.mxu0 0
        %3834 = vmatprep.subr.bf16.mxu0 0
        %3835 = vmatpush1.bf16.msra.mxu0 0
        %3836 = vmatprep.subr.bf16.mxu0 0
        %3837 = vmatpush1.bf16.msra.mxu0 0
        %3838 = vmatprep.subr.bf16.mxu0 0
        %3839 = vmatpush1.bf16.msra.mxu0 0
        %3840 = vmatprep.subr.bf16.mxu0 0
        %3841 = vmatpush1.bf16.msra.mxu0 0
        %3842 = vmatprep.subr.bf16.mxu0 0
        %3843 = vmatpush1.bf16.msra.mxu0 0
        %3844 = vmatprep.subr.bf16.mxu0 0
        %3845 = vmatpush1.bf16.msra.mxu0 0
        %3846 = vmatprep.subr.bf16.mxu0 0
        %3847 = vmatpush1.bf16.msra.mxu0 0
        %3848 = vmatprep.subr.bf16.mxu0 0
        %3849 = vmatpush1.bf16.msra.mxu0 0
        %3850 = vmatprep.subr.bf16.mxu0 0
        %3851 = vmatpush1.bf16.msra.mxu0 0
        %3852 = vmatprep.subr.bf16.mxu0 0
        %3853 = vmatpush1.bf16.msra.mxu0 0
        %3854 = vmatprep.subr.bf16.mxu0 0
        %3855 = vmatpush1.bf16.msra.mxu0 0
        %3856 = vmatprep.mubr.bf16.mxu0 0
        %3857 = vmatmul.mubr.bf16.gmra.mrb[0].mxu0 %v3822
        %v3858 = vpop.f32.mrb[0].mxu0
        %v3859 = vadd.f32 %v2418, %v3858
        %v3860 = vpop.f32.mrb[0].mxu0
        %v3861 = vpop.f32.mrb[0].mxu0
        %v3862 = vpop.f32.mrb[0].mxu0
        %3863 = vdwg.mxu0
        %v3864 = vadd.f32 %v3774, %v3859
        %v3865 = vsel %vm1064, %v3864, 0.0
        %3866 = vadd.xlane.f32.xlu0 %v3865
        %v3867 = vpop.xlane.xlu0 %3866
        %v3868 = vmul.f32 %v3867, %v2325
        %v3869 = vsub.f32 %v3864, %v3868
        %v3870 = vmul.f32 %v3869, %v3869
        %v3871 = vsel %vm1064, %v3870, 0.0
        %3872 = vadd.xlane.f32.xlu0 %v3871
        %v3873 = vpop.xlane.xlu0 %3872
        %v3874 = vmul.f32 %v3873, %v2325
        %v3875 = vadd.f32 %v3874, 1e-05
        %v3876 = vrsqrt.pop %v3875
        %v3877 = vmul.f32 %v3869, %v3876
        %v3878 = vmul.f32 %v3877, %v2506
        %v3879 = vadd.f32 %v3878, %v2513
        // Predicated region
        $region141: #{tpu_custom_call.1} parent=99 // pred_check
          %p3880 = pneg %p2516
        $region142: #{tpu_custom_call.1} parent=99 // pred_check_branch
          %3882 = sbr.rel (%p3880) target = $region144
        $region143: #{tpu_custom_call.1} parent=99 // pred_region
          %3883 = vst.msk [vmem:[%s2556] sm:$0xff] %vm1064, %v3879
        $region144: #{tpu_custom_call.1} parent=99 // pred_fallthru
          _
        // Predicated region
        $region145: #{tpu_custom_call.1} parent=99 // pred_check
          %p3884 = pneg %p1042
        $region146: #{tpu_custom_call.1} parent=99 // pred_check_branch
          %3886 = sbr.rel (%p3884) target = $region148
        $region147: #{tpu_custom_call.1} parent=99 // pred_region
          %v3887 = vld [vmem:[#allocation10] sm:$0x1]
          %v3888 = vld [vmem:[#allocation11] sm:$0x1]
          %v3889 = vsel %vm1064, %v3879, 0.0
          %3890 = vadd.xlane.f32.xlu0 %v3889
          %v3891 = vpop.xlane.xlu0 %3890
          %v3892 = vmul.f32 %v3891, %v2325
          %v3893 = vsub.f32 %v3879, %v3892
          %v3894 = vmul.f32 %v3893, %v3893
          %v3895 = vsel %vm1064, %v3894, 0.0
          %3896 = vadd.xlane.f32.xlu0 %v3895
          %v3897 = vpop.xlane.xlu0 %3896
          %v3898 = vmul.f32 %v3897, %v2325
          %v3899 = vadd.f32 %v3898, 1e-05
          %v3900 = vrsqrt.pop %v3899
          %v3901 = vmul.f32 %v3893, %v3900
          %v3903 = vlaneseq
          %v3904 = vshrl.u32 %v3903, 7
          %v3905 = vsub.s32 0, %v3904
          %v3906 = vrot.slane %v3887, %v3905
          %v3908 = vmul.f32 %v3901, %v3906
          %v3910 = vlaneseq
          %v3911 = vshrl.u32 %v3910, 7
          %v3912 = vsub.s32 0, %v3911
          %v3913 = vrot.slane %v3888, %v3912
          %v3915 = vadd.f32 %v3908, %v3913
          %v3916 = vpack.c.bf16 %v3915, %v3915
          %s3917 = scalar_lea.vmem [#allocation15], 4
          %vm3918 = vcmask 257024
          %3919 = vst.msk [vmem:[%s3917] sm:$0xf] %vm3918, %v3916
        $region148: #{tpu_custom_call.1} parent=99 // pred_fallthru
          _
        // Predicated region
        $region149: #{tpu_custom_call.1} parent=99 // pred_check
          %p3920 = pneg %p575
        $region150: #{tpu_custom_call.1} parent=99 // pred_check_branch
          %3922 = sbr.rel (%p3920) target = $region152
        $region151: #{tpu_custom_call.1} parent=99 // pred_region
          %s3923 = smul.u32 2, %s39
          %s3925 = ssub.s32 128, 128
          %3926 = vsyncadd [#allocation7], %s3925
          %s3927 = smul.addr %s3923, 64
          %s3928 = scalar_lea.hbm %s20, %s3927
          %s3929 = sshll.u32 [#allocation15], 4
          %s3930 = int_to_ptr.vmem [resolvable:$true] %s3929
          %3935 = dma.vmem_to_hbm [thread:$0]  %s3930, 128, %s3928, [#allocation7], 64, 64, 4
        $region152: #{tpu_custom_call.1} parent=99 // pred_fallthru
          _
        // Predicated region
        $region153: #{tpu_custom_call.1} parent=99 // pred_check
          %p3936 = pneg %p575
        $region154: #{tpu_custom_call.1} parent=99 // pred_check_branch
          %3938 = sbr.rel (%p3936) target = $region156
        $region155: #{tpu_custom_call.1} parent=99 // pred_region
          %3939 = dma.done [#allocation7], 128
        $region156: #{tpu_custom_call.1} parent=99 // pred_fallthru
          _
      $region100: #{tpu_custom_call.1} parent=5 // pred_fallthru
        _
      %p3940 = scmp.le.s32.totalorder 2, %s30
      // Predicated region
      $region157: #{tpu_custom_call.1} parent=5 // pred_check
        %p3941 = pneg %p3940
      $region158: #{tpu_custom_call.1} parent=5 // pred_check_branch
        %3943 = sbr.rel (%p3941) target = $region160
      $region159: #{tpu_custom_call.1} parent=5 // pred_region
        %s3944 = ssub.s32 %s30, 2
      $region160: #{tpu_custom_call.1} parent=5 // pred_fallthru
        _
    $region6: #{tpu_custom_call.1} parent=1 // loop_footer
      %s34 = sadd.s32 1, %s30
    $region7: #{tpu_custom_call.1} parent=1 // loop_footer_branch
      %29 = sbr.rel target = $region3
    $region8: #{tpu_custom_call.1} parent=1 // loop_exit
      _
    %3945 = vsyncpa [#allocation6], 1
    %s3946 = scalar_lea.sflag [#allocation6], 1
    %3947 = vsyncpa %s3946, 1
    %3948 = vsyncpa [#allocation9], 1
    %3949 = vsyncpa [#allocation12], 1
    %3950 = vsyncpa [#allocation7], 1
    %s3951 = scalar_lea.sflag [#allocation7], 1
    %3952 = vsyncpa %s3951, 1

</llo_original>
